<compile_context>
chip_gen: v6e
topology: v6e:2x2x1
jax: 0.10.0
libtpu: 0.0.40
codegen_flags: <defaults>
</compile_context>

<pallas_src>
import jax
import jax.numpy as jnp
import numpy as np
from jax.experimental import pallas as pl
from jax.experimental.pallas import tpu as pltpu

BN_EPS = 1e-5


def _pick_row_tile(H, W, C, budget_bytes=4 * 1024 * 1024):
    """Largest divisor of H whose bf16 im2col scratch (25C, rt*W) fits budget."""
    for rt in range(H, 0, -1):
        if H % rt == 0 and 25 * C * rt * W * 2 <= budget_bytes:
            return rt
    return 1


def _pick_hw_tile(HW, target=2048):
    """Lane-dense (multiple-of-128) divisor of HW for the BN/ReLU pass."""
    if HW <= target:
        return HW
    t = (target // 128) * 128
    while t >= 128:
        if HW % t == 0:
            return t
        t -= 128
    return HW


def _pick_vmem_limit():
    """<= ~48 MiB on v7x (64 MiB physical), up to 96 MiB on v5e/v6e (128 MiB)."""
    cap = 64 * 1024 * 1024
    try:
        info = pltpu.get_tpu_info()
        cap = int(getattr(info, "vmem_capacity_bytes", cap))
    except Exception:
        pass
    return int(min(cap * 3 // 4, 96 * 1024 * 1024))


def _conv_kernel(x_ref, w_ref, b_ref, y_ref, stats_ref, pad_ref, p_ref):
    # x_ref    : (1, C, H, W) f32   NCHW input, one batch element
    # w_ref    : (2C, 25*C)  bf16   combined conv3(zero-padded)+conv5 weight
    # b_ref    : (2C, 1)     f32    combined bias
    # y_ref    : (1, 2C, H*W) bf16  conv output, channels-major (lane-dense)
    # stats_ref: (1, 2C, 2)  f32    per-batch [sum, sum_sq] over H*W per channel
    # pad_ref  : (C, H+4, W+4) f32  VMEM scratch, zero-padded input
    # p_ref    : (25*C, RT*W) bf16  VMEM scratch, transposed im2col row-chunk
    C, H, W = x_ref.shape[1], x_ref.shape[2], x_ref.shape[3]
    C2 = w_ref.shape[0]
    Hp, Wp = pad_ref.shape[1], pad_ref.shape[2]
    RTW = p_ref.shape[1]
    RT = RTW // W
    n_chunks = H // RT

    # Zero ONLY the 2-wide border strips (interior is fully overwritten below).
    # Re-done every grid step: scratch persists across (possibly megacore-
    # parallel) grid iterations, so a program_id==0 init is not safe.
    pad_ref[:, 0:2, :] = jnp.zeros((C, 2, Wp), jnp.float32)
    pad_ref[:, Hp - 2:Hp, :] = jnp.zeros((C, 2, Wp), jnp.float32)
    pad_ref[:, :, 0:2] = jnp.zeros((C, Hp, 2), jnp.float32)
    pad_ref[:, :, Wp - 2:Wp] = jnp.zeros((C, Hp, 2), jnp.float32)
    pad_ref[:, 2:2 + H, 2:2 + W] = x_ref[0]

    w = w_ref[...]                                        # (2C, 25C) bf16
    b = b_ref[...]                                        # (2C, 1)

    s_acc = jnp.zeros((C2, 1), jnp.float32)
    ss_acc = jnp.zeros((C2, 1), jnp.float32)

    for ci in range(n_chunks):                            # static row-chunk loop
        h0 = ci * RT
        # --- transposed im2col: rows ordered (kh, kw, c_in), columns are the
        # output pixels of this row-chunk. Every strip store is lane-dense
        # (RT*W lanes) and casts f32 -> bf16 at the store.
        idx = 0
        for kh in range(5):
            for kw in range(5):
                strip = pad_ref[:, h0 + kh:h0 + kh + RT, kw:kw + W]  # (C,RT,W)
                p_ref[idx * C:(idx + 1) * C, :] = (
                    strip.reshape(C, RTW).astype(jnp.bfloat16))
                idx += 1

        # --- single MXU matmul for BOTH convs (K = 25*C), result already
        # channels-major: (2C, RT*W). No transpose needed.
        acc = jnp.dot(w, p_ref[...],
                      preferred_element_type=jnp.float32) + b

        y_ref[0, :, h0 * W:h0 * W + RTW] = acc.astype(y_ref.dtype)

        # Per-batch BN statistics over the pixel axis, kept in f32 for
        # accuracy of E[x^2]-E[x]^2.  (Could be moved to MXU matvecs if the
        # XLU ever becomes the binding slot.)
        s_acc = s_acc + jnp.sum(acc, axis=1, keepdims=True)
        ss_acc = ss_acc + jnp.sum(acc * acc, axis=1, keepdims=True)

    stats_ref[0, :, 0:1] = s_acc
    stats_ref[0, :, 1:2] = ss_acc


def _bn_relu_kernel(y_ref, scale_ref, shift_ref, o_ref):
    # y_ref: (1, 2C, hw_tile) bf16; scale/shift: (2C, 1) f32; o_ref f32.
    y = y_ref[0].astype(jnp.float32)
    o_ref[0] = jnp.maximum(y * scale_ref[...] + shift_ref[...], 0.0)


def multiconv_forward(x_nchw, params):
    """x_nchw: (N, C, H, W) float32 (PyTorch layout). Returns (N, 2C, H, W)."""
    N, C, H, W = x_nchw.shape
    C2 = 2 * C
    HW = H * W
    Hp, Wp = H + 4, W + 4
    RT = _pick_row_tile(H, W, C)
    hw_tile = _pick_hw_tile(HW)
    vmem_limit = _pick_vmem_limit()

    # Fold conv3 (zero-padded to 5x5) and conv5 into one combined weight laid
    # out as (2C, 25*C) so the in-kernel matmul result is already (2C, HW).
    w3p = jnp.pad(params["w3"], ((1, 1), (1, 1), (0, 0), (0, 0)))   # (5,5,C,C)
    w_comb = jnp.concatenate([w3p, params["w5"]], axis=-1)           # (5,5,C,2C)
    w_comb = w_comb.reshape(25 * C, C2).T.astype(jnp.bfloat16)       # (2C, 25C)
    b_comb = jnp.concatenate([params["b3"], params["b5"]],
                             axis=-1).reshape(C2, 1)                 # (2C, 1)

    # Kernel 1: both convs as one im2col matmul + BN stats, grid over batch.
    y, stats = pl.pallas_call(
        _conv_kernel,
        out_shape=(jax.ShapeDtypeStruct((N, C2, HW), jnp.bfloat16),
                   jax.ShapeDtypeStruct((N, C2, 2), jnp.float32)),
        grid_spec=pltpu.PrefetchScalarGridSpec(
            num_scalar_prefetch=0,
            grid=(N,),
            in_specs=[
                pl.BlockSpec((1, C, H, W), lambda n: (n, 0, 0, 0)),
                pl.BlockSpec((C2, 25 * C), lambda n: (0, 0)),
                pl.BlockSpec((C2, 1), lambda n: (0, 0)),
            ],
            out_specs=[
                pl.BlockSpec((1, C2, HW), lambda n: (n, 0, 0)),
                pl.BlockSpec((1, C2, 2), lambda n: (n, 0, 0)),
            ],
            scratch_shapes=[
                pltpu.VMEM((C, Hp, Wp), jnp.float32),        # padded input
                pltpu.VMEM((25 * C, RT * W), jnp.bfloat16),  # im2col row-chunk
            ]),
        compiler_params=pltpu.CompilerParams(
            dimension_semantics=("parallel",),
            vmem_limit_bytes=vmem_limit),
    )(x_nchw, w_comb, b_comb)

    # Fold BN batch statistics into per-channel scale/shift so the second
    # kernel is normalize+relu only.
    cnt = N * H * W
    mean = jnp.sum(stats[:, :, 0], axis=0) / cnt                  # (2C,)
    ex2 = jnp.sum(stats[:, :, 1], axis=0) / cnt
    var = jnp.maximum(ex2 - mean * mean, 0.0)                     # biased var
    inv = jax.lax.rsqrt(var + BN_EPS)
    g, b = params["gamma"][0], params["beta"][0]
    scale = (g * inv)[:, None]                                    # (2C, 1)
    shift = (b - mean * g * inv)[:, None]                         # (2C, 1)
    # TODO(synk): PyTorch BatchNorm2d also updates running_mean/var as module
    # state in training mode; that side effect is not modeled here.

    # Kernel 2: tiled, megacore-parallel normalize + ReLU (bf16 in, f32 out).
    out = pl.pallas_call(
        _bn_relu_kernel,
        out_shape=jax.ShapeDtypeStruct((N, C2, HW), jnp.float32),
        grid_spec=pltpu.PrefetchScalarGridSpec(
            num_scalar_prefetch=0,
            grid=(N, HW // hw_tile),
            in_specs=[
                pl.BlockSpec((1, C2, hw_tile), lambda n, t: (n, 0, t)),
                pl.BlockSpec((C2, 1), lambda n, t: (0, 0)),
                pl.BlockSpec((C2, 1), lambda n, t: (0, 0)),
            ],
            out_specs=pl.BlockSpec((1, C2, hw_tile), lambda n, t: (n, 0, t)),
        ),
        compiler_params=pltpu.CompilerParams(
            dimension_semantics=("parallel", "parallel"),
            vmem_limit_bytes=vmem_limit),
    )(y, scale, shift)

    # Already channels-major: just unflatten the spatial axis -> NCHW.
    return out.reshape(N, C2, H, W)


def _reference_forward(x_nchw, params):
    """Pure-JAX f32 reference (lax.conv + batch-stat BN + relu)."""
    x = jnp.transpose(x_nchw, (0, 2, 3, 1))
    dn = jax.lax.conv_dimension_numbers(x.shape, params["w3"].shape,
                                        ("NHWC", "HWIO", "NHWC"))
    x3 = jax.lax.conv_general_dilated(
        x, params["w3"], (1, 1), [(1, 1), (1, 1)], dimension_numbers=dn,
        precision=jax.lax.Precision.HIGHEST) + params["b3"][0]
    x5 = jax.lax.conv_general_dilated(
        x, params["w5"], (1, 1), [(2, 2), (2, 2)], dimension_numbers=dn,
        precision=jax.lax.Precision.HIGHEST) + params["b5"][0]
    y = jnp.concatenate([x3, x5], axis=-1)
    mean = jnp.mean(y, axis=(0, 1, 2), keepdims=True)
    var = jnp.mean((y - mean) ** 2, axis=(0, 1, 2), keepdims=True)
    out = (y - mean) * jax.lax.rsqrt(var + BN_EPS) * params["gamma"][0] \
        + params["beta"][0]
    out = jnp.maximum(out, 0.0)
    return jnp.transpose(out, (0, 3, 1, 2))


def init_params(key, channels):
    k3, k5, kb3, kb5, kg, kb = jax.random.split(key, 6)
    fan3 = channels * 3 * 3
    fan5 = channels * 5 * 5
    return {
        # HWIO conv weights
        "w3": jax.random.normal(k3, (3, 3, channels, channels), jnp.float32)
              / np.sqrt(fan3),
        "b3": jax.random.normal(kb3, (1, channels), jnp.float32) * 0.1,
        "w5": jax.random.normal(k5, (5, 5, channels, channels), jnp.float32)
              / np.sqrt(fan5),
        "b5": jax.random.normal(kb5, (1, channels), jnp.float32) * 0.1,
        "gamma": 1.0 + 0.1 * jax.random.normal(kg, (1, 2 * channels), jnp.float32),
        "beta": 0.1 * jax.random.normal(kb, (1, 2 * channels), jnp.float32),
    }


if __name__ == "__main__":
    key = jax.random.PRNGKey(0)
    k_x, k_p = jax.random.split(key)

    N, C, H, W = 2, 4, 16, 16
    x = jax.random.normal(k_x, (N, C, H, W), jnp.float32)
    params = init_params(k_p, C)

    fwd = jax.jit(multiconv_forward)
    out = fwd(x, params)
    out = jax.block_until_ready(out)

    ref = _reference_forward(x, params)
    # Kernel uses bf16 MXU inputs and a bf16 intermediate activation (per perf
    # review) vs an f32 reference: expected deviation is O(1e-3); 2e-2 leaves
    # comfortable margin.
    np.testing.assert_allclose(np.asarray(out), np.asarray(ref),
                               rtol=2e-2, atol=2e-2)
    assert out.shape == (N, 2 * C, H, W)
    print("KERNEL_OK")
</pallas_src>

<mosaic_0001>
module attributes {stable_mosaic.version = 11 : i64} {
  func.func @_bn_relu_kernel(%arg0: i32, %arg1: i32, %arg2: memref<1x8x256xbf16, #tpu.memory_space<vmem>>, %arg3: memref<8x1xf32, #tpu.memory_space<vmem>>, %arg4: memref<8x1xf32, #tpu.memory_space<vmem>>, %arg5: memref<1x8x256xf32, #tpu.memory_space<vmem>>) attributes {dimension_semantics = [#tpu.dimension_semantics<parallel>, #tpu.dimension_semantics<parallel>], iteration_bounds = array<i64: 2, 1>, scalar_prefetch = 0 : i64, scratch_operands = 0 : i64, tpu.core_type = #tpu.core_type<tc>, window_params = [{transform_indices = @transform_0, window_bounds = array<i64: 1, 8, 256>}, {pipeline_mode = #tpu.pipeline_mode<synchronous>, transform_indices = @transform_1, window_bounds = array<i64: 8, 1>}, {pipeline_mode = #tpu.pipeline_mode<synchronous>, transform_indices = @transform_2, window_bounds = array<i64: 8, 1>}, {transform_indices = @transform_3, window_bounds = array<i64: 1, 8, 256>}]} {
    %c0 = arith.constant 0 : index
    %c0_0 = arith.constant 0 : index
    %c0_1 = arith.constant 0 : index
    %0 = vector.load %arg2[%c0, %c0_0, %c0_1] : memref<1x8x256xbf16, #tpu.memory_space<vmem>>, vector<1x8x256xbf16>
    %1 = vector.shape_cast %0 : vector<1x8x256xbf16> to vector<8x256xbf16>
    %2 = arith.extf %1 : vector<8x256xbf16> to vector<8x256xf32>
    %c0_2 = arith.constant 0 : index
    %c0_3 = arith.constant 0 : index
    %3 = vector.load %arg3[%c0_2, %c0_3] : memref<8x1xf32, #tpu.memory_space<vmem>>, vector<8x1xf32>
    %4 = vector.broadcast %3 : vector<8x1xf32> to vector<8x256xf32>
    %5 = arith.mulf %2, %4 : vector<8x256xf32>
    %c0_4 = arith.constant 0 : index
    %c0_5 = arith.constant 0 : index
    %6 = vector.load %arg4[%c0_4, %c0_5] : memref<8x1xf32, #tpu.memory_space<vmem>>, vector<8x1xf32>
    %7 = vector.broadcast %6 : vector<8x1xf32> to vector<8x256xf32>
    %8 = arith.addf %5, %7 : vector<8x256xf32>
    %cst = arith.constant 0.000000e+00 : f32
    %9 = vector.broadcast %cst : f32 to vector<8x256xf32>
    %10 = arith.maximumf %8, %9 : vector<8x256xf32>
    %c0_6 = arith.constant 0 : index
    %c0_7 = arith.constant 0 : index
    %c0_8 = arith.constant 0 : index
    %11 = vector.load %arg5[%c0_6, %c0_7, %c0_8] : memref<1x8x256xf32, #tpu.memory_space<vmem>>, vector<1x8x256xf32>
    %12 = vector.shape_cast %11 : vector<1x8x256xf32> to vector<8x256xf32>
    %13 = vector.shape_cast %10 : vector<8x256xf32> to vector<1x8x256xf32>
    tpu.vector_store %arg5[%c0_6, %c0_7, %c0_8], %13 {strides = array<i32>} : memref<1x8x256xf32, #tpu.memory_space<vmem>>, vector<1x8x256xf32>,
    return
  }
  func.func @transform_0(%arg0: i32, %arg1: i32) -> (i32, i32, i32) {
    %c0_i32 = arith.constant 0 : i32
    %c0_i32_0 = arith.constant 0 : i32
    return %arg0, %c0_i32, %arg1 : i32, i32, i32
  }
  func.func @transform_1(%arg0: i32, %arg1: i32) -> (i32, i32) {
    %c0_i32 = arith.constant 0 : i32
    %c0_i32_0 = arith.constant 0 : i32
    %c0_i32_1 = arith.constant 0 : i32
    return %c0_i32, %c0_i32_0 : i32, i32
  }
  func.func @transform_2(%arg0: i32, %arg1: i32) -> (i32, i32) {
    %c0_i32 = arith.constant 0 : i32
    %c0_i32_0 = arith.constant 0 : i32
    %c0_i32_1 = arith.constant 0 : i32
    return %c0_i32, %c0_i32_0 : i32, i32
  }
  func.func @transform_3(%arg0: i32, %arg1: i32) -> (i32, i32, i32) {
    %c0_i32 = arith.constant 0 : i32
    %c0_i32_0 = arith.constant 0 : i32
    return %arg0, %c0_i32, %arg1 : i32, i32, i32
  }
}

module attributes {stable_mosaic.version = 11 : i64} {
  func.func @_conv_kernel(%arg0: i32, %arg1: memref<1x4x16x16xf32, #tpu.memory_space<vmem>>, %arg2: memref<8x100xbf16, #tpu.memory_space<vmem>>, %arg3: memref<8x1xf32, #tpu.memory_space<vmem>>, %arg4: memref<1x8x256xbf16, #tpu.memory_space<vmem>>, %arg5: memref<1x8x2xf32, #tpu.memory_space<vmem>>, %arg6: memref<4x20x20xf32, #tpu.memory_space<vmem>>, %arg7: memref<100x256xbf16, #tpu.memory_space<vmem>>) attributes {dimension_semantics = [#tpu.dimension_semantics<parallel>], iteration_bounds = array<i64: 2>, scalar_prefetch = 0 : i64, scratch_operands = 2 : i64, tpu.core_type = #tpu.core_type<tc>, window_params = [{transform_indices = @transform_0, window_bounds = array<i64: 1, 4, 16, 16>}, {pipeline_mode = #tpu.pipeline_mode<synchronous>, transform_indices = @transform_1, window_bounds = array<i64: 8, 100>}, {pipeline_mode = #tpu.pipeline_mode<synchronous>, transform_indices = @transform_2, window_bounds = array<i64: 8, 1>}, {transform_indices = @transform_3, window_bounds = array<i64: 1, 8, 256>}, {transform_indices = @transform_4, window_bounds = array<i64: 1, 8, 2>}]} {
    %cst = arith.constant 0.000000e+00 : f32
    %0 = vector.broadcast %cst : f32 to vector<4x2x20xf32>
    %c0 = arith.constant 0 : index
    %c0_0 = arith.constant 0 : index
    %c0_1 = arith.constant 0 : index
    %1 = vector.load %arg6[%c0, %c0_0, %c0_1] : memref<4x20x20xf32, #tpu.memory_space<vmem>>, vector<4x2x20xf32>
    tpu.vector_store %arg6[%c0, %c0_0, %c0_1], %0 {strides = array<i32>} : memref<4x20x20xf32, #tpu.memory_space<vmem>>, vector<4x2x20xf32>,
    %cst_2 = arith.constant 0.000000e+00 : f32
    %2 = vector.broadcast %cst_2 : f32 to vector<4x2x20xf32>
    %c0_3 = arith.constant 0 : index
    %c18 = arith.constant 18 : index
    %c0_4 = arith.constant 0 : index
    %3 = vector.load %arg6[%c0_3, %c18, %c0_4] : memref<4x20x20xf32, #tpu.memory_space<vmem>>, vector<4x2x20xf32>
    tpu.vector_store %arg6[%c0_3, %c18, %c0_4], %2 {strides = array<i32>} : memref<4x20x20xf32, #tpu.memory_space<vmem>>, vector<4x2x20xf32>,
    %cst_5 = arith.constant 0.000000e+00 : f32
    %4 = vector.broadcast %cst_5 : f32 to vector<4x20x2xf32>
    %c0_6 = arith.constant 0 : index
    %c0_7 = arith.constant 0 : index
    %c0_8 = arith.constant 0 : index
    %5 = vector.load %arg6[%c0_6, %c0_7, %c0_8] : memref<4x20x20xf32, #tpu.memory_space<vmem>>, vector<4x20x2xf32>
    tpu.vector_store %arg6[%c0_6, %c0_7, %c0_8], %4 {strides = array<i32>} : memref<4x20x20xf32, #tpu.memory_space<vmem>>, vector<4x20x2xf32>,
    %cst_9 = arith.constant 0.000000e+00 : f32
    %6 = vector.broadcast %cst_9 : f32 to vector<4x20x2xf32>
    %c0_10 = arith.constant 0 : index
    %c0_11 = arith.constant 0 : index
    %c18_12 = arith.constant 18 : index
    %7 = vector.load %arg6[%c0_10, %c0_11, %c18_12] : memref<4x20x20xf32, #tpu.memory_space<vmem>>, vector<4x20x2xf32>
    tpu.vector_store %arg6[%c0_10, %c0_11, %c18_12], %6 {strides = array<i32>} : memref<4x20x20xf32, #tpu.memory_space<vmem>>, vector<4x20x2xf32>,
    %c0_13 = arith.constant 0 : index
    %c0_14 = arith.constant 0 : index
    %c0_15 = arith.constant 0 : index
    %c0_16 = arith.constant 0 : index
    %8 = vector.load %arg1[%c0_13, %c0_14, %c0_15, %c0_16] : memref<1x4x16x16xf32, #tpu.memory_space<vmem>>, vector<1x4x16x16xf32>
    %9 = vector.shape_cast %8 : vector<1x4x16x16xf32> to vector<4x16x16xf32>
    %c0_17 = arith.constant 0 : index
    %c2 = arith.constant 2 : index
    %c2_18 = arith.constant 2 : index
    %10 = vector.load %arg6[%c0_17, %c2, %c2_18] : memref<4x20x20xf32, #tpu.memory_space<vmem>>, vector<4x16x16xf32>
    tpu.vector_store %arg6[%c0_17, %c2, %c2_18], %9 {strides = array<i32>} : memref<4x20x20xf32, #tpu.memory_space<vmem>>, vector<4x16x16xf32>,
    %c0_19 = arith.constant 0 : index
    %c0_20 = arith.constant 0 : index
    %11 = vector.load %arg2[%c0_19, %c0_20] : memref<8x100xbf16, #tpu.memory_space<vmem>>, vector<8x100xbf16>
    %c0_21 = arith.constant 0 : index
    %c0_22 = arith.constant 0 : index
    %12 = vector.load %arg3[%c0_21, %c0_22] : memref<8x1xf32, #tpu.memory_space<vmem>>, vector<8x1xf32>
    %cst_23 = arith.constant 0.000000e+00 : f32
    %13 = vector.broadcast %cst_23 : f32 to vector<8x1xf32>
    %cst_24 = arith.constant 0.000000e+00 : f32
    %14 = vector.broadcast %cst_24 : f32 to vector<8x1xf32>
    %c0_25 = arith.constant 0 : index
    %c0_26 = arith.constant 0 : index
    %c0_27 = arith.constant 0 : index
    %15 = vector.load %arg6[%c0_25, %c0_26, %c0_27] : memref<4x20x20xf32, #tpu.memory_space<vmem>>, vector<4x16x16xf32>
    %16 = vector.shape_cast %15 : vector<4x16x16xf32> to vector<4x256xf32>
    %17 = arith.truncf %16 : vector<4x256xf32> to vector<4x256xbf16>
    %c0_28 = arith.constant 0 : index
    %c0_29 = arith.constant 0 : index
    %18 = vector.load %arg7[%c0_28, %c0_29] : memref<100x256xbf16, #tpu.memory_space<vmem>>, vector<4x256xbf16>
    tpu.vector_store %arg7[%c0_28, %c0_29], %17 {strides = array<i32>} : memref<100x256xbf16, #tpu.memory_space<vmem>>, vector<4x256xbf16>,
    %c0_30 = arith.constant 0 : index
    %c0_31 = arith.constant 0 : index
    %c1 = arith.constant 1 : index
    %19 = vector.load %arg6[%c0_30, %c0_31, %c1] : memref<4x20x20xf32, #tpu.memory_space<vmem>>, vector<4x16x16xf32>
    %20 = vector.shape_cast %19 : vector<4x16x16xf32> to vector<4x256xf32>
    %21 = arith.truncf %20 : vector<4x256xf32> to vector<4x256xbf16>
    %c4 = arith.constant 4 : index
    %c0_32 = arith.constant 0 : index
    %22 = vector.load %arg7[%c4, %c0_32] : memref<100x256xbf16, #tpu.memory_space<vmem>>, vector<4x256xbf16>
    tpu.vector_store %arg7[%c4, %c0_32], %21 {strides = array<i32>} : memref<100x256xbf16, #tpu.memory_space<vmem>>, vector<4x256xbf16>,
    %c0_33 = arith.constant 0 : index
    %c0_34 = arith.constant 0 : index
    %c2_35 = arith.constant 2 : index
    %23 = vector.load %arg6[%c0_33, %c0_34, %c2_35] : memref<4x20x20xf32, #tpu.memory_space<vmem>>, vector<4x16x16xf32>
    %24 = vector.shape_cast %23 : vector<4x16x16xf32> to vector<4x256xf32>
    %25 = arith.truncf %24 : vector<4x256xf32> to vector<4x256xbf16>
    %c8 = arith.constant 8 : index
    %c0_36 = arith.constant 0 : index
    %26 = vector.load %arg7[%c8, %c0_36] : memref<100x256xbf16, #tpu.memory_space<vmem>>, vector<4x256xbf16>
    tpu.vector_store %arg7[%c8, %c0_36], %25 {strides = array<i32>} : memref<100x256xbf16, #tpu.memory_space<vmem>>, vector<4x256xbf16>,
    %c0_37 = arith.constant 0 : index
    %c0_38 = arith.constant 0 : index
    %c3 = arith.constant 3 : index
    %27 = vector.load %arg6[%c0_37, %c0_38, %c3] : memref<4x20x20xf32, #tpu.memory_space<vmem>>, vector<4x16x16xf32>
    %28 = vector.shape_cast %27 : vector<4x16x16xf32> to vector<4x256xf32>
    %29 = arith.truncf %28 : vector<4x256xf32> to vector<4x256xbf16>
    %c12 = arith.constant 12 : index
    %c0_39 = arith.constant 0 : index
    %30 = vector.load %arg7[%c12, %c0_39] : memref<100x256xbf16, #tpu.memory_space<vmem>>, vector<4x256xbf16>
    tpu.vector_store %arg7[%c12, %c0_39], %29 {strides = array<i32>} : memref<100x256xbf16, #tpu.memory_space<vmem>>, vector<4x256xbf16>,
    %c0_40 = arith.constant 0 : index
    %c0_41 = arith.constant 0 : index
    %c4_42 = arith.constant 4 : index
    %31 = vector.load %arg6[%c0_40, %c0_41, %c4_42] : memref<4x20x20xf32, #tpu.memory_space<vmem>>, vector<4x16x16xf32>
    %32 = vector.shape_cast %31 : vector<4x16x16xf32> to vector<4x256xf32>
    %33 = arith.truncf %32 : vector<4x256xf32> to vector<4x256xbf16>
    %c16 = arith.constant 16 : index
    %c0_43 = arith.constant 0 : index
    %34 = vector.load %arg7[%c16, %c0_43] : memref<100x256xbf16, #tpu.memory_space<vmem>>, vector<4x256xbf16>
    tpu.vector_store %arg7[%c16, %c0_43], %33 {strides = array<i32>} : memref<100x256xbf16, #tpu.memory_space<vmem>>, vector<4x256xbf16>,
    %c0_44 = arith.constant 0 : index
    %c1_45 = arith.constant 1 : index
    %c0_46 = arith.constant 0 : index
    %35 = vector.load %arg6[%c0_44, %c1_45, %c0_46] : memref<4x20x20xf32, #tpu.memory_space<vmem>>, vector<4x16x16xf32>
    %36 = vector.shape_cast %35 : vector<4x16x16xf32> to vector<4x256xf32>
    %37 = arith.truncf %36 : vector<4x256xf32> to vector<4x256xbf16>
    %c20 = arith.constant 20 : index
    %c0_47 = arith.constant 0 : index
    %38 = vector.load %arg7[%c20, %c0_47] : memref<100x256xbf16, #tpu.memory_space<vmem>>, vector<4x256xbf16>
    tpu.vector_store %arg7[%c20, %c0_47], %37 {strides = array<i32>} : memref<100x256xbf16, #tpu.memory_space<vmem>>, vector<4x256xbf16>,
    %c0_48 = arith.constant 0 : index
    %c1_49 = arith.constant 1 : index
    %c1_50 = arith.constant 1 : index
    %39 = vector.load %arg6[%c0_48, %c1_49, %c1_50] : memref<4x20x20xf32, #tpu.memory_space<vmem>>, vector<4x16x16xf32>
    %40 = vector.shape_cast %39 : vector<4x16x16xf32> to vector<4x256xf32>
    %41 = arith.truncf %40 : vector<4x256xf32> to vector<4x256xbf16>
    %c24 = arith.constant 24 : index
    %c0_51 = arith.constant 0 : index
    %42 = vector.load %arg7[%c24, %c0_51] : memref<100x256xbf16, #tpu.memory_space<vmem>>, vector<4x256xbf16>
    tpu.vector_store %arg7[%c24, %c0_51], %41 {strides = array<i32>} : memref<100x256xbf16, #tpu.memory_space<vmem>>, vector<4x256xbf16>,
    %c0_52 = arith.constant 0 : index
    %c1_53 = arith.constant 1 : index
    %c2_54 = arith.constant 2 : index
    %43 = vector.load %arg6[%c0_52, %c1_53, %c2_54] : memref<4x20x20xf32, #tpu.memory_space<vmem>>, vector<4x16x16xf32>
    %44 = vector.shape_cast %43 : vector<4x16x16xf32> to vector<4x256xf32>
    %45 = arith.truncf %44 : vector<4x256xf32> to vector<4x256xbf16>
    %c28 = arith.constant 28 : index
    %c0_55 = arith.constant 0 : index
    %46 = vector.load %arg7[%c28, %c0_55] : memref<100x256xbf16, #tpu.memory_space<vmem>>, vector<4x256xbf16>
    tpu.vector_store %arg7[%c28, %c0_55], %45 {strides = array<i32>} : memref<100x256xbf16, #tpu.memory_space<vmem>>, vector<4x256xbf16>,
    %c0_56 = arith.constant 0 : index
    %c1_57 = arith.constant 1 : index
    %c3_58 = arith.constant 3 : index
    %47 = vector.load %arg6[%c0_56, %c1_57, %c3_58] : memref<4x20x20xf32, #tpu.memory_space<vmem>>, vector<4x16x16xf32>
    %48 = vector.shape_cast %47 : vector<4x16x16xf32> to vector<4x256xf32>
    %49 = arith.truncf %48 : vector<4x256xf32> to vector<4x256xbf16>
    %c32 = arith.constant 32 : index
    %c0_59 = arith.constant 0 : index
    %50 = vector.load %arg7[%c32, %c0_59] : memref<100x256xbf16, #tpu.memory_space<vmem>>, vector<4x256xbf16>
    tpu.vector_store %arg7[%c32, %c0_59], %49 {strides = array<i32>} : memref<100x256xbf16, #tpu.memory_space<vmem>>, vector<4x256xbf16>,
    %c0_60 = arith.constant 0 : index
    %c1_61 = arith.constant 1 : index
    %c4_62 = arith.constant 4 : index
    %51 = vector.load %arg6[%c0_60, %c1_61, %c4_62] : memref<4x20x20xf32, #tpu.memory_space<vmem>>, vector<4x16x16xf32>
    %52 = vector.shape_cast %51 : vector<4x16x16xf32> to vector<4x256xf32>
    %53 = arith.truncf %52 : vector<4x256xf32> to vector<4x256xbf16>
    %c36 = arith.constant 36 : index
    %c0_63 = arith.constant 0 : index
    %54 = vector.load %arg7[%c36, %c0_63] : memref<100x256xbf16, #tpu.memory_space<vmem>>, vector<4x256xbf16>
    tpu.vector_store %arg7[%c36, %c0_63], %53 {strides = array<i32>} : memref<100x256xbf16, #tpu.memory_space<vmem>>, vector<4x256xbf16>,
    %c0_64 = arith.constant 0 : index
    %c2_65 = arith.constant 2 : index
    %c0_66 = arith.constant 0 : index
    %55 = vector.load %arg6[%c0_64, %c2_65, %c0_66] : memref<4x20x20xf32, #tpu.memory_space<vmem>>, vector<4x16x16xf32>
    %56 = vector.shape_cast %55 : vector<4x16x16xf32> to vector<4x256xf32>
    %57 = arith.truncf %56 : vector<4x256xf32> to vector<4x256xbf16>
    %c40 = arith.constant 40 : index
    %c0_67 = arith.constant 0 : index
    %58 = vector.load %arg7[%c40, %c0_67] : memref<100x256xbf16, #tpu.memory_space<vmem>>, vector<4x256xbf16>
    tpu.vector_store %arg7[%c40, %c0_67], %57 {strides = array<i32>} : memref<100x256xbf16, #tpu.memory_space<vmem>>, vector<4x256xbf16>,
    %c0_68 = arith.constant 0 : index
    %c2_69 = arith.constant 2 : index
    %c1_70 = arith.constant 1 : index
    %59 = vector.load %arg6[%c0_68, %c2_69, %c1_70] : memref<4x20x20xf32, #tpu.memory_space<vmem>>, vector<4x16x16xf32>
    %60 = vector.shape_cast %59 : vector<4x16x16xf32> to vector<4x256xf32>
    %61 = arith.truncf %60 : vector<4x256xf32> to vector<4x256xbf16>
    %c44 = arith.constant 44 : index
    %c0_71 = arith.constant 0 : index
    %62 = vector.load %arg7[%c44, %c0_71] : memref<100x256xbf16, #tpu.memory_space<vmem>>, vector<4x256xbf16>
    tpu.vector_store %arg7[%c44, %c0_71], %61 {strides = array<i32>} : memref<100x256xbf16, #tpu.memory_space<vmem>>, vector<4x256xbf16>,
    %c0_72 = arith.constant 0 : index
    %c2_73 = arith.constant 2 : index
    %c2_74 = arith.constant 2 : index
    %63 = vector.load %arg6[%c0_72, %c2_73, %c2_74] : memref<4x20x20xf32, #tpu.memory_space<vmem>>, vector<4x16x16xf32>
    %64 = vector.shape_cast %63 : vector<4x16x16xf32> to vector<4x256xf32>
    %65 = arith.truncf %64 : vector<4x256xf32> to vector<4x256xbf16>
    %c48 = arith.constant 48 : index
    %c0_75 = arith.constant 0 : index
    %66 = vector.load %arg7[%c48, %c0_75] : memref<100x256xbf16, #tpu.memory_space<vmem>>, vector<4x256xbf16>
    tpu.vector_store %arg7[%c48, %c0_75], %65 {strides = array<i32>} : memref<100x256xbf16, #tpu.memory_space<vmem>>, vector<4x256xbf16>,
    %c0_76 = arith.constant 0 : index
    %c2_77 = arith.constant 2 : index
    %c3_78 = arith.constant 3 : index
    %67 = vector.load %arg6[%c0_76, %c2_77, %c3_78] : memref<4x20x20xf32, #tpu.memory_space<vmem>>, vector<4x16x16xf32>
    %68 = vector.shape_cast %67 : vector<4x16x16xf32> to vector<4x256xf32>
    %69 = arith.truncf %68 : vector<4x256xf32> to vector<4x256xbf16>
    %c52 = arith.constant 52 : index
    %c0_79 = arith.constant 0 : index
    %70 = vector.load %arg7[%c52, %c0_79] : memref<100x256xbf16, #tpu.memory_space<vmem>>, vector<4x256xbf16>
    tpu.vector_store %arg7[%c52, %c0_79], %69 {strides = array<i32>} : memref<100x256xbf16, #tpu.memory_space<vmem>>, vector<4x256xbf16>,
    %c0_80 = arith.constant 0 : index
    %c2_81 = arith.constant 2 : index
    %c4_82 = arith.constant 4 : index
    %71 = vector.load %arg6[%c0_80, %c2_81, %c4_82] : memref<4x20x20xf32, #tpu.memory_space<vmem>>, vector<4x16x16xf32>
    %72 = vector.shape_cast %71 : vector<4x16x16xf32> to vector<4x256xf32>
    %73 = arith.truncf %72 : vector<4x256xf32> to vector<4x256xbf16>
    %c56 = arith.constant 56 : index
    %c0_83 = arith.constant 0 : index
    %74 = vector.load %arg7[%c56, %c0_83] : memref<100x256xbf16, #tpu.memory_space<vmem>>, vector<4x256xbf16>
    tpu.vector_store %arg7[%c56, %c0_83], %73 {strides = array<i32>} : memref<100x256xbf16, #tpu.memory_space<vmem>>, vector<4x256xbf16>,
    %c0_84 = arith.constant 0 : index
    %c3_85 = arith.constant 3 : index
    %c0_86 = arith.constant 0 : index
    %75 = vector.load %arg6[%c0_84, %c3_85, %c0_86] : memref<4x20x20xf32, #tpu.memory_space<vmem>>, vector<4x16x16xf32>
    %76 = vector.shape_cast %75 : vector<4x16x16xf32> to vector<4x256xf32>
    %77 = arith.truncf %76 : vector<4x256xf32> to vector<4x256xbf16>
    %c60 = arith.constant 60 : index
    %c0_87 = arith.constant 0 : index
    %78 = vector.load %arg7[%c60, %c0_87] : memref<100x256xbf16, #tpu.memory_space<vmem>>, vector<4x256xbf16>
    tpu.vector_store %arg7[%c60, %c0_87], %77 {strides = array<i32>} : memref<100x256xbf16, #tpu.memory_space<vmem>>, vector<4x256xbf16>,
    %c0_88 = arith.constant 0 : index
    %c3_89 = arith.constant 3 : index
    %c1_90 = arith.constant 1 : index
    %79 = vector.load %arg6[%c0_88, %c3_89, %c1_90] : memref<4x20x20xf32, #tpu.memory_space<vmem>>, vector<4x16x16xf32>
    %80 = vector.shape_cast %79 : vector<4x16x16xf32> to vector<4x256xf32>
    %81 = arith.truncf %80 : vector<4x256xf32> to vector<4x256xbf16>
    %c64 = arith.constant 64 : index
    %c0_91 = arith.constant 0 : index
    %82 = vector.load %arg7[%c64, %c0_91] : memref<100x256xbf16, #tpu.memory_space<vmem>>, vector<4x256xbf16>
    tpu.vector_store %arg7[%c64, %c0_91], %81 {strides = array<i32>} : memref<100x256xbf16, #tpu.memory_space<vmem>>, vector<4x256xbf16>,
    %c0_92 = arith.constant 0 : index
    %c3_93 = arith.constant 3 : index
    %c2_94 = arith.constant 2 : index
    %83 = vector.load %arg6[%c0_92, %c3_93, %c2_94] : memref<4x20x20xf32, #tpu.memory_space<vmem>>, vector<4x16x16xf32>
    %84 = vector.shape_cast %83 : vector<4x16x16xf32> to vector<4x256xf32>
    %85 = arith.truncf %84 : vector<4x256xf32> to vector<4x256xbf16>
    %c68 = arith.constant 68 : index
    %c0_95 = arith.constant 0 : index
    %86 = vector.load %arg7[%c68, %c0_95] : memref<100x256xbf16, #tpu.memory_space<vmem>>, vector<4x256xbf16>
    tpu.vector_store %arg7[%c68, %c0_95], %85 {strides = array<i32>} : memref<100x256xbf16, #tpu.memory_space<vmem>>, vector<4x256xbf16>,
    %c0_96 = arith.constant 0 : index
    %c3_97 = arith.constant 3 : index
    %c3_98 = arith.constant 3 : index
    %87 = vector.load %arg6[%c0_96, %c3_97, %c3_98] : memref<4x20x20xf32, #tpu.memory_space<vmem>>, vector<4x16x16xf32>
    %88 = vector.shape_cast %87 : vector<4x16x16xf32> to vector<4x256xf32>
    %89 = arith.truncf %88 : vector<4x256xf32> to vector<4x256xbf16>
    %c72 = arith.constant 72 : index
    %c0_99 = arith.constant 0 : index
    %90 = vector.load %arg7[%c72, %c0_99] : memref<100x256xbf16, #tpu.memory_space<vmem>>, vector<4x256xbf16>
    tpu.vector_store %arg7[%c72, %c0_99], %89 {strides = array<i32>} : memref<100x256xbf16, #tpu.memory_space<vmem>>, vector<4x256xbf16>,
    %c0_100 = arith.constant 0 : index
    %c3_101 = arith.constant 3 : index
    %c4_102 = arith.constant 4 : index
    %91 = vector.load %arg6[%c0_100, %c3_101, %c4_102] : memref<4x20x20xf32, #tpu.memory_space<vmem>>, vector<4x16x16xf32>
    %92 = vector.shape_cast %91 : vector<4x16x16xf32> to vector<4x256xf32>
    %93 = arith.truncf %92 : vector<4x256xf32> to vector<4x256xbf16>
    %c76 = arith.constant 76 : index
    %c0_103 = arith.constant 0 : index
    %94 = vector.load %arg7[%c76, %c0_103] : memref<100x256xbf16, #tpu.memory_space<vmem>>, vector<4x256xbf16>
    tpu.vector_store %arg7[%c76, %c0_103], %93 {strides = array<i32>} : memref<100x256xbf16, #tpu.memory_space<vmem>>, vector<4x256xbf16>,
    %c0_104 = arith.constant 0 : index
    %c4_105 = arith.constant 4 : index
    %c0_106 = arith.constant 0 : index
    %95 = vector.load %arg6[%c0_104, %c4_105, %c0_106] : memref<4x20x20xf32, #tpu.memory_space<vmem>>, vector<4x16x16xf32>
    %96 = vector.shape_cast %95 : vector<4x16x16xf32> to vector<4x256xf32>
    %97 = arith.truncf %96 : vector<4x256xf32> to vector<4x256xbf16>
    %c80 = arith.constant 80 : index
    %c0_107 = arith.constant 0 : index
    %98 = vector.load %arg7[%c80, %c0_107] : memref<100x256xbf16, #tpu.memory_space<vmem>>, vector<4x256xbf16>
    tpu.vector_store %arg7[%c80, %c0_107], %97 {strides = array<i32>} : memref<100x256xbf16, #tpu.memory_space<vmem>>, vector<4x256xbf16>,
    %c0_108 = arith.constant 0 : index
    %c4_109 = arith.constant 4 : index
    %c1_110 = arith.constant 1 : index
    %99 = vector.load %arg6[%c0_108, %c4_109, %c1_110] : memref<4x20x20xf32, #tpu.memory_space<vmem>>, vector<4x16x16xf32>
    %100 = vector.shape_cast %99 : vector<4x16x16xf32> to vector<4x256xf32>
    %101 = arith.truncf %100 : vector<4x256xf32> to vector<4x256xbf16>
    %c84 = arith.constant 84 : index
    %c0_111 = arith.constant 0 : index
    %102 = vector.load %arg7[%c84, %c0_111] : memref<100x256xbf16, #tpu.memory_space<vmem>>, vector<4x256xbf16>
    tpu.vector_store %arg7[%c84, %c0_111], %101 {strides = array<i32>} : memref<100x256xbf16, #tpu.memory_space<vmem>>, vector<4x256xbf16>,
    %c0_112 = arith.constant 0 : index
    %c4_113 = arith.constant 4 : index
    %c2_114 = arith.constant 2 : index
    %103 = vector.load %arg6[%c0_112, %c4_113, %c2_114] : memref<4x20x20xf32, #tpu.memory_space<vmem>>, vector<4x16x16xf32>
    %104 = vector.shape_cast %103 : vector<4x16x16xf32> to vector<4x256xf32>
    %105 = arith.truncf %104 : vector<4x256xf32> to vector<4x256xbf16>
    %c88 = arith.constant 88 : index
    %c0_115 = arith.constant 0 : index
    %106 = vector.load %arg7[%c88, %c0_115] : memref<100x256xbf16, #tpu.memory_space<vmem>>, vector<4x256xbf16>
    tpu.vector_store %arg7[%c88, %c0_115], %105 {strides = array<i32>} : memref<100x256xbf16, #tpu.memory_space<vmem>>, vector<4x256xbf16>,
    %c0_116 = arith.constant 0 : index
    %c4_117 = arith.constant 4 : index
    %c3_118 = arith.constant 3 : index
    %107 = vector.load %arg6[%c0_116, %c4_117, %c3_118] : memref<4x20x20xf32, #tpu.memory_space<vmem>>, vector<4x16x16xf32>
    %108 = vector.shape_cast %107 : vector<4x16x16xf32> to vector<4x256xf32>
    %109 = arith.truncf %108 : vector<4x256xf32> to vector<4x256xbf16>
    %c92 = arith.constant 92 : index
    %c0_119 = arith.constant 0 : index
    %110 = vector.load %arg7[%c92, %c0_119] : memref<100x256xbf16, #tpu.memory_space<vmem>>, vector<4x256xbf16>
    tpu.vector_store %arg7[%c92, %c0_119], %109 {strides = array<i32>} : memref<100x256xbf16, #tpu.memory_space<vmem>>, vector<4x256xbf16>,
    %c0_120 = arith.constant 0 : index
    %c4_121 = arith.constant 4 : index
    %c4_122 = arith.constant 4 : index
    %111 = vector.load %arg6[%c0_120, %c4_121, %c4_122] : memref<4x20x20xf32, #tpu.memory_space<vmem>>, vector<4x16x16xf32>
    %112 = vector.shape_cast %111 : vector<4x16x16xf32> to vector<4x256xf32>
    %113 = arith.truncf %112 : vector<4x256xf32> to vector<4x256xbf16>
    %c96 = arith.constant 96 : index
    %c0_123 = arith.constant 0 : index
    %114 = vector.load %arg7[%c96, %c0_123] : memref<100x256xbf16, #tpu.memory_space<vmem>>, vector<4x256xbf16>
    tpu.vector_store %arg7[%c96, %c0_123], %113 {strides = array<i32>} : memref<100x256xbf16, #tpu.memory_space<vmem>>, vector<4x256xbf16>,
    %c0_124 = arith.constant 0 : index
    %c0_125 = arith.constant 0 : index
    %115 = vector.load %arg7[%c0_124, %c0_125] : memref<100x256xbf16, #tpu.memory_space<vmem>>, vector<100x256xbf16>
    %cst_126 = arith.constant dense<0.000000e+00> : vector<8x256xf32>
    %116 = tpu.matmul %11, %115, %cst_126 {dimension_numbers = #tpu.dot_dimension_numbers<[1], [0], [0], [1], [0, 0, 1, 1], [], []>} : vector<8x100xbf16>, vector<100x256xbf16>, vector<8x256xf32> -> vector<8x256xf32>
    %117 = vector.broadcast %12 : vector<8x1xf32> to vector<8x256xf32>
    %118 = arith.addf %116, %117 : vector<8x256xf32>
    %119 = arith.truncf %118 : vector<8x256xf32> to vector<8x256xbf16>
    %c0_127 = arith.constant 0 : index
    %c0_128 = arith.constant 0 : index
    %c0_129 = arith.constant 0 : index
    %120 = vector.load %arg4[%c0_127, %c0_128, %c0_129] : memref<1x8x256xbf16, #tpu.memory_space<vmem>>, vector<1x8x256xbf16>
    %121 = vector.shape_cast %120 : vector<1x8x256xbf16> to vector<8x256xbf16>
    %122 = vector.shape_cast %119 : vector<8x256xbf16> to vector<1x8x256xbf16>
    tpu.vector_store %arg4[%c0_127, %c0_128, %c0_129], %122 {strides = array<i32>} : memref<1x8x256xbf16, #tpu.memory_space<vmem>>, vector<1x8x256xbf16>,
    %cst_130 = arith.constant dense<0.000000e+00> : vector<8xf32>
    %123 = vector.multi_reduction <add>, %118, %cst_130 [1] : vector<8x256xf32> to vector<8xf32>
    %124 = vector.shape_cast %123 : vector<8xf32> to vector<8x1xf32>
    %125 = arith.addf %13, %124 : vector<8x1xf32>
    %126 = arith.mulf %118, %118 : vector<8x256xf32>
    %cst_131 = arith.constant dense<0.000000e+00> : vector<8xf32>
    %127 = vector.multi_reduction <add>, %126, %cst_131 [1] : vector<8x256xf32> to vector<8xf32>
    %128 = vector.shape_cast %127 : vector<8xf32> to vector<8x1xf32>
    %129 = arith.addf %14, %128 : vector<8x1xf32>
    %c0_132 = arith.constant 0 : index
    %c0_133 = arith.constant 0 : index
    %c0_134 = arith.constant 0 : index
    %130 = vector.load %arg5[%c0_132, %c0_133, %c0_134] : memref<1x8x2xf32, #tpu.memory_space<vmem>>, vector<1x8x1xf32>
    %131 = vector.shape_cast %130 : vector<1x8x1xf32> to vector<8x1xf32>
    %132 = vector.shape_cast %125 : vector<8x1xf32> to vector<1x8x1xf32>
    tpu.vector_store %arg5[%c0_132, %c0_133, %c0_134], %132 {strides = array<i32>} : memref<1x8x2xf32, #tpu.memory_space<vmem>>, vector<1x8x1xf32>,
    %c0_135 = arith.constant 0 : index
    %c0_136 = arith.constant 0 : index
    %c1_137 = arith.constant 1 : index
    %133 = vector.load %arg5[%c0_135, %c0_136, %c1_137] : memref<1x8x2xf32, #tpu.memory_space<vmem>>, vector<1x8x1xf32>
    %134 = vector.shape_cast %133 : vector<1x8x1xf32> to vector<8x1xf32>
    %135 = vector.shape_cast %129 : vector<8x1xf32> to vector<1x8x1xf32>
    tpu.vector_store %arg5[%c0_135, %c0_136, %c1_137], %135 {strides = array<i32>} : memref<1x8x2xf32, #tpu.memory_space<vmem>>, vector<1x8x1xf32>,
    return
  }
  func.func @transform_0(%arg0: i32) -> (i32, i32, i32, i32) {
    %c0_i32 = arith.constant 0 : i32
    %c0_i32_0 = arith.constant 0 : i32
    %c0_i32_1 = arith.constant 0 : i32
    %c0_i32_2 = arith.constant 0 : i32
    return %arg0, %c0_i32, %c0_i32_0, %c0_i32_1 : i32, i32, i32, i32
  }
  func.func @transform_1(%arg0: i32) -> (i32, i32) {
    %c0_i32 = arith.constant 0 : i32
    %c0_i32_0 = arith.constant 0 : i32
    %c0_i32_1 = arith.constant 0 : i32
    return %c0_i32, %c0_i32_0 : i32, i32
  }
  func.func @transform_2(%arg0: i32) -> (i32, i32) {
    %c0_i32 = arith.constant 0 : i32
    %c0_i32_0 = arith.constant 0 : i32
    %c0_i32_1 = arith.constant 0 : i32
    return %c0_i32, %c0_i32_0 : i32, i32
  }
  func.func @transform_3(%arg0: i32) -> (i32, i32, i32) {
    %c0_i32 = arith.constant 0 : i32
    %c0_i32_0 = arith.constant 0 : i32
    %c0_i32_1 = arith.constant 0 : i32
    return %arg0, %c0_i32, %c0_i32_0 : i32, i32, i32
  }
  func.func @transform_4(%arg0: i32) -> (i32, i32, i32) {
    %c0_i32 = arith.constant 0 : i32
    %c0_i32_0 = arith.constant 0 : i32
    %c0_i32_1 = arith.constant 0 : i32
    return %arg0, %c0_i32, %c0_i32_0 : i32, i32, i32
  }
}

</mosaic_0001>

<llo_original>
// kernel: multiconv_forward.3
$region0: #{multiconv_forward.3}
  #allocation0 [shape = 'u32[]', space=smem, size = 0x4, offset = 0x4, fixed_abs, tag = 'smem constant byte address 0x4 - core index']
  #allocation1 [shape = 'u32[144,128]{1,0:T(1,128)}', space=vmem, size = 0x12000, scoped, tag = 'internal scratch']
  %s0 = inlined_call_operand.vmem [shape: bf16[2,8,256], index: 0, kind: input, shape index: {}]
  %s1 = inlined_call_operand.vmem [shape: f32[8,1], index: 1, kind: input, shape index: {}]
  %s2 = inlined_call_operand.vmem [shape: f32[8,1], index: 2, kind: input, shape index: {}]
  %s3 = inlined_call_operand.vmem [shape: f32[2,8,256], index: 3, kind: output, shape index: {}]
  %s4 = sld [smem:[#allocation0]]
  $region45: #{multiconv_forward.3} parent=0
    _
  %s6 = ssub.s32 1, %s4
  %s7 = scalar_select 0, %s6, %s4
  loop: start=0, step=1, limit=4
  $region2: #{multiconv_forward.3} parent=0 // loop_pre_header
    _
  $region3: #{multiconv_forward.3} parent=0 // loop_header
    %s9 = sphi 0, %s13
    %p10 = scmp.ge.s32.totalorder %s9, 4
    %s16 = sphi 0, %s28
    %s17 = sphi 0, %s24
    %s18 = sphi 0, %s16
    %s19 = sphi 0, %s17
    %s20 = sphi 0, %s18
    %s21 = sphi 0, %s19
    %s33 = sphi 0, %s35
    %s36 = sphi 0, %s33
    %s37 = sphi 0, %s36
    %s53 = sphi 0, %s37
    %s57 = sphi 0, %s57
    %s59 = sphi 0, %s57
    %s60 = sphi 0, %s59
    %s74 = sphi 0, %s60
    %s78 = sphi 0, %s78
    %s80 = sphi 0, %s78
    %s81 = sphi 0, %s80
    %s95 = sphi 0, %s81
    %s103 = sphi 0, %s105
    %s106 = sphi 0, %s103
    %s107 = sphi 0, %s106
    %s123 = sphi 0, %s107
  $region4: #{multiconv_forward.3} parent=0 // loop_header_branch
    %12 = sbr.rel (%p10) target = $region8
  $region5: #{multiconv_forward.3} parent=0 // loop_body
    %s14 = ssub.s32 %s9, 1
    %s15 = ssub.s32 %s9, 2
    %s22 = sadd.s32 1, %s17
    %p23 = scmp.ge.s32.totalorder %s22, 1
    %s24 = scalar_select %p23, 0, %s22
    %s25 = sadd.s32 1, %s16
    %s26 = scalar_select %p23, %s25, %s16
    %p27 = scmp.ge.s32.totalorder %s26, 2
    %s28 = scalar_select %p27, 0, %s26
    %s29 = ssub.s32 %s16, %s28
    %s30 = ssub.s32 %s17, %s24
    %s31 = sor.u32 %s29, %s30
    %p32 = scmp.eq.s32.totalorder %s31, 0
    %s34 = sadd.s32 %s33, 1
    %s35 = scalar_select %p32, %s33, %s34
    %p38 = pneg %p32
    %p39 = scmp.eq.s32.totalorder %s9, 1
    %p40 = por %p38, %p39
    %p41 = scmp.ne.s32.totalorder %s33, %s36
    %p42 = scmp.eq.s32.totalorder %s9, 0
    %p43 = por %p41, %p42
    %p44 = scmp.ne.s32.totalorder %s33, %s36
    %p45 = scmp.eq.s32.totalorder %s14, 1
    %p46 = por %p44, %p45
    %p47 = scmp.ne.s32.totalorder %s36, %s37
    %p48 = scmp.eq.s32.totalorder %s14, 0
    %p49 = por %p47, %p48
    %p50 = scmp.ne.s32.totalorder %s36, %s37
    %p51 = scmp.eq.s32.totalorder %s15, 1
    %p52 = por %p50, %p51
    %p54 = scmp.ne.s32.totalorder %s37, %s53
    %p55 = scmp.eq.s32.totalorder %s15, 0
    %p56 = por %p54, %p55
    %s58 = sadd.s32 %s57, 1
    %p61 = scmp.eq.s32.totalorder %s9, 1
    %p62 = scmp.ne.s32.totalorder %s57, %s59
    %p63 = scmp.eq.s32.totalorder %s9, 0
    %p64 = por %p62, %p63
    %p65 = scmp.ne.s32.totalorder %s57, %s59
    %p66 = scmp.eq.s32.totalorder %s14, 1
    %p67 = por %p65, %p66
    %p68 = scmp.ne.s32.totalorder %s59, %s60
    %p69 = scmp.eq.s32.totalorder %s14, 0
    %p70 = por %p68, %p69
    %p71 = scmp.ne.s32.totalorder %s59, %s60
    %p72 = scmp.eq.s32.totalorder %s15, 1
    %p73 = por %p71, %p72
    %p75 = scmp.ne.s32.totalorder %s60, %s74
    %p76 = scmp.eq.s32.totalorder %s15, 0
    %p77 = por %p75, %p76
    %s79 = sadd.s32 %s78, 1
    %p82 = scmp.eq.s32.totalorder %s9, 1
    %p83 = scmp.ne.s32.totalorder %s78, %s80
    %p84 = scmp.eq.s32.totalorder %s9, 0
    %p85 = por %p83, %p84
    %p86 = scmp.ne.s32.totalorder %s78, %s80
    %p87 = scmp.eq.s32.totalorder %s14, 1
    %p88 = por %p86, %p87
    %p89 = scmp.ne.s32.totalorder %s80, %s81
    %p90 = scmp.eq.s32.totalorder %s14, 0
    %p91 = por %p89, %p90
    %p92 = scmp.ne.s32.totalorder %s80, %s81
    %p93 = scmp.eq.s32.totalorder %s15, 1
    %p94 = por %p92, %p93
    %p96 = scmp.ne.s32.totalorder %s81, %s95
    %p97 = scmp.eq.s32.totalorder %s15, 0
    %p98 = por %p96, %p97
    %s99 = ssub.s32 %s16, %s28
    %s100 = ssub.s32 %s17, %s24
    %s101 = sor.u32 %s99, %s100
    %p102 = scmp.eq.s32.totalorder %s101, 0
    %s104 = sadd.s32 %s103, 1
    %s105 = scalar_select %p102, %s103, %s104
    %p108 = pneg %p102
    %p109 = scmp.eq.s32.totalorder %s9, 1
    %p110 = por %p108, %p109
    %p111 = scmp.ne.s32.totalorder %s103, %s106
    %p112 = scmp.eq.s32.totalorder %s9, 0
    %p113 = por %p111, %p112
    %p114 = scmp.ne.s32.totalorder %s103, %s106
    %p115 = scmp.eq.s32.totalorder %s14, 1
    %p116 = por %p114, %p115
    %p117 = scmp.ne.s32.totalorder %s106, %s107
    %p118 = scmp.eq.s32.totalorder %s14, 0
    %p119 = por %p117, %p118
    %p120 = scmp.ne.s32.totalorder %s106, %s107
    %p121 = scmp.eq.s32.totalorder %s15, 1
    %p122 = por %p120, %p121
    %p124 = scmp.ne.s32.totalorder %s107, %s123
    %p125 = scmp.eq.s32.totalorder %s15, 0
    %p126 = por %p124, %p125
    %p127 = scmp.le.s32.totalorder 1, %s9
    %p128 = scmp.lt.s32.totalorder %s9, 3
    %p129 = pnand %p127, %p128
    %p130 = pneg %p129
    // Predicated region
    $region9: #{multiconv_forward.3} parent=5 // pred_check
      _
    $region10: #{multiconv_forward.3} parent=5 // pred_check_branch
      %132 = sbr.rel (%p129) target = $region12
    $region11: #{multiconv_forward.3} parent=5 // pred_region
      %s133 = ssub.s32 %s9, 1
      // Predicated region
      $region13: #{multiconv_forward.3} parent=11 // pred_check
        %p134 = pneg %p70
      $region14: #{multiconv_forward.3} parent=11 // pred_check_branch
        %136 = sbr.rel (%p134) target = $region16
      $region15: #{multiconv_forward.3} parent=11 // pred_region
        _
      $region16: #{multiconv_forward.3} parent=11 // pred_fallthru
        _
      // Predicated region
      $region17: #{multiconv_forward.3} parent=11 // pred_check
        %p137 = pneg %p91
      $region18: #{multiconv_forward.3} parent=11 // pred_check_branch
        %139 = sbr.rel (%p137) target = $region20
      $region19: #{multiconv_forward.3} parent=11 // pred_region
        _
      $region20: #{multiconv_forward.3} parent=11 // pred_fallthru
        _
    $region12: #{multiconv_forward.3} parent=5 // pred_fallthru
      _
    %p140 = scmp.lt.s32.totalorder %s9, 2
    // Predicated region
    $region21: #{multiconv_forward.3} parent=5 // pred_check
      %p141 = pneg %p140
    $region22: #{multiconv_forward.3} parent=5 // pred_check_branch
      %143 = sbr.rel (%p141) target = $region24
    $region23: #{multiconv_forward.3} parent=5 // pred_region
      // Predicated region
      $region25: #{multiconv_forward.3} parent=23 // pred_check
        %p144 = pneg %p43
      $region26: #{multiconv_forward.3} parent=23 // pred_check_branch
        %146 = sbr.rel (%p144) target = $region28
      $region27: #{multiconv_forward.3} parent=23 // pred_region
        %s147 = smul.u32 2, %s17
        %p148 = scmp.lt.s32.totalorder %s16, 1
        %s149 = scalar_select %p148, %s16, 1
        %p150 = scmp.lt.s32.totalorder %s147, 1
        %s151 = scalar_select %p150, %s147, 1
        %s152 = smul.addr %s149, 2
        %s153 = sadd.s32 %s151, %s152
        %s154 = smul.addr %s153, 4
        %s155 = scalar_lea.vmem %s0, %s154
        %s156 = smul.u32 2, %s17
      $region28: #{multiconv_forward.3} parent=23 // pred_fallthru
        _
    $region24: #{multiconv_forward.3} parent=5 // pred_fallthru
      _
    %p157 = scmp.le.s32.totalorder 1, %s9
    %p158 = scmp.lt.s32.totalorder %s9, 3
    %p159 = pnand %p157, %p158
    %p160 = pneg %p159
    // Predicated region
    $region29: #{multiconv_forward.3} parent=5 // pred_check
      _
    $region30: #{multiconv_forward.3} parent=5 // pred_check_branch
      %162 = sbr.rel (%p159) target = $region32
    $region31: #{multiconv_forward.3} parent=5 // pred_region
      %s163 = ssub.s32 %s9, 1
      %s164 = smul.u32 2, %s19
      %p165 = scmp.lt.s32.totalorder %s18, 1
      %s166 = scalar_select %p165, %s18, 1
      %p167 = scmp.lt.s32.totalorder %s164, 1
      %s168 = scalar_select %p167, %s164, 1
      %s169 = smul.addr %s166, 2
      %s170 = sadd.s32 %s168, %s169
      %s171 = smul.addr %s170, 4
      %s172 = scalar_lea.vmem %s0, %s171
      %p173 = pneg %p49
      %p174 = pneg %p46
      %p175 = pneg %p70
      %p176 = pneg %p67
      %p177 = pneg %p91
      %p178 = pneg %p88
      %p179 = pneg %p119
      %p180 = pneg %p116
      %s181 = smul.u32 2, %s19
      %p182 = scmp.lt.s32.totalorder %s18, 1
      %s183 = scalar_select %p182, %s18, 1
      %p184 = scmp.lt.s32.totalorder %s181, 1
      %s185 = scalar_select %p184, %s181, 1
      %s186 = smul.addr %s183, 2
      %s187 = sadd.s32 %s185, %s186
      %s188 = smul.addr %s187, 8
      %s189 = scalar_lea.vmem %s3, %s188
      %s190 = smul.u32 2, %s19
      %p191 = scmp.lt.s32.totalorder %s18, 1
      %s192 = scalar_select %p191, %s18, 1
      %p193 = scmp.lt.s32.totalorder %s190, 1
      %s194 = scalar_select %p193, %s190, 1
      %s195 = smul.addr %s192, 2
      %s196 = sadd.s32 %s194, %s195
      %s197 = smul.addr %s196, 4
      %s198 = scalar_lea.vmem %s0, %s197
      %s199 = smul.u32 2, %s19
      %s200 = smul.u32 2, %s19
      %p201 = scmp.lt.s32.totalorder %s18, 1
      %s202 = scalar_select %p201, %s18, 1
      %p203 = scmp.lt.s32.totalorder %s200, 1
      %s204 = scalar_select %p203, %s200, 1
      %s205 = smul.addr %s202, 2
      %s206 = sadd.s32 %s204, %s205
      %s207 = smul.addr %s206, 8
      %s208 = scalar_lea.vmem %s3, %s207
      %s209 = smul.u32 2, %s19
      %v210 = vld [vmem:[%s198] sm:$0xff]
      %v211 = vunpack.c.l.bf16 %v210
      %v212 = vunpack.c.h.bf16 %v210
      %v213 = vld [vmem:[%s1] sm:$0xff]
      %215 = vset.pattern.permute.xlu0 0
      %216 = vperm.xlu0 %215, %v213
      %v217 = vpop.permute.xlu0 %216
      %v219 = vmul.f32 %v211, %v217
      %v220 = vmul.f32 %v212, %v217
      %v221 = vld [vmem:[%s2] sm:$0xff]
      %223 = vset.pattern.permute.xlu0 0
      %224 = vperm.xlu0 %223, %v221
      %v225 = vpop.permute.xlu0 %224
      %v227 = vadd.f32 %v219, %v225
      %v228 = vadd.f32 %v220, %v225
      %v229 = vmax.f32 %v227, 0.0
      %v230 = vmax.f32 %v228, 0.0
      %231 = vst [vmem:[%s208] sm:$0xff] %v229
      %232 = vst [vmem:[%s208 + $0x8] sm:$0xff] %v230
      %s233 = smul.u32 2, %s19
      %p234 = scmp.lt.s32.totalorder %s18, 1
      %s235 = scalar_select %p234, %s18, 1
      %p236 = scmp.lt.s32.totalorder %s233, 1
      %s237 = scalar_select %p236, %s233, 1
      %s238 = smul.addr %s235, 2
      %s239 = sadd.s32 %s237, %s238
      %s240 = smul.addr %s239, 8
      %s241 = scalar_lea.vmem %s3, %s240
      // Predicated region
      $region33: #{multiconv_forward.3} parent=31 // pred_check
        %p242 = pneg %p116
      $region34: #{multiconv_forward.3} parent=31 // pred_check_branch
        %244 = sbr.rel (%p242) target = $region36
      $region35: #{multiconv_forward.3} parent=31 // pred_region
        %s245 = smul.u32 2, %s19
      $region36: #{multiconv_forward.3} parent=31 // pred_fallthru
        _
    $region32: #{multiconv_forward.3} parent=5 // pred_fallthru
      _
    %p246 = scmp.le.s32.totalorder 2, %s9
    // Predicated region
    $region37: #{multiconv_forward.3} parent=5 // pred_check
      %p247 = pneg %p246
    $region38: #{multiconv_forward.3} parent=5 // pred_check_branch
      %249 = sbr.rel (%p247) target = $region40
    $region39: #{multiconv_forward.3} parent=5 // pred_region
      %s250 = ssub.s32 %s9, 2
      // Predicated region
      $region41: #{multiconv_forward.3} parent=39 // pred_check
        %p251 = pneg %p122
      $region42: #{multiconv_forward.3} parent=39 // pred_check_branch
        %253 = sbr.rel (%p251) target = $region44
      $region43: #{multiconv_forward.3} parent=39 // pred_region
        %s254 = smul.u32 2, %s21
        %p255 = scmp.lt.s32.totalorder %s20, 1
        %s256 = scalar_select %p255, %s20, 1
        %p257 = scmp.lt.s32.totalorder %s254, 1
        %s258 = scalar_select %p257, %s254, 1
        %s259 = smul.addr %s256, 2
        %s260 = sadd.s32 %s258, %s259
        %s261 = smul.addr %s260, 8
        %s262 = scalar_lea.vmem %s3, %s261
      $region44: #{multiconv_forward.3} parent=39 // pred_fallthru
        _
    $region40: #{multiconv_forward.3} parent=5 // pred_fallthru
      _
  $region6: #{multiconv_forward.3} parent=0 // loop_footer
    %s13 = sadd.s32 1, %s9
  $region7: #{multiconv_forward.3} parent=0 // loop_footer_branch
    %8 = sbr.rel target = $region3
  $region8: #{multiconv_forward.3} parent=0 // loop_exit
    _

// kernel: multiconv_forward.2
$region0: #{multiconv_forward.2}
  #allocation0 [shape = 'u32[]', space=smem, size = 0x4, offset = 0x4, fixed_abs, tag = 'smem constant byte address 0x4 - core index']
  #allocation1 [shape = 'u32[144,128]{1,0:T(1,128)}', space=vmem, size = 0x12000, scoped, tag = 'internal scratch']
  #allocation2 [shape = 'f32[4,20,20]{2,1,0:T(8,128)}', space=vmem, size = 0xc000, scoped, tag = 'scratch operand']
  #allocation3 [shape = 'bf16[100,256]{1,0:T(8,128)(2,1)}', space=vmem, size = 0xd000, scoped, tag = 'scratch operand']
  %s0 = inlined_call_operand.vmem [shape: f32[2,4,16,16], index: 0, kind: input, shape index: {}]
  %s1 = inlined_call_operand.vmem [shape: bf16[8,100], index: 1, kind: input, shape index: {}]
  %s2 = inlined_call_operand.vmem [shape: f32[8,1], index: 2, kind: input, shape index: {}]
  %s3 = inlined_call_operand.vmem [shape: bf16[2,8,256], index: 3, kind: output, shape index: {0}]
  %s4 = inlined_call_operand.vmem [shape: f32[2,8,2], index: 4, kind: output, shape index: {1}]
  %5 = xla_tuple %s3, %s4
  %s6 = sld [smem:[#allocation0]]
  $region53: #{multiconv_forward.2} parent=0
    _
  %s8 = ssub.s32 1, %s6
  %s9 = scalar_select 0, %s8, %s6
  loop: start=0, step=1, limit=4
  $region2: #{multiconv_forward.2} parent=0 // loop_pre_header
    _
  $region3: #{multiconv_forward.2} parent=0 // loop_header
    %s11 = sphi 0, %s15
    %p12 = scmp.ge.s32.totalorder %s11, 4
    %s21 = sphi 0, %s23
    %s24 = sphi 0, %s21
    %s25 = sphi 0, %s24
    %s41 = sphi 0, %s25
    %s45 = sphi 0, %s45
    %s47 = sphi 0, %s45
    %s48 = sphi 0, %s47
    %s62 = sphi 0, %s48
    %s66 = sphi 0, %s66
    %s68 = sphi 0, %s66
    %s69 = sphi 0, %s68
    %s83 = sphi 0, %s69
    %s89 = sphi 0, %s91
    %s92 = sphi 0, %s89
    %s93 = sphi 0, %s92
    %s109 = sphi 0, %s93
    %s115 = sphi 0, %s117
    %s118 = sphi 0, %s115
    %s119 = sphi 0, %s118
    %s135 = sphi 0, %s119
  $region4: #{multiconv_forward.2} parent=0 // loop_header_branch
    %14 = sbr.rel (%p12) target = $region8
  $region5: #{multiconv_forward.2} parent=0 // loop_body
    %s16 = ssub.s32 %s11, 1
    %s17 = ssub.s32 %s11, 2
    %s18 = sadd.s32 %s11, 1
    %s19 = ssub.s32 %s11, %s18
    %p20 = scmp.eq.s32.totalorder %s19, 0
    %s22 = sadd.s32 %s21, 1
    %s23 = scalar_select %p20, %s21, %s22
    %p26 = pneg %p20
    %p27 = scmp.eq.s32.totalorder %s11, 1
    %p28 = por %p26, %p27
    %p29 = scmp.ne.s32.totalorder %s21, %s24
    %p30 = scmp.eq.s32.totalorder %s11, 0
    %p31 = por %p29, %p30
    %p32 = scmp.ne.s32.totalorder %s21, %s24
    %p33 = scmp.eq.s32.totalorder %s16, 1
    %p34 = por %p32, %p33
    %p35 = scmp.ne.s32.totalorder %s24, %s25
    %p36 = scmp.eq.s32.totalorder %s16, 0
    %p37 = por %p35, %p36
    %p38 = scmp.ne.s32.totalorder %s24, %s25
    %p39 = scmp.eq.s32.totalorder %s17, 1
    %p40 = por %p38, %p39
    %p42 = scmp.ne.s32.totalorder %s25, %s41
    %p43 = scmp.eq.s32.totalorder %s17, 0
    %p44 = por %p42, %p43
    %s46 = sadd.s32 %s45, 1
    %p49 = scmp.eq.s32.totalorder %s11, 1
    %p50 = scmp.ne.s32.totalorder %s45, %s47
    %p51 = scmp.eq.s32.totalorder %s11, 0
    %p52 = por %p50, %p51
    %p53 = scmp.ne.s32.totalorder %s45, %s47
    %p54 = scmp.eq.s32.totalorder %s16, 1
    %p55 = por %p53, %p54
    %p56 = scmp.ne.s32.totalorder %s47, %s48
    %p57 = scmp.eq.s32.totalorder %s16, 0
    %p58 = por %p56, %p57
    %p59 = scmp.ne.s32.totalorder %s47, %s48
    %p60 = scmp.eq.s32.totalorder %s17, 1
    %p61 = por %p59, %p60
    %p63 = scmp.ne.s32.totalorder %s48, %s62
    %p64 = scmp.eq.s32.totalorder %s17, 0
    %p65 = por %p63, %p64
    %s67 = sadd.s32 %s66, 1
    %p70 = scmp.eq.s32.totalorder %s11, 1
    %p71 = scmp.ne.s32.totalorder %s66, %s68
    %p72 = scmp.eq.s32.totalorder %s11, 0
    %p73 = por %p71, %p72
    %p74 = scmp.ne.s32.totalorder %s66, %s68
    %p75 = scmp.eq.s32.totalorder %s16, 1
    %p76 = por %p74, %p75
    %p77 = scmp.ne.s32.totalorder %s68, %s69
    %p78 = scmp.eq.s32.totalorder %s16, 0
    %p79 = por %p77, %p78
    %p80 = scmp.ne.s32.totalorder %s68, %s69
    %p81 = scmp.eq.s32.totalorder %s17, 1
    %p82 = por %p80, %p81
    %p84 = scmp.ne.s32.totalorder %s69, %s83
    %p85 = scmp.eq.s32.totalorder %s17, 0
    %p86 = por %p84, %p85
    %s87 = ssub.s32 %s11, %s18
    %p88 = scmp.eq.s32.totalorder %s87, 0
    %s90 = sadd.s32 %s89, 1
    %s91 = scalar_select %p88, %s89, %s90
    %p94 = pneg %p88
    %p95 = scmp.eq.s32.totalorder %s11, 1
    %p96 = por %p94, %p95
    %p97 = scmp.ne.s32.totalorder %s89, %s92
    %p98 = scmp.eq.s32.totalorder %s11, 0
    %p99 = por %p97, %p98
    %p100 = scmp.ne.s32.totalorder %s89, %s92
    %p101 = scmp.eq.s32.totalorder %s16, 1
    %p102 = por %p100, %p101
    %p103 = scmp.ne.s32.totalorder %s92, %s93
    %p104 = scmp.eq.s32.totalorder %s16, 0
    %p105 = por %p103, %p104
    %p106 = scmp.ne.s32.totalorder %s92, %s93
    %p107 = scmp.eq.s32.totalorder %s17, 1
    %p108 = por %p106, %p107
    %p110 = scmp.ne.s32.totalorder %s93, %s109
    %p111 = scmp.eq.s32.totalorder %s17, 0
    %p112 = por %p110, %p111
    %s113 = ssub.s32 %s11, %s18
    %p114 = scmp.eq.s32.totalorder %s113, 0
    %s116 = sadd.s32 %s115, 1
    %s117 = scalar_select %p114, %s115, %s116
    %p120 = pneg %p114
    %p121 = scmp.eq.s32.totalorder %s11, 1
    %p122 = por %p120, %p121
    %p123 = scmp.ne.s32.totalorder %s115, %s118
    %p124 = scmp.eq.s32.totalorder %s11, 0
    %p125 = por %p123, %p124
    %p126 = scmp.ne.s32.totalorder %s115, %s118
    %p127 = scmp.eq.s32.totalorder %s16, 1
    %p128 = por %p126, %p127
    %p129 = scmp.ne.s32.totalorder %s118, %s119
    %p130 = scmp.eq.s32.totalorder %s16, 0
    %p131 = por %p129, %p130
    %p132 = scmp.ne.s32.totalorder %s118, %s119
    %p133 = scmp.eq.s32.totalorder %s17, 1
    %p134 = por %p132, %p133
    %p136 = scmp.ne.s32.totalorder %s119, %s135
    %p137 = scmp.eq.s32.totalorder %s17, 0
    %p138 = por %p136, %p137
    %p139 = scmp.le.s32.totalorder 1, %s11
    %p140 = scmp.lt.s32.totalorder %s11, 3
    %p141 = pnand %p139, %p140
    %p142 = pneg %p141
    // Predicated region
    $region9: #{multiconv_forward.2} parent=5 // pred_check
      _
    $region10: #{multiconv_forward.2} parent=5 // pred_check_branch
      %144 = sbr.rel (%p141) target = $region12
    $region11: #{multiconv_forward.2} parent=5 // pred_region
      %s145 = ssub.s32 %s11, 1
      // Predicated region
      $region13: #{multiconv_forward.2} parent=11 // pred_check
        %p146 = pneg %p58
      $region14: #{multiconv_forward.2} parent=11 // pred_check_branch
        %148 = sbr.rel (%p146) target = $region16
      $region15: #{multiconv_forward.2} parent=11 // pred_region
        _
      $region16: #{multiconv_forward.2} parent=11 // pred_fallthru
        _
      // Predicated region
      $region17: #{multiconv_forward.2} parent=11 // pred_check
        %p149 = pneg %p79
      $region18: #{multiconv_forward.2} parent=11 // pred_check_branch
        %151 = sbr.rel (%p149) target = $region20
      $region19: #{multiconv_forward.2} parent=11 // pred_region
        _
      $region20: #{multiconv_forward.2} parent=11 // pred_fallthru
        _
    $region12: #{multiconv_forward.2} parent=5 // pred_fallthru
      _
    %p152 = scmp.lt.s32.totalorder %s11, 2
    // Predicated region
    $region21: #{multiconv_forward.2} parent=5 // pred_check
      %p153 = pneg %p152
    $region22: #{multiconv_forward.2} parent=5 // pred_check_branch
      %155 = sbr.rel (%p153) target = $region24
    $region23: #{multiconv_forward.2} parent=5 // pred_region
      // Predicated region
      $region25: #{multiconv_forward.2} parent=23 // pred_check
        %p156 = pneg %p31
      $region26: #{multiconv_forward.2} parent=23 // pred_check_branch
        %158 = sbr.rel (%p156) target = $region28
      $region27: #{multiconv_forward.2} parent=23 // pred_region
        %p159 = scmp.lt.s32.totalorder %s11, 1
        %s160 = scalar_select %p159, %s11, 1
        %s161 = smul.addr %s160, 8
        %s162 = smul.addr %s161, 8
        %s163 = scalar_lea.vmem %s0, %s162
      $region28: #{multiconv_forward.2} parent=23 // pred_fallthru
        _
    $region24: #{multiconv_forward.2} parent=5 // pred_fallthru
      _
    %p164 = scmp.le.s32.totalorder 1, %s11
    %p165 = scmp.lt.s32.totalorder %s11, 3
    %p166 = pnand %p164, %p165
    %p167 = pneg %p166
    // Predicated region
    $region29: #{multiconv_forward.2} parent=5 // pred_check
      _
    $region30: #{multiconv_forward.2} parent=5 // pred_check_branch
      %169 = sbr.rel (%p166) target = $region32
    $region31: #{multiconv_forward.2} parent=5 // pred_region
      %s170 = ssub.s32 %s11, 1
      %p171 = scmp.lt.s32.totalorder %s16, 1
      %s172 = scalar_select %p171, %s16, 1
      %s173 = smul.addr %s172, 8
      %s174 = smul.addr %s173, 8
      %s175 = scalar_lea.vmem %s0, %s174
      %p176 = pneg %p37
      %p177 = pneg %p34
      %p178 = pneg %p58
      %p179 = pneg %p55
      %p180 = pneg %p79
      %p181 = pneg %p76
      %p182 = pneg %p105
      %p183 = pneg %p102
      %p184 = scmp.lt.s32.totalorder %s16, 1
      %s185 = scalar_select %p184, %s16, 1
      %s186 = smul.addr %s185, 2
      %s187 = smul.addr %s186, 4
      %s188 = scalar_lea.vmem %s3, %s187
      %p189 = pneg %p131
      %p190 = pneg %p128
      %p191 = scmp.lt.s32.totalorder %s16, 1
      %s192 = scalar_select %p191, %s16, 1
      %s193 = smul.addr %s192, 8
      %s194 = scalar_lea.vmem %s4, %s193
      %p195 = scmp.lt.s32.totalorder %s16, 1
      %s196 = scalar_select %p195, %s16, 1
      %s197 = smul.addr %s196, 8
      %s198 = smul.addr %s197, 8
      %s199 = scalar_lea.vmem %s0, %s198
      %p200 = scmp.lt.s32.totalorder %s16, 1
      %s201 = scalar_select %p200, %s16, 1
      %s202 = smul.addr %s201, 2
      %s203 = smul.addr %s202, 4
      %s204 = scalar_lea.vmem %s3, %s203
      %p205 = scmp.lt.s32.totalorder %s16, 1
      %s206 = scalar_select %p205, %s16, 1
      %s207 = smul.addr %s206, 8
      %s208 = scalar_lea.vmem %s4, %s207
      %vm210 = vcmask 156672
      %211 = vst.msk [vmem:[#allocation2] sm:$0x3] %vm210, 0.0
      %212 = vst.msk [vmem:[#allocation2 + $0x18] sm:$0x3] %vm210, 0.0
      %213 = vst.msk [vmem:[#allocation2 + $0x30] sm:$0x3] %vm210, 0.0
      %214 = vst.msk [vmem:[#allocation2 + $0x48] sm:$0x3] %vm210, 0.0
      %215 = vst.msk [vmem:[#allocation2 + $0x12] sm:$0x3] %vm210, 0.0
      %216 = vst.msk [vmem:[#allocation2 + $0x2a] sm:$0x3] %vm210, 0.0
      %217 = vst.msk [vmem:[#allocation2 + $0x42] sm:$0x3] %vm210, 0.0
      %218 = vst.msk [vmem:[#allocation2 + $0x5a] sm:$0x3] %vm210, 0.0
      %vm219 = vcmask 15360
      %220 = vst.msk [vmem:[#allocation2] sm:$0xff] %vm219, 0.0
      %221 = vst.msk [vmem:[#allocation2 + $0x8] sm:$0xff] %vm219, 0.0
      %vm222 = vcmask 11264
      %223 = vst.msk [vmem:[#allocation2 + $0x10] sm:$0xf] %vm222, 0.0
      %224 = vst.msk [vmem:[#allocation2 + $0x18] sm:$0xff] %vm219, 0.0
      %225 = vst.msk [vmem:[#allocation2 + $0x20] sm:$0xff] %vm219, 0.0
      %226 = vst.msk [vmem:[#allocation2 + $0x28] sm:$0xf] %vm222, 0.0
      %227 = vst.msk [vmem:[#allocation2 + $0x30] sm:$0xff] %vm219, 0.0
      %228 = vst.msk [vmem:[#allocation2 + $0x38] sm:$0xff] %vm219, 0.0
      %229 = vst.msk [vmem:[#allocation2 + $0x40] sm:$0xf] %vm222, 0.0
      %230 = vst.msk [vmem:[#allocation2 + $0x48] sm:$0xff] %vm219, 0.0
      %231 = vst.msk [vmem:[#allocation2 + $0x50] sm:$0xff] %vm219, 0.0
      %232 = vst.msk [vmem:[#allocation2 + $0x58] sm:$0xf] %vm222, 0.0
      %vm233 = vcmask 162960
      %234 = vst.msk [vmem:[#allocation2] sm:$0xff] %vm233, 0.0
      %235 = vst.msk [vmem:[#allocation2 + $0x8] sm:$0xff] %vm233, 0.0
      %vm236 = vcmask 158864
      %237 = vst.msk [vmem:[#allocation2 + $0x10] sm:$0xf] %vm236, 0.0
      %238 = vst.msk [vmem:[#allocation2 + $0x18] sm:$0xff] %vm233, 0.0
      %239 = vst.msk [vmem:[#allocation2 + $0x20] sm:$0xff] %vm233, 0.0
      %240 = vst.msk [vmem:[#allocation2 + $0x28] sm:$0xf] %vm236, 0.0
      %241 = vst.msk [vmem:[#allocation2 + $0x30] sm:$0xff] %vm233, 0.0
      %242 = vst.msk [vmem:[#allocation2 + $0x38] sm:$0xff] %vm233, 0.0
      %243 = vst.msk [vmem:[#allocation2 + $0x40] sm:$0xf] %vm236, 0.0
      %244 = vst.msk [vmem:[#allocation2 + $0x48] sm:$0xff] %vm233, 0.0
      %245 = vst.msk [vmem:[#allocation2 + $0x50] sm:$0xff] %vm233, 0.0
      %246 = vst.msk [vmem:[#allocation2 + $0x58] sm:$0xf] %vm236, 0.0
      %v247 = vld [vmem:[%s199] sm:$0xff]
      %v248 = vld [vmem:[%s199 + $0x8] sm:$0xff]
      %v249 = vld [vmem:[%s199 + $0x10] sm:$0xff]
      %v250 = vld [vmem:[%s199 + $0x18] sm:$0xff]
      %v251 = vld [vmem:[%s199 + $0x20] sm:$0xff]
      %v252 = vld [vmem:[%s199 + $0x28] sm:$0xff]
      %v253 = vld [vmem:[%s199 + $0x30] sm:$0xff]
      %v254 = vld [vmem:[%s199 + $0x38] sm:$0xff]
      %263 = vrot.lane.b32.xlu0 %v247, 2
      %v264 = vpop.permute.xlu0 %263
      %265 = vrot.lane.b32.xlu0 %v248, 2
      %v266 = vpop.permute.xlu0 %265
      %267 = vrot.lane.b32.xlu0 %v249, 2
      %v268 = vpop.permute.xlu0 %267
      %269 = vrot.lane.b32.xlu0 %v250, 2
      %v270 = vpop.permute.xlu0 %269
      %271 = vrot.lane.b32.xlu0 %v251, 2
      %v272 = vpop.permute.xlu0 %271
      %273 = vrot.lane.b32.xlu0 %v252, 2
      %v274 = vpop.permute.xlu0 %273
      %275 = vrot.lane.b32.xlu0 %v253, 2
      %v276 = vpop.permute.xlu0 %275
      %277 = vrot.lane.b32.xlu0 %v254, 2
      %v278 = vpop.permute.xlu0 %277
      %vm287 = vcmask 146448
      %288 = vst.msk [vmem:[#allocation2 + $0x2] sm:$0xff] %vm287, %v264
      %289 = vst.msk [vmem:[#allocation2 + $0xa] sm:$0xff] %vm287, %v266
      %290 = vst.msk [vmem:[#allocation2 + $0x1a] sm:$0xff] %vm287, %v268
      %291 = vst.msk [vmem:[#allocation2 + $0x22] sm:$0xff] %vm287, %v270
      %292 = vst.msk [vmem:[#allocation2 + $0x32] sm:$0xff] %vm287, %v272
      %293 = vst.msk [vmem:[#allocation2 + $0x3a] sm:$0xff] %vm287, %v274
      %294 = vst.msk [vmem:[#allocation2 + $0x4a] sm:$0xff] %vm287, %v276
      %295 = vst.msk [vmem:[#allocation2 + $0x52] sm:$0xff] %vm287, %v278
      %v296 = vld [vmem:[%s1] sm:$0xf]
      %v297 = vld [vmem:[%s2] sm:$0xff]
      %v298 = vld [vmem:[#allocation2] sm:$0xff]
      %v299 = vld [vmem:[#allocation2 + $0x8] sm:$0xff]
      %v300 = vld [vmem:[#allocation2 + $0x18] sm:$0xff]
      %v301 = vld [vmem:[#allocation2 + $0x20] sm:$0xff]
      %v302 = vld [vmem:[#allocation2 + $0x30] sm:$0xff]
      %v303 = vld [vmem:[#allocation2 + $0x38] sm:$0xff]
      %v304 = vld [vmem:[#allocation2 + $0x48] sm:$0xff]
      %v305 = vld [vmem:[#allocation2 + $0x50] sm:$0xff]
      %v306 = vcombine.low %v298, %v302
      %v307 = vcombine.high %v298, %v302
      %v309 = vunpack.c.l.s4 1983009808
      %v310 = vunpack.c.0.s8 %v309
      %v311 = vlaneseq
      %v312 = vshrl.u32 %v311, 7
      %v313 = vsub.s32 %v310, %v312
      %v314 = vrot.slane %v306, %v313
      %v316 = vunpack.c.l.s4 1983009808
      %v317 = vunpack.c.0.s8 %v316
      %v318 = vlaneseq
      %v319 = vshrl.u32 %v318, 7
      %v320 = vsub.s32 %v317, %v319
      %v321 = vrot.slane %v307, %v320
      %v322 = vcombine.low %v300, %v304
      %v323 = vcombine.high %v300, %v304
      %v325 = vunpack.c.l.s4 1983009808
      %v326 = vunpack.c.0.s8 %v325
      %v327 = vlaneseq
      %v328 = vshrl.u32 %v327, 7
      %v329 = vsub.s32 %v326, %v328
      %v330 = vrot.slane %v322, %v329
      %v332 = vunpack.c.l.s4 1983009808
      %v333 = vunpack.c.0.s8 %v332
      %v334 = vlaneseq
      %v335 = vshrl.u32 %v334, 7
      %v336 = vsub.s32 %v333, %v335
      %v337 = vrot.slane %v323, %v336
      %v338 = vcombine.low %v314, %v330
      %v339 = vcombine.high %v314, %v330
      %v341 = vunpack.c.l.s4 1934713408
      %v342 = vunpack.c.0.s8 %v341
      %v343 = vlaneseq
      %v344 = vshrl.u32 %v343, 7
      %v345 = vsub.s32 %v342, %v344
      %v346 = vrot.slane %v338, %v345
      %v348 = vunpack.c.l.s4 1934713408
      %v349 = vunpack.c.0.s8 %v348
      %v350 = vlaneseq
      %v351 = vshrl.u32 %v350, 7
      %v352 = vsub.s32 %v349, %v351
      %v353 = vrot.slane %v339, %v352
      %v354 = vcombine.low %v321, %v337
      %v355 = vcombine.high %v321, %v337
      %v357 = vunpack.c.l.s4 1934713408
      %v358 = vunpack.c.0.s8 %v357
      %v359 = vlaneseq
      %v360 = vshrl.u32 %v359, 7
      %v361 = vsub.s32 %v358, %v360
      %v362 = vrot.slane %v354, %v361
      %v364 = vunpack.c.l.s4 1934713408
      %v365 = vunpack.c.0.s8 %v364
      %v366 = vlaneseq
      %v367 = vshrl.u32 %v366, 7
      %v368 = vsub.s32 %v365, %v367
      %v369 = vrot.slane %v355, %v368
      %v370 = vcombine.high %v346, 0.0
      %v371 = vcombine.high %v353, 0.0
      %v372 = vcombine.high %v362, 0.0
      %v373 = vcombine.high %v369, 0.0
      %v374 = vcombine.low %v299, %v303
      %v375 = vcombine.high %v299, %v303
      %v377 = vunpack.c.l.s4 1983009808
      %v378 = vunpack.c.0.s8 %v377
      %v379 = vlaneseq
      %v380 = vshrl.u32 %v379, 7
      %v381 = vsub.s32 %v378, %v380
      %v382 = vrot.slane %v374, %v381
      %v384 = vunpack.c.l.s4 1983009808
      %v385 = vunpack.c.0.s8 %v384
      %v386 = vlaneseq
      %v387 = vshrl.u32 %v386, 7
      %v388 = vsub.s32 %v385, %v387
      %v389 = vrot.slane %v375, %v388
      %v390 = vcombine.low %v301, %v305
      %v391 = vcombine.high %v301, %v305
      %v393 = vunpack.c.l.s4 1983009808
      %v394 = vunpack.c.0.s8 %v393
      %v395 = vlaneseq
      %v396 = vshrl.u32 %v395, 7
      %v397 = vsub.s32 %v394, %v396
      %v398 = vrot.slane %v390, %v397
      %v400 = vunpack.c.l.s4 1983009808
      %v401 = vunpack.c.0.s8 %v400
      %v402 = vlaneseq
      %v403 = vshrl.u32 %v402, 7
      %v404 = vsub.s32 %v401, %v403
      %v405 = vrot.slane %v391, %v404
      %v406 = vcombine.low %v382, %v398
      %v407 = vcombine.high %v382, %v398
      %v409 = vunpack.c.l.s4 1934713408
      %v410 = vunpack.c.0.s8 %v409
      %v411 = vlaneseq
      %v412 = vshrl.u32 %v411, 7
      %v413 = vsub.s32 %v410, %v412
      %v414 = vrot.slane %v406, %v413
      %v416 = vunpack.c.l.s4 1934713408
      %v417 = vunpack.c.0.s8 %v416
      %v418 = vlaneseq
      %v419 = vshrl.u32 %v418, 7
      %v420 = vsub.s32 %v417, %v419
      %v421 = vrot.slane %v407, %v420
      %v422 = vcombine.low %v389, %v405
      %v423 = vcombine.high %v389, %v405
      %v425 = vunpack.c.l.s4 1934713408
      %v426 = vunpack.c.0.s8 %v425
      %v427 = vlaneseq
      %v428 = vshrl.u32 %v427, 7
      %v429 = vsub.s32 %v426, %v428
      %v430 = vrot.slane %v422, %v429
      %v432 = vunpack.c.l.s4 1934713408
      %v433 = vunpack.c.0.s8 %v432
      %v434 = vlaneseq
      %v435 = vshrl.u32 %v434, 7
      %v436 = vsub.s32 %v433, %v435
      %v437 = vrot.slane %v423, %v436
      %v438 = vcombine.high %v414, 0.0
      %v439 = vcombine.high %v421, 0.0
      %v440 = vcombine.high %v430, 0.0
      %v441 = vcombine.high %v437, 0.0
      %443 = vrot.lane.b32.xlu0 %v370, 16
      %v444 = vpop.permute.xlu0 %443
      %447 = vrot.lane.b32.xlu0 %v353, 32
      %v448 = vpop.permute.xlu0 %447
      %451 = vrot.lane.b32.xlu0 %v371, 48
      %v452 = vpop.permute.xlu0 %451
      %455 = vrot.lane.b32.xlu0 %v362, 64
      %v456 = vpop.permute.xlu0 %455
      %459 = vrot.lane.b32.xlu0 %v372, 80
      %v460 = vpop.permute.xlu0 %459
      %463 = vrot.lane.b32.xlu0 %v369, 96
      %v464 = vpop.permute.xlu0 %463
      %467 = vrot.lane.b32.xlu0 %v373, 112
      %v468 = vpop.permute.xlu0 %467
      %471 = vrot.lane.b32.xlu0 %v438, 16
      %v472 = vpop.permute.xlu0 %471
      %475 = vrot.lane.b32.xlu0 %v421, 32
      %v476 = vpop.permute.xlu0 %475
      %479 = vrot.lane.b32.xlu0 %v439, 48
      %v480 = vpop.permute.xlu0 %479
      %483 = vrot.lane.b32.xlu0 %v430, 64
      %v484 = vpop.permute.xlu0 %483
      %487 = vrot.lane.b32.xlu0 %v440, 80
      %v488 = vpop.permute.xlu0 %487
      %491 = vrot.lane.b32.xlu0 %v437, 96
      %v492 = vpop.permute.xlu0 %491
      %495 = vrot.lane.b32.xlu0 %v441, 112
      %v496 = vpop.permute.xlu0 %495
      %vm498 = vcmask 130048
      %v499 = vsel %vm498, %v346, %v444
      %vm500 = vcmask 261120
      %v501 = vsel %vm500, %v499, %v448
      %vm502 = vcmask 392192
      %v503 = vsel %vm502, %v501, %v452
      %vm504 = vcmask 523264
      %v505 = vsel %vm504, %v503, %v456
      %vm506 = vcmask 654336
      %v507 = vsel %vm506, %v505, %v460
      %vm508 = vcmask 785408
      %v509 = vsel %vm508, %v507, %v464
      %vm510 = vcmask 916480
      %v511 = vsel %vm510, %v509, %v468
      %v512 = vsel %vm498, %v414, %v472
      %v513 = vsel %vm500, %v512, %v476
      %v514 = vsel %vm502, %v513, %v480
      %v515 = vsel %vm504, %v514, %v484
      %v516 = vsel %vm506, %v515, %v488
      %v517 = vsel %vm508, %v516, %v492
      %v518 = vsel %vm510, %v517, %v496
      %v519 = vpack.c.bf16 %v511, %v511
      %v520 = vpack.c.bf16 %v518, %v518
      %v523 = vunpack.c.l.b16 %v519
      %v524 = vunpack.c.l.b16 %v520
      %v525 = vpack.c.b16 %v524, %v523
      %527 = vst [vmem:[#allocation3] sm:$0x33] %v525
      %v528 = vld [vmem:[#allocation2] sm:$0xff]
      %v529 = vld [vmem:[#allocation2 + $0x8] sm:$0xff]
      %v530 = vld [vmem:[#allocation2 + $0x18] sm:$0xff]
      %v531 = vld [vmem:[#allocation2 + $0x20] sm:$0xff]
      %v532 = vld [vmem:[#allocation2 + $0x30] sm:$0xff]
      %v533 = vld [vmem:[#allocation2 + $0x38] sm:$0xff]
      %v534 = vld [vmem:[#allocation2 + $0x48] sm:$0xff]
      %v535 = vld [vmem:[#allocation2 + $0x50] sm:$0xff]
      %544 = vrot.lane.b32.xlu0 %v528, 127
      %v545 = vpop.permute.xlu0 %544
      %546 = vrot.lane.b32.xlu0 %v529, 127
      %v547 = vpop.permute.xlu0 %546
      %548 = vrot.lane.b32.xlu0 %v530, 127
      %v549 = vpop.permute.xlu0 %548
      %550 = vrot.lane.b32.xlu0 %v531, 127
      %v551 = vpop.permute.xlu0 %550
      %552 = vrot.lane.b32.xlu0 %v532, 127
      %v553 = vpop.permute.xlu0 %552
      %554 = vrot.lane.b32.xlu0 %v533, 127
      %v555 = vpop.permute.xlu0 %554
      %556 = vrot.lane.b32.xlu0 %v534, 127
      %v557 = vpop.permute.xlu0 %556
      %558 = vrot.lane.b32.xlu0 %v535, 127
      %v559 = vpop.permute.xlu0 %558
      %v568 = vcombine.low %v545, %v553
      %v569 = vcombine.high %v545, %v553
      %v571 = vunpack.c.l.s4 1983009808
      %v572 = vunpack.c.0.s8 %v571
      %v573 = vlaneseq
      %v574 = vshrl.u32 %v573, 7
      %v575 = vsub.s32 %v572, %v574
      %v576 = vrot.slane %v568, %v575
      %v578 = vunpack.c.l.s4 1983009808
      %v579 = vunpack.c.0.s8 %v578
      %v580 = vlaneseq
      %v581 = vshrl.u32 %v580, 7
      %v582 = vsub.s32 %v579, %v581
      %v583 = vrot.slane %v569, %v582
      %v584 = vcombine.low %v549, %v557
      %v585 = vcombine.high %v549, %v557
      %v587 = vunpack.c.l.s4 1983009808
      %v588 = vunpack.c.0.s8 %v587
      %v589 = vlaneseq
      %v590 = vshrl.u32 %v589, 7
      %v591 = vsub.s32 %v588, %v590
      %v592 = vrot.slane %v584, %v591
      %v594 = vunpack.c.l.s4 1983009808
      %v595 = vunpack.c.0.s8 %v594
      %v596 = vlaneseq
      %v597 = vshrl.u32 %v596, 7
      %v598 = vsub.s32 %v595, %v597
      %v599 = vrot.slane %v585, %v598
      %v600 = vcombine.low %v576, %v592
      %v601 = vcombine.high %v576, %v592
      %v603 = vunpack.c.l.s4 1934713408
      %v604 = vunpack.c.0.s8 %v603
      %v605 = vlaneseq
      %v606 = vshrl.u32 %v605, 7
      %v607 = vsub.s32 %v604, %v606
      %v608 = vrot.slane %v600, %v607
      %v610 = vunpack.c.l.s4 1934713408
      %v611 = vunpack.c.0.s8 %v610
      %v612 = vlaneseq
      %v613 = vshrl.u32 %v612, 7
      %v614 = vsub.s32 %v611, %v613
      %v615 = vrot.slane %v601, %v614
      %v616 = vcombine.low %v583, %v599
      %v617 = vcombine.high %v583, %v599
      %v619 = vunpack.c.l.s4 1934713408
      %v620 = vunpack.c.0.s8 %v619
      %v621 = vlaneseq
      %v622 = vshrl.u32 %v621, 7
      %v623 = vsub.s32 %v620, %v622
      %v624 = vrot.slane %v616, %v623
      %v626 = vunpack.c.l.s4 1934713408
      %v627 = vunpack.c.0.s8 %v626
      %v628 = vlaneseq
      %v629 = vshrl.u32 %v628, 7
      %v630 = vsub.s32 %v627, %v629
      %v631 = vrot.slane %v617, %v630
      %v632 = vcombine.high %v608, 0.0
      %v633 = vcombine.high %v615, 0.0
      %v634 = vcombine.high %v624, 0.0
      %v635 = vcombine.high %v631, 0.0
      %v636 = vcombine.low %v547, %v555
      %v637 = vcombine.high %v547, %v555
      %v639 = vunpack.c.l.s4 1983009808
      %v640 = vunpack.c.0.s8 %v639
      %v641 = vlaneseq
      %v642 = vshrl.u32 %v641, 7
      %v643 = vsub.s32 %v640, %v642
      %v644 = vrot.slane %v636, %v643
      %v646 = vunpack.c.l.s4 1983009808
      %v647 = vunpack.c.0.s8 %v646
      %v648 = vlaneseq
      %v649 = vshrl.u32 %v648, 7
      %v650 = vsub.s32 %v647, %v649
      %v651 = vrot.slane %v637, %v650
      %v652 = vcombine.low %v551, %v559
      %v653 = vcombine.high %v551, %v559
      %v655 = vunpack.c.l.s4 1983009808
      %v656 = vunpack.c.0.s8 %v655
      %v657 = vlaneseq
      %v658 = vshrl.u32 %v657, 7
      %v659 = vsub.s32 %v656, %v658
      %v660 = vrot.slane %v652, %v659
      %v662 = vunpack.c.l.s4 1983009808
      %v663 = vunpack.c.0.s8 %v662
      %v664 = vlaneseq
      %v665 = vshrl.u32 %v664, 7
      %v666 = vsub.s32 %v663, %v665
      %v667 = vrot.slane %v653, %v666
      %v668 = vcombine.low %v644, %v660
      %v669 = vcombine.high %v644, %v660
      %v671 = vunpack.c.l.s4 1934713408
      %v672 = vunpack.c.0.s8 %v671
      %v673 = vlaneseq
      %v674 = vshrl.u32 %v673, 7
      %v675 = vsub.s32 %v672, %v674
      %v676 = vrot.slane %v668, %v675
      %v678 = vunpack.c.l.s4 1934713408
      %v679 = vunpack.c.0.s8 %v678
      %v680 = vlaneseq
      %v681 = vshrl.u32 %v680, 7
      %v682 = vsub.s32 %v679, %v681
      %v683 = vrot.slane %v669, %v682
      %v684 = vcombine.low %v651, %v667
      %v685 = vcombine.high %v651, %v667
      %v687 = vunpack.c.l.s4 1934713408
      %v688 = vunpack.c.0.s8 %v687
      %v689 = vlaneseq
      %v690 = vshrl.u32 %v689, 7
      %v691 = vsub.s32 %v688, %v690
      %v692 = vrot.slane %v684, %v691
      %v694 = vunpack.c.l.s4 1934713408
      %v695 = vunpack.c.0.s8 %v694
      %v696 = vlaneseq
      %v697 = vshrl.u32 %v696, 7
      %v698 = vsub.s32 %v695, %v697
      %v699 = vrot.slane %v685, %v698
      %v700 = vcombine.high %v676, 0.0
      %v701 = vcombine.high %v683, 0.0
      %v702 = vcombine.high %v692, 0.0
      %v703 = vcombine.high %v699, 0.0
      %705 = vrot.lane.b32.xlu0 %v632, 16
      %v706 = vpop.permute.xlu0 %705
      %709 = vrot.lane.b32.xlu0 %v615, 32
      %v710 = vpop.permute.xlu0 %709
      %713 = vrot.lane.b32.xlu0 %v633, 48
      %v714 = vpop.permute.xlu0 %713
      %717 = vrot.lane.b32.xlu0 %v624, 64
      %v718 = vpop.permute.xlu0 %717
      %721 = vrot.lane.b32.xlu0 %v634, 80
      %v722 = vpop.permute.xlu0 %721
      %725 = vrot.lane.b32.xlu0 %v631, 96
      %v726 = vpop.permute.xlu0 %725
      %729 = vrot.lane.b32.xlu0 %v635, 112
      %v730 = vpop.permute.xlu0 %729
      %733 = vrot.lane.b32.xlu0 %v700, 16
      %v734 = vpop.permute.xlu0 %733
      %737 = vrot.lane.b32.xlu0 %v683, 32
      %v738 = vpop.permute.xlu0 %737
      %741 = vrot.lane.b32.xlu0 %v701, 48
      %v742 = vpop.permute.xlu0 %741
      %745 = vrot.lane.b32.xlu0 %v692, 64
      %v746 = vpop.permute.xlu0 %745
      %749 = vrot.lane.b32.xlu0 %v702, 80
      %v750 = vpop.permute.xlu0 %749
      %753 = vrot.lane.b32.xlu0 %v699, 96
      %v754 = vpop.permute.xlu0 %753
      %757 = vrot.lane.b32.xlu0 %v703, 112
      %v758 = vpop.permute.xlu0 %757
      %v760 = vsel %vm498, %v608, %v706
      %v761 = vsel %vm500, %v760, %v710
      %v762 = vsel %vm502, %v761, %v714
      %v763 = vsel %vm504, %v762, %v718
      %v764 = vsel %vm506, %v763, %v722
      %v765 = vsel %vm508, %v764, %v726
      %v766 = vsel %vm510, %v765, %v730
      %v767 = vsel %vm498, %v676, %v734
      %v768 = vsel %vm500, %v767, %v738
      %v769 = vsel %vm502, %v768, %v742
      %v770 = vsel %vm504, %v769, %v746
      %v771 = vsel %vm506, %v770, %v750
      %v772 = vsel %vm508, %v771, %v754
      %v773 = vsel %vm510, %v772, %v758
      %v774 = vpack.c.bf16 %v766, %v766
      %v775 = vpack.c.bf16 %v773, %v773
      %v778 = vunpack.c.l.b16 %v774
      %v779 = vunpack.c.l.b16 %v775
      %v780 = vpack.c.b16 %v779, %v778
      %v781 = vrot.slane %v780, 6
      %783 = vst [vmem:[#allocation3] sm:$0xcc] %v781
      %v784 = vld [vmem:[#allocation2] sm:$0xff]
      %v785 = vld [vmem:[#allocation2 + $0x8] sm:$0xff]
      %v786 = vld [vmem:[#allocation2 + $0x18] sm:$0xff]
      %v787 = vld [vmem:[#allocation2 + $0x20] sm:$0xff]
      %v788 = vld [vmem:[#allocation2 + $0x30] sm:$0xff]
      %v789 = vld [vmem:[#allocation2 + $0x38] sm:$0xff]
      %v790 = vld [vmem:[#allocation2 + $0x48] sm:$0xff]
      %v791 = vld [vmem:[#allocation2 + $0x50] sm:$0xff]
      %800 = vrot.lane.b32.xlu0 %v784, 126
      %v801 = vpop.permute.xlu0 %800
      %802 = vrot.lane.b32.xlu0 %v785, 126
      %v803 = vpop.permute.xlu0 %802
      %804 = vrot.lane.b32.xlu0 %v786, 126
      %v805 = vpop.permute.xlu0 %804
      %806 = vrot.lane.b32.xlu0 %v787, 126
      %v807 = vpop.permute.xlu0 %806
      %808 = vrot.lane.b32.xlu0 %v788, 126
      %v809 = vpop.permute.xlu0 %808
      %810 = vrot.lane.b32.xlu0 %v789, 126
      %v811 = vpop.permute.xlu0 %810
      %812 = vrot.lane.b32.xlu0 %v790, 126
      %v813 = vpop.permute.xlu0 %812
      %814 = vrot.lane.b32.xlu0 %v791, 126
      %v815 = vpop.permute.xlu0 %814
      %v824 = vcombine.low %v801, %v809
      %v825 = vcombine.high %v801, %v809
      %v827 = vunpack.c.l.s4 1983009808
      %v828 = vunpack.c.0.s8 %v827
      %v829 = vlaneseq
      %v830 = vshrl.u32 %v829, 7
      %v831 = vsub.s32 %v828, %v830
      %v832 = vrot.slane %v824, %v831
      %v834 = vunpack.c.l.s4 1983009808
      %v835 = vunpack.c.0.s8 %v834
      %v836 = vlaneseq
      %v837 = vshrl.u32 %v836, 7
      %v838 = vsub.s32 %v835, %v837
      %v839 = vrot.slane %v825, %v838
      %v840 = vcombine.low %v805, %v813
      %v841 = vcombine.high %v805, %v813
      %v843 = vunpack.c.l.s4 1983009808
      %v844 = vunpack.c.0.s8 %v843
      %v845 = vlaneseq
      %v846 = vshrl.u32 %v845, 7
      %v847 = vsub.s32 %v844, %v846
      %v848 = vrot.slane %v840, %v847
      %v850 = vunpack.c.l.s4 1983009808
      %v851 = vunpack.c.0.s8 %v850
      %v852 = vlaneseq
      %v853 = vshrl.u32 %v852, 7
      %v854 = vsub.s32 %v851, %v853
      %v855 = vrot.slane %v841, %v854
      %v856 = vcombine.low %v832, %v848
      %v857 = vcombine.high %v832, %v848
      %v859 = vunpack.c.l.s4 1934713408
      %v860 = vunpack.c.0.s8 %v859
      %v861 = vlaneseq
      %v862 = vshrl.u32 %v861, 7
      %v863 = vsub.s32 %v860, %v862
      %v864 = vrot.slane %v856, %v863
      %v866 = vunpack.c.l.s4 1934713408
      %v867 = vunpack.c.0.s8 %v866
      %v868 = vlaneseq
      %v869 = vshrl.u32 %v868, 7
      %v870 = vsub.s32 %v867, %v869
      %v871 = vrot.slane %v857, %v870
      %v872 = vcombine.low %v839, %v855
      %v873 = vcombine.high %v839, %v855
      %v875 = vunpack.c.l.s4 1934713408
      %v876 = vunpack.c.0.s8 %v875
      %v877 = vlaneseq
      %v878 = vshrl.u32 %v877, 7
      %v879 = vsub.s32 %v876, %v878
      %v880 = vrot.slane %v872, %v879
      %v882 = vunpack.c.l.s4 1934713408
      %v883 = vunpack.c.0.s8 %v882
      %v884 = vlaneseq
      %v885 = vshrl.u32 %v884, 7
      %v886 = vsub.s32 %v883, %v885
      %v887 = vrot.slane %v873, %v886
      %v888 = vcombine.high %v864, 0.0
      %v889 = vcombine.high %v871, 0.0
      %v890 = vcombine.high %v880, 0.0
      %v891 = vcombine.high %v887, 0.0
      %v892 = vcombine.low %v803, %v811
      %v893 = vcombine.high %v803, %v811
      %v895 = vunpack.c.l.s4 1983009808
      %v896 = vunpack.c.0.s8 %v895
      %v897 = vlaneseq
      %v898 = vshrl.u32 %v897, 7
      %v899 = vsub.s32 %v896, %v898
      %v900 = vrot.slane %v892, %v899
      %v902 = vunpack.c.l.s4 1983009808
      %v903 = vunpack.c.0.s8 %v902
      %v904 = vlaneseq
      %v905 = vshrl.u32 %v904, 7
      %v906 = vsub.s32 %v903, %v905
      %v907 = vrot.slane %v893, %v906
      %v908 = vcombine.low %v807, %v815
      %v909 = vcombine.high %v807, %v815
      %v911 = vunpack.c.l.s4 1983009808
      %v912 = vunpack.c.0.s8 %v911
      %v913 = vlaneseq
      %v914 = vshrl.u32 %v913, 7
      %v915 = vsub.s32 %v912, %v914
      %v916 = vrot.slane %v908, %v915
      %v918 = vunpack.c.l.s4 1983009808
      %v919 = vunpack.c.0.s8 %v918
      %v920 = vlaneseq
      %v921 = vshrl.u32 %v920, 7
      %v922 = vsub.s32 %v919, %v921
      %v923 = vrot.slane %v909, %v922
      %v924 = vcombine.low %v900, %v916
      %v925 = vcombine.high %v900, %v916
      %v927 = vunpack.c.l.s4 1934713408
      %v928 = vunpack.c.0.s8 %v927
      %v929 = vlaneseq
      %v930 = vshrl.u32 %v929, 7
      %v931 = vsub.s32 %v928, %v930
      %v932 = vrot.slane %v924, %v931
      %v934 = vunpack.c.l.s4 1934713408
      %v935 = vunpack.c.0.s8 %v934
      %v936 = vlaneseq
      %v937 = vshrl.u32 %v936, 7
      %v938 = vsub.s32 %v935, %v937
      %v939 = vrot.slane %v925, %v938
      %v940 = vcombine.low %v907, %v923
      %v941 = vcombine.high %v907, %v923
      %v943 = vunpack.c.l.s4 1934713408
      %v944 = vunpack.c.0.s8 %v943
      %v945 = vlaneseq
      %v946 = vshrl.u32 %v945, 7
      %v947 = vsub.s32 %v944, %v946
      %v948 = vrot.slane %v940, %v947
      %v950 = vunpack.c.l.s4 1934713408
      %v951 = vunpack.c.0.s8 %v950
      %v952 = vlaneseq
      %v953 = vshrl.u32 %v952, 7
      %v954 = vsub.s32 %v951, %v953
      %v955 = vrot.slane %v941, %v954
      %v956 = vcombine.high %v932, 0.0
      %v957 = vcombine.high %v939, 0.0
      %v958 = vcombine.high %v948, 0.0
      %v959 = vcombine.high %v955, 0.0
      %961 = vrot.lane.b32.xlu0 %v888, 16
      %v962 = vpop.permute.xlu0 %961
      %965 = vrot.lane.b32.xlu0 %v871, 32
      %v966 = vpop.permute.xlu0 %965
      %969 = vrot.lane.b32.xlu0 %v889, 48
      %v970 = vpop.permute.xlu0 %969
      %973 = vrot.lane.b32.xlu0 %v880, 64
      %v974 = vpop.permute.xlu0 %973
      %977 = vrot.lane.b32.xlu0 %v890, 80
      %v978 = vpop.permute.xlu0 %977
      %981 = vrot.lane.b32.xlu0 %v887, 96
      %v982 = vpop.permute.xlu0 %981
      %985 = vrot.lane.b32.xlu0 %v891, 112
      %v986 = vpop.permute.xlu0 %985
      %989 = vrot.lane.b32.xlu0 %v956, 16
      %v990 = vpop.permute.xlu0 %989
      %993 = vrot.lane.b32.xlu0 %v939, 32
      %v994 = vpop.permute.xlu0 %993
      %997 = vrot.lane.b32.xlu0 %v957, 48
      %v998 = vpop.permute.xlu0 %997
      %1001 = vrot.lane.b32.xlu0 %v948, 64
      %v1002 = vpop.permute.xlu0 %1001
      %1005 = vrot.lane.b32.xlu0 %v958, 80
      %v1006 = vpop.permute.xlu0 %1005
      %1009 = vrot.lane.b32.xlu0 %v955, 96
      %v1010 = vpop.permute.xlu0 %1009
      %1013 = vrot.lane.b32.xlu0 %v959, 112
      %v1014 = vpop.permute.xlu0 %1013
      %v1016 = vsel %vm498, %v864, %v962
      %v1017 = vsel %vm500, %v1016, %v966
      %v1018 = vsel %vm502, %v1017, %v970
      %v1019 = vsel %vm504, %v1018, %v974
      %v1020 = vsel %vm506, %v1019, %v978
      %v1021 = vsel %vm508, %v1020, %v982
      %v1022 = vsel %vm510, %v1021, %v986
      %v1023 = vsel %vm498, %v932, %v990
      %v1024 = vsel %vm500, %v1023, %v994
      %v1025 = vsel %vm502, %v1024, %v998
      %v1026 = vsel %vm504, %v1025, %v1002
      %v1027 = vsel %vm506, %v1026, %v1006
      %v1028 = vsel %vm508, %v1027, %v1010
      %v1029 = vsel %vm510, %v1028, %v1014
      %v1030 = vpack.c.bf16 %v1022, %v1022
      %v1031 = vpack.c.bf16 %v1029, %v1029
      %v1034 = vunpack.c.l.b16 %v1030
      %v1035 = vunpack.c.l.b16 %v1031
      %v1036 = vpack.c.b16 %v1035, %v1034
      %1038 = vst [vmem:[#allocation3 + $0x8] sm:$0x33] %v1036
      %v1039 = vld [vmem:[#allocation2] sm:$0xff]
      %v1040 = vld [vmem:[#allocation2 + $0x8] sm:$0xff]
      %v1041 = vld [vmem:[#allocation2 + $0x18] sm:$0xff]
      %v1042 = vld [vmem:[#allocation2 + $0x20] sm:$0xff]
      %v1043 = vld [vmem:[#allocation2 + $0x30] sm:$0xff]
      %v1044 = vld [vmem:[#allocation2 + $0x38] sm:$0xff]
      %v1045 = vld [vmem:[#allocation2 + $0x48] sm:$0xff]
      %v1046 = vld [vmem:[#allocation2 + $0x50] sm:$0xff]
      %1055 = vrot.lane.b32.xlu0 %v1039, 125
      %v1056 = vpop.permute.xlu0 %1055
      %1057 = vrot.lane.b32.xlu0 %v1040, 125
      %v1058 = vpop.permute.xlu0 %1057
      %1059 = vrot.lane.b32.xlu0 %v1041, 125
      %v1060 = vpop.permute.xlu0 %1059
      %1061 = vrot.lane.b32.xlu0 %v1042, 125
      %v1062 = vpop.permute.xlu0 %1061
      %1063 = vrot.lane.b32.xlu0 %v1043, 125
      %v1064 = vpop.permute.xlu0 %1063
      %1065 = vrot.lane.b32.xlu0 %v1044, 125
      %v1066 = vpop.permute.xlu0 %1065
      %1067 = vrot.lane.b32.xlu0 %v1045, 125
      %v1068 = vpop.permute.xlu0 %1067
      %1069 = vrot.lane.b32.xlu0 %v1046, 125
      %v1070 = vpop.permute.xlu0 %1069
      %v1079 = vcombine.low %v1056, %v1064
      %v1080 = vcombine.high %v1056, %v1064
      %v1082 = vunpack.c.l.s4 1983009808
      %v1083 = vunpack.c.0.s8 %v1082
      %v1084 = vlaneseq
      %v1085 = vshrl.u32 %v1084, 7
      %v1086 = vsub.s32 %v1083, %v1085
      %v1087 = vrot.slane %v1079, %v1086
      %v1089 = vunpack.c.l.s4 1983009808
      %v1090 = vunpack.c.0.s8 %v1089
      %v1091 = vlaneseq
      %v1092 = vshrl.u32 %v1091, 7
      %v1093 = vsub.s32 %v1090, %v1092
      %v1094 = vrot.slane %v1080, %v1093
      %v1095 = vcombine.low %v1060, %v1068
      %v1096 = vcombine.high %v1060, %v1068
      %v1098 = vunpack.c.l.s4 1983009808
      %v1099 = vunpack.c.0.s8 %v1098
      %v1100 = vlaneseq
      %v1101 = vshrl.u32 %v1100, 7
      %v1102 = vsub.s32 %v1099, %v1101
      %v1103 = vrot.slane %v1095, %v1102
      %v1105 = vunpack.c.l.s4 1983009808
      %v1106 = vunpack.c.0.s8 %v1105
      %v1107 = vlaneseq
      %v1108 = vshrl.u32 %v1107, 7
      %v1109 = vsub.s32 %v1106, %v1108
      %v1110 = vrot.slane %v1096, %v1109
      %v1111 = vcombine.low %v1087, %v1103
      %v1112 = vcombine.high %v1087, %v1103
      %v1114 = vunpack.c.l.s4 1934713408
      %v1115 = vunpack.c.0.s8 %v1114
      %v1116 = vlaneseq
      %v1117 = vshrl.u32 %v1116, 7
      %v1118 = vsub.s32 %v1115, %v1117
      %v1119 = vrot.slane %v1111, %v1118
      %v1121 = vunpack.c.l.s4 1934713408
      %v1122 = vunpack.c.0.s8 %v1121
      %v1123 = vlaneseq
      %v1124 = vshrl.u32 %v1123, 7
      %v1125 = vsub.s32 %v1122, %v1124
      %v1126 = vrot.slane %v1112, %v1125
      %v1127 = vcombine.low %v1094, %v1110
      %v1128 = vcombine.high %v1094, %v1110
      %v1130 = vunpack.c.l.s4 1934713408
      %v1131 = vunpack.c.0.s8 %v1130
      %v1132 = vlaneseq
      %v1133 = vshrl.u32 %v1132, 7
      %v1134 = vsub.s32 %v1131, %v1133
      %v1135 = vrot.slane %v1127, %v1134
      %v1137 = vunpack.c.l.s4 1934713408
      %v1138 = vunpack.c.0.s8 %v1137
      %v1139 = vlaneseq
      %v1140 = vshrl.u32 %v1139, 7
      %v1141 = vsub.s32 %v1138, %v1140
      %v1142 = vrot.slane %v1128, %v1141
      %v1143 = vcombine.high %v1119, 0.0
      %v1144 = vcombine.high %v1126, 0.0
      %v1145 = vcombine.high %v1135, 0.0
      %v1146 = vcombine.high %v1142, 0.0
      %v1147 = vcombine.low %v1058, %v1066
      %v1148 = vcombine.high %v1058, %v1066
      %v1150 = vunpack.c.l.s4 1983009808
      %v1151 = vunpack.c.0.s8 %v1150
      %v1152 = vlaneseq
      %v1153 = vshrl.u32 %v1152, 7
      %v1154 = vsub.s32 %v1151, %v1153
      %v1155 = vrot.slane %v1147, %v1154
      %v1157 = vunpack.c.l.s4 1983009808
      %v1158 = vunpack.c.0.s8 %v1157
      %v1159 = vlaneseq
      %v1160 = vshrl.u32 %v1159, 7
      %v1161 = vsub.s32 %v1158, %v1160
      %v1162 = vrot.slane %v1148, %v1161
      %v1163 = vcombine.low %v1062, %v1070
      %v1164 = vcombine.high %v1062, %v1070
      %v1166 = vunpack.c.l.s4 1983009808
      %v1167 = vunpack.c.0.s8 %v1166
      %v1168 = vlaneseq
      %v1169 = vshrl.u32 %v1168, 7
      %v1170 = vsub.s32 %v1167, %v1169
      %v1171 = vrot.slane %v1163, %v1170
      %v1173 = vunpack.c.l.s4 1983009808
      %v1174 = vunpack.c.0.s8 %v1173
      %v1175 = vlaneseq
      %v1176 = vshrl.u32 %v1175, 7
      %v1177 = vsub.s32 %v1174, %v1176
      %v1178 = vrot.slane %v1164, %v1177
      %v1179 = vcombine.low %v1155, %v1171
      %v1180 = vcombine.high %v1155, %v1171
      %v1182 = vunpack.c.l.s4 1934713408
      %v1183 = vunpack.c.0.s8 %v1182
      %v1184 = vlaneseq
      %v1185 = vshrl.u32 %v1184, 7
      %v1186 = vsub.s32 %v1183, %v1185
      %v1187 = vrot.slane %v1179, %v1186
      %v1189 = vunpack.c.l.s4 1934713408
      %v1190 = vunpack.c.0.s8 %v1189
      %v1191 = vlaneseq
      %v1192 = vshrl.u32 %v1191, 7
      %v1193 = vsub.s32 %v1190, %v1192
      %v1194 = vrot.slane %v1180, %v1193
      %v1195 = vcombine.low %v1162, %v1178
      %v1196 = vcombine.high %v1162, %v1178
      %v1198 = vunpack.c.l.s4 1934713408
      %v1199 = vunpack.c.0.s8 %v1198
      %v1200 = vlaneseq
      %v1201 = vshrl.u32 %v1200, 7
      %v1202 = vsub.s32 %v1199, %v1201
      %v1203 = vrot.slane %v1195, %v1202
      %v1205 = vunpack.c.l.s4 1934713408
      %v1206 = vunpack.c.0.s8 %v1205
      %v1207 = vlaneseq
      %v1208 = vshrl.u32 %v1207, 7
      %v1209 = vsub.s32 %v1206, %v1208
      %v1210 = vrot.slane %v1196, %v1209
      %v1211 = vcombine.high %v1187, 0.0
      %v1212 = vcombine.high %v1194, 0.0
      %v1213 = vcombine.high %v1203, 0.0
      %v1214 = vcombine.high %v1210, 0.0
      %1216 = vrot.lane.b32.xlu0 %v1143, 16
      %v1217 = vpop.permute.xlu0 %1216
      %1220 = vrot.lane.b32.xlu0 %v1126, 32
      %v1221 = vpop.permute.xlu0 %1220
      %1224 = vrot.lane.b32.xlu0 %v1144, 48
      %v1225 = vpop.permute.xlu0 %1224
      %1228 = vrot.lane.b32.xlu0 %v1135, 64
      %v1229 = vpop.permute.xlu0 %1228
      %1232 = vrot.lane.b32.xlu0 %v1145, 80
      %v1233 = vpop.permute.xlu0 %1232
      %1236 = vrot.lane.b32.xlu0 %v1142, 96
      %v1237 = vpop.permute.xlu0 %1236
      %1240 = vrot.lane.b32.xlu0 %v1146, 112
      %v1241 = vpop.permute.xlu0 %1240
      %1244 = vrot.lane.b32.xlu0 %v1211, 16
      %v1245 = vpop.permute.xlu0 %1244
      %1248 = vrot.lane.b32.xlu0 %v1194, 32
      %v1249 = vpop.permute.xlu0 %1248
      %1252 = vrot.lane.b32.xlu0 %v1212, 48
      %v1253 = vpop.permute.xlu0 %1252
      %1256 = vrot.lane.b32.xlu0 %v1203, 64
      %v1257 = vpop.permute.xlu0 %1256
      %1260 = vrot.lane.b32.xlu0 %v1213, 80
      %v1261 = vpop.permute.xlu0 %1260
      %1264 = vrot.lane.b32.xlu0 %v1210, 96
      %v1265 = vpop.permute.xlu0 %1264
      %1268 = vrot.lane.b32.xlu0 %v1214, 112
      %v1269 = vpop.permute.xlu0 %1268
      %v1271 = vsel %vm498, %v1119, %v1217
      %v1272 = vsel %vm500, %v1271, %v1221
      %v1273 = vsel %vm502, %v1272, %v1225
      %v1274 = vsel %vm504, %v1273, %v1229
      %v1275 = vsel %vm506, %v1274, %v1233
      %v1276 = vsel %vm508, %v1275, %v1237
      %v1277 = vsel %vm510, %v1276, %v1241
      %v1278 = vsel %vm498, %v1187, %v1245
      %v1279 = vsel %vm500, %v1278, %v1249
      %v1280 = vsel %vm502, %v1279, %v1253
      %v1281 = vsel %vm504, %v1280, %v1257
      %v1282 = vsel %vm506, %v1281, %v1261
      %v1283 = vsel %vm508, %v1282, %v1265
      %v1284 = vsel %vm510, %v1283, %v1269
      %v1285 = vpack.c.bf16 %v1277, %v1277
      %v1286 = vpack.c.bf16 %v1284, %v1284
      %v1289 = vunpack.c.l.b16 %v1285
      %v1290 = vunpack.c.l.b16 %v1286
      %v1291 = vpack.c.b16 %v1290, %v1289
      %v1292 = vrot.slane %v1291, 6
      %1294 = vst [vmem:[#allocation3 + $0x8] sm:$0xcc] %v1292
      %v1295 = vld [vmem:[#allocation2] sm:$0xff]
      %v1296 = vld [vmem:[#allocation2 + $0x8] sm:$0xff]
      %v1297 = vld [vmem:[#allocation2 + $0x18] sm:$0xff]
      %v1298 = vld [vmem:[#allocation2 + $0x20] sm:$0xff]
      %v1299 = vld [vmem:[#allocation2 + $0x30] sm:$0xff]
      %v1300 = vld [vmem:[#allocation2 + $0x38] sm:$0xff]
      %v1301 = vld [vmem:[#allocation2 + $0x48] sm:$0xff]
      %v1302 = vld [vmem:[#allocation2 + $0x50] sm:$0xff]
      %1311 = vrot.lane.b32.xlu0 %v1295, 124
      %v1312 = vpop.permute.xlu0 %1311
      %1313 = vrot.lane.b32.xlu0 %v1296, 124
      %v1314 = vpop.permute.xlu0 %1313
      %1315 = vrot.lane.b32.xlu0 %v1297, 124
      %v1316 = vpop.permute.xlu0 %1315
      %1317 = vrot.lane.b32.xlu0 %v1298, 124
      %v1318 = vpop.permute.xlu0 %1317
      %1319 = vrot.lane.b32.xlu0 %v1299, 124
      %v1320 = vpop.permute.xlu0 %1319
      %1321 = vrot.lane.b32.xlu0 %v1300, 124
      %v1322 = vpop.permute.xlu0 %1321
      %1323 = vrot.lane.b32.xlu0 %v1301, 124
      %v1324 = vpop.permute.xlu0 %1323
      %1325 = vrot.lane.b32.xlu0 %v1302, 124
      %v1326 = vpop.permute.xlu0 %1325
      %v1335 = vcombine.low %v1312, %v1320
      %v1336 = vcombine.high %v1312, %v1320
      %v1338 = vunpack.c.l.s4 1983009808
      %v1339 = vunpack.c.0.s8 %v1338
      %v1340 = vlaneseq
      %v1341 = vshrl.u32 %v1340, 7
      %v1342 = vsub.s32 %v1339, %v1341
      %v1343 = vrot.slane %v1335, %v1342
      %v1345 = vunpack.c.l.s4 1983009808
      %v1346 = vunpack.c.0.s8 %v1345
      %v1347 = vlaneseq
      %v1348 = vshrl.u32 %v1347, 7
      %v1349 = vsub.s32 %v1346, %v1348
      %v1350 = vrot.slane %v1336, %v1349
      %v1351 = vcombine.low %v1316, %v1324
      %v1352 = vcombine.high %v1316, %v1324
      %v1354 = vunpack.c.l.s4 1983009808
      %v1355 = vunpack.c.0.s8 %v1354
      %v1356 = vlaneseq
      %v1357 = vshrl.u32 %v1356, 7
      %v1358 = vsub.s32 %v1355, %v1357
      %v1359 = vrot.slane %v1351, %v1358
      %v1361 = vunpack.c.l.s4 1983009808
      %v1362 = vunpack.c.0.s8 %v1361
      %v1363 = vlaneseq
      %v1364 = vshrl.u32 %v1363, 7
      %v1365 = vsub.s32 %v1362, %v1364
      %v1366 = vrot.slane %v1352, %v1365
      %v1367 = vcombine.low %v1343, %v1359
      %v1368 = vcombine.high %v1343, %v1359
      %v1370 = vunpack.c.l.s4 1934713408
      %v1371 = vunpack.c.0.s8 %v1370
      %v1372 = vlaneseq
      %v1373 = vshrl.u32 %v1372, 7
      %v1374 = vsub.s32 %v1371, %v1373
      %v1375 = vrot.slane %v1367, %v1374
      %v1377 = vunpack.c.l.s4 1934713408
      %v1378 = vunpack.c.0.s8 %v1377
      %v1379 = vlaneseq
      %v1380 = vshrl.u32 %v1379, 7
      %v1381 = vsub.s32 %v1378, %v1380
      %v1382 = vrot.slane %v1368, %v1381
      %v1383 = vcombine.low %v1350, %v1366
      %v1384 = vcombine.high %v1350, %v1366
      %v1386 = vunpack.c.l.s4 1934713408
      %v1387 = vunpack.c.0.s8 %v1386
      %v1388 = vlaneseq
      %v1389 = vshrl.u32 %v1388, 7
      %v1390 = vsub.s32 %v1387, %v1389
      %v1391 = vrot.slane %v1383, %v1390
      %v1393 = vunpack.c.l.s4 1934713408
      %v1394 = vunpack.c.0.s8 %v1393
      %v1395 = vlaneseq
      %v1396 = vshrl.u32 %v1395, 7
      %v1397 = vsub.s32 %v1394, %v1396
      %v1398 = vrot.slane %v1384, %v1397
      %v1399 = vcombine.high %v1375, 0.0
      %v1400 = vcombine.high %v1382, 0.0
      %v1401 = vcombine.high %v1391, 0.0
      %v1402 = vcombine.high %v1398, 0.0
      %v1403 = vcombine.low %v1314, %v1322
      %v1404 = vcombine.high %v1314, %v1322
      %v1406 = vunpack.c.l.s4 1983009808
      %v1407 = vunpack.c.0.s8 %v1406
      %v1408 = vlaneseq
      %v1409 = vshrl.u32 %v1408, 7
      %v1410 = vsub.s32 %v1407, %v1409
      %v1411 = vrot.slane %v1403, %v1410
      %v1413 = vunpack.c.l.s4 1983009808
      %v1414 = vunpack.c.0.s8 %v1413
      %v1415 = vlaneseq
      %v1416 = vshrl.u32 %v1415, 7
      %v1417 = vsub.s32 %v1414, %v1416
      %v1418 = vrot.slane %v1404, %v1417
      %v1419 = vcombine.low %v1318, %v1326
      %v1420 = vcombine.high %v1318, %v1326
      %v1422 = vunpack.c.l.s4 1983009808
      %v1423 = vunpack.c.0.s8 %v1422
      %v1424 = vlaneseq
      %v1425 = vshrl.u32 %v1424, 7
      %v1426 = vsub.s32 %v1423, %v1425
      %v1427 = vrot.slane %v1419, %v1426
      %v1429 = vunpack.c.l.s4 1983009808
      %v1430 = vunpack.c.0.s8 %v1429
      %v1431 = vlaneseq
      %v1432 = vshrl.u32 %v1431, 7
      %v1433 = vsub.s32 %v1430, %v1432
      %v1434 = vrot.slane %v1420, %v1433
      %v1435 = vcombine.low %v1411, %v1427
      %v1436 = vcombine.high %v1411, %v1427
      %v1438 = vunpack.c.l.s4 1934713408
      %v1439 = vunpack.c.0.s8 %v1438
      %v1440 = vlaneseq
      %v1441 = vshrl.u32 %v1440, 7
      %v1442 = vsub.s32 %v1439, %v1441
      %v1443 = vrot.slane %v1435, %v1442
      %v1445 = vunpack.c.l.s4 1934713408
      %v1446 = vunpack.c.0.s8 %v1445
      %v1447 = vlaneseq
      %v1448 = vshrl.u32 %v1447, 7
      %v1449 = vsub.s32 %v1446, %v1448
      %v1450 = vrot.slane %v1436, %v1449
      %v1451 = vcombine.low %v1418, %v1434
      %v1452 = vcombine.high %v1418, %v1434
      %v1454 = vunpack.c.l.s4 1934713408
      %v1455 = vunpack.c.0.s8 %v1454
      %v1456 = vlaneseq
      %v1457 = vshrl.u32 %v1456, 7
      %v1458 = vsub.s32 %v1455, %v1457
      %v1459 = vrot.slane %v1451, %v1458
      %v1461 = vunpack.c.l.s4 1934713408
      %v1462 = vunpack.c.0.s8 %v1461
      %v1463 = vlaneseq
      %v1464 = vshrl.u32 %v1463, 7
      %v1465 = vsub.s32 %v1462, %v1464
      %v1466 = vrot.slane %v1452, %v1465
      %v1467 = vcombine.high %v1443, 0.0
      %v1468 = vcombine.high %v1450, 0.0
      %v1469 = vcombine.high %v1459, 0.0
      %v1470 = vcombine.high %v1466, 0.0
      %1472 = vrot.lane.b32.xlu0 %v1399, 16
      %v1473 = vpop.permute.xlu0 %1472
      %1476 = vrot.lane.b32.xlu0 %v1382, 32
      %v1477 = vpop.permute.xlu0 %1476
      %1480 = vrot.lane.b32.xlu0 %v1400, 48
      %v1481 = vpop.permute.xlu0 %1480
      %1484 = vrot.lane.b32.xlu0 %v1391, 64
      %v1485 = vpop.permute.xlu0 %1484
      %1488 = vrot.lane.b32.xlu0 %v1401, 80
      %v1489 = vpop.permute.xlu0 %1488
      %1492 = vrot.lane.b32.xlu0 %v1398, 96
      %v1493 = vpop.permute.xlu0 %1492
      %1496 = vrot.lane.b32.xlu0 %v1402, 112
      %v1497 = vpop.permute.xlu0 %1496
      %1500 = vrot.lane.b32.xlu0 %v1467, 16
      %v1501 = vpop.permute.xlu0 %1500
      %1504 = vrot.lane.b32.xlu0 %v1450, 32
      %v1505 = vpop.permute.xlu0 %1504
      %1508 = vrot.lane.b32.xlu0 %v1468, 48
      %v1509 = vpop.permute.xlu0 %1508
      %1512 = vrot.lane.b32.xlu0 %v1459, 64
      %v1513 = vpop.permute.xlu0 %1512
      %1516 = vrot.lane.b32.xlu0 %v1469, 80
      %v1517 = vpop.permute.xlu0 %1516
      %1520 = vrot.lane.b32.xlu0 %v1466, 96
      %v1521 = vpop.permute.xlu0 %1520
      %1524 = vrot.lane.b32.xlu0 %v1470, 112
      %v1525 = vpop.permute.xlu0 %1524
      %v1527 = vsel %vm498, %v1375, %v1473
      %v1528 = vsel %vm500, %v1527, %v1477
      %v1529 = vsel %vm502, %v1528, %v1481
      %v1530 = vsel %vm504, %v1529, %v1485
      %v1531 = vsel %vm506, %v1530, %v1489
      %v1532 = vsel %vm508, %v1531, %v1493
      %v1533 = vsel %vm510, %v1532, %v1497
      %v1534 = vsel %vm498, %v1443, %v1501
      %v1535 = vsel %vm500, %v1534, %v1505
      %v1536 = vsel %vm502, %v1535, %v1509
      %v1537 = vsel %vm504, %v1536, %v1513
      %v1538 = vsel %vm506, %v1537, %v1517
      %v1539 = vsel %vm508, %v1538, %v1521
      %v1540 = vsel %vm510, %v1539, %v1525
      %v1541 = vpack.c.bf16 %v1533, %v1533
      %v1542 = vpack.c.bf16 %v1540, %v1540
      %v1545 = vunpack.c.l.b16 %v1541
      %v1546 = vunpack.c.l.b16 %v1542
      %v1547 = vpack.c.b16 %v1546, %v1545
      %1549 = vst [vmem:[#allocation3 + $0x10] sm:$0x33] %v1547
      %v1550 = vld [vmem:[#allocation2 + $0x1] sm:$0xff]
      %v1551 = vld [vmem:[#allocation2 + $0x9] sm:$0xff]
      %v1552 = vld [vmem:[#allocation2 + $0x19] sm:$0xff]
      %v1553 = vld [vmem:[#allocation2 + $0x21] sm:$0xff]
      %v1554 = vld [vmem:[#allocation2 + $0x31] sm:$0xff]
      %v1555 = vld [vmem:[#allocation2 + $0x39] sm:$0xff]
      %v1556 = vld [vmem:[#allocation2 + $0x49] sm:$0xff]
      %v1557 = vld [vmem:[#allocation2 + $0x51] sm:$0xff]
      %v1558 = vcombine.low %v1550, %v1554
      %v1559 = vcombine.high %v1550, %v1554
      %v1561 = vunpack.c.l.s4 1983009808
      %v1562 = vunpack.c.0.s8 %v1561
      %v1563 = vlaneseq
      %v1564 = vshrl.u32 %v1563, 7
      %v1565 = vsub.s32 %v1562, %v1564
      %v1566 = vrot.slane %v1558, %v1565
      %v1568 = vunpack.c.l.s4 1983009808
      %v1569 = vunpack.c.0.s8 %v1568
      %v1570 = vlaneseq
      %v1571 = vshrl.u32 %v1570, 7
      %v1572 = vsub.s32 %v1569, %v1571
      %v1573 = vrot.slane %v1559, %v1572
      %v1574 = vcombine.low %v1552, %v1556
      %v1575 = vcombine.high %v1552, %v1556
      %v1577 = vunpack.c.l.s4 1983009808
      %v1578 = vunpack.c.0.s8 %v1577
      %v1579 = vlaneseq
      %v1580 = vshrl.u32 %v1579, 7
      %v1581 = vsub.s32 %v1578, %v1580
      %v1582 = vrot.slane %v1574, %v1581
      %v1584 = vunpack.c.l.s4 1983009808
      %v1585 = vunpack.c.0.s8 %v1584
      %v1586 = vlaneseq
      %v1587 = vshrl.u32 %v1586, 7
      %v1588 = vsub.s32 %v1585, %v1587
      %v1589 = vrot.slane %v1575, %v1588
      %v1590 = vcombine.low %v1566, %v1582
      %v1591 = vcombine.high %v1566, %v1582
      %v1593 = vunpack.c.l.s4 1934713408
      %v1594 = vunpack.c.0.s8 %v1593
      %v1595 = vlaneseq
      %v1596 = vshrl.u32 %v1595, 7
      %v1597 = vsub.s32 %v1594, %v1596
      %v1598 = vrot.slane %v1590, %v1597
      %v1600 = vunpack.c.l.s4 1934713408
      %v1601 = vunpack.c.0.s8 %v1600
      %v1602 = vlaneseq
      %v1603 = vshrl.u32 %v1602, 7
      %v1604 = vsub.s32 %v1601, %v1603
      %v1605 = vrot.slane %v1591, %v1604
      %v1606 = vcombine.low %v1573, %v1589
      %v1607 = vcombine.high %v1573, %v1589
      %v1609 = vunpack.c.l.s4 1934713408
      %v1610 = vunpack.c.0.s8 %v1609
      %v1611 = vlaneseq
      %v1612 = vshrl.u32 %v1611, 7
      %v1613 = vsub.s32 %v1610, %v1612
      %v1614 = vrot.slane %v1606, %v1613
      %v1616 = vunpack.c.l.s4 1934713408
      %v1617 = vunpack.c.0.s8 %v1616
      %v1618 = vlaneseq
      %v1619 = vshrl.u32 %v1618, 7
      %v1620 = vsub.s32 %v1617, %v1619
      %v1621 = vrot.slane %v1607, %v1620
      %v1622 = vcombine.high %v1598, 0.0
      %v1623 = vcombine.high %v1605, 0.0
      %v1624 = vcombine.high %v1614, 0.0
      %v1625 = vcombine.high %v1621, 0.0
      %v1626 = vcombine.low %v1551, %v1555
      %v1627 = vcombine.high %v1551, %v1555
      %v1629 = vunpack.c.l.s4 1983009808
      %v1630 = vunpack.c.0.s8 %v1629
      %v1631 = vlaneseq
      %v1632 = vshrl.u32 %v1631, 7
      %v1633 = vsub.s32 %v1630, %v1632
      %v1634 = vrot.slane %v1626, %v1633
      %v1636 = vunpack.c.l.s4 1983009808
      %v1637 = vunpack.c.0.s8 %v1636
      %v1638 = vlaneseq
      %v1639 = vshrl.u32 %v1638, 7
      %v1640 = vsub.s32 %v1637, %v1639
      %v1641 = vrot.slane %v1627, %v1640
      %v1642 = vcombine.low %v1553, %v1557
      %v1643 = vcombine.high %v1553, %v1557
      %v1645 = vunpack.c.l.s4 1983009808
      %v1646 = vunpack.c.0.s8 %v1645
      %v1647 = vlaneseq
      %v1648 = vshrl.u32 %v1647, 7
      %v1649 = vsub.s32 %v1646, %v1648
      %v1650 = vrot.slane %v1642, %v1649
      %v1652 = vunpack.c.l.s4 1983009808
      %v1653 = vunpack.c.0.s8 %v1652
      %v1654 = vlaneseq
      %v1655 = vshrl.u32 %v1654, 7
      %v1656 = vsub.s32 %v1653, %v1655
      %v1657 = vrot.slane %v1643, %v1656
      %v1658 = vcombine.low %v1634, %v1650
      %v1659 = vcombine.high %v1634, %v1650
      %v1661 = vunpack.c.l.s4 1934713408
      %v1662 = vunpack.c.0.s8 %v1661
      %v1663 = vlaneseq
      %v1664 = vshrl.u32 %v1663, 7
      %v1665 = vsub.s32 %v1662, %v1664
      %v1666 = vrot.slane %v1658, %v1665
      %v1668 = vunpack.c.l.s4 1934713408
      %v1669 = vunpack.c.0.s8 %v1668
      %v1670 = vlaneseq
      %v1671 = vshrl.u32 %v1670, 7
      %v1672 = vsub.s32 %v1669, %v1671
      %v1673 = vrot.slane %v1659, %v1672
      %v1674 = vcombine.low %v1641, %v1657
      %v1675 = vcombine.high %v1641, %v1657
      %v1677 = vunpack.c.l.s4 1934713408
      %v1678 = vunpack.c.0.s8 %v1677
      %v1679 = vlaneseq
      %v1680 = vshrl.u32 %v1679, 7
      %v1681 = vsub.s32 %v1678, %v1680
      %v1682 = vrot.slane %v1674, %v1681
      %v1684 = vunpack.c.l.s4 1934713408
      %v1685 = vunpack.c.0.s8 %v1684
      %v1686 = vlaneseq
      %v1687 = vshrl.u32 %v1686, 7
      %v1688 = vsub.s32 %v1685, %v1687
      %v1689 = vrot.slane %v1675, %v1688
      %v1690 = vcombine.high %v1666, 0.0
      %v1691 = vcombine.high %v1673, 0.0
      %v1692 = vcombine.high %v1682, 0.0
      %v1693 = vcombine.high %v1689, 0.0
      %1695 = vrot.lane.b32.xlu0 %v1622, 16
      %v1696 = vpop.permute.xlu0 %1695
      %1699 = vrot.lane.b32.xlu0 %v1605, 32
      %v1700 = vpop.permute.xlu0 %1699
      %1703 = vrot.lane.b32.xlu0 %v1623, 48
      %v1704 = vpop.permute.xlu0 %1703
      %1707 = vrot.lane.b32.xlu0 %v1614, 64
      %v1708 = vpop.permute.xlu0 %1707
      %1711 = vrot.lane.b32.xlu0 %v1624, 80
      %v1712 = vpop.permute.xlu0 %1711
      %1715 = vrot.lane.b32.xlu0 %v1621, 96
      %v1716 = vpop.permute.xlu0 %1715
      %1719 = vrot.lane.b32.xlu0 %v1625, 112
      %v1720 = vpop.permute.xlu0 %1719
      %1723 = vrot.lane.b32.xlu0 %v1690, 16
      %v1724 = vpop.permute.xlu0 %1723
      %1727 = vrot.lane.b32.xlu0 %v1673, 32
      %v1728 = vpop.permute.xlu0 %1727
      %1731 = vrot.lane.b32.xlu0 %v1691, 48
      %v1732 = vpop.permute.xlu0 %1731
      %1735 = vrot.lane.b32.xlu0 %v1682, 64
      %v1736 = vpop.permute.xlu0 %1735
      %1739 = vrot.lane.b32.xlu0 %v1692, 80
      %v1740 = vpop.permute.xlu0 %1739
      %1743 = vrot.lane.b32.xlu0 %v1689, 96
      %v1744 = vpop.permute.xlu0 %1743
      %1747 = vrot.lane.b32.xlu0 %v1693, 112
      %v1748 = vpop.permute.xlu0 %1747
      %v1750 = vsel %vm498, %v1598, %v1696
      %v1751 = vsel %vm500, %v1750, %v1700
      %v1752 = vsel %vm502, %v1751, %v1704
      %v1753 = vsel %vm504, %v1752, %v1708
      %v1754 = vsel %vm506, %v1753, %v1712
      %v1755 = vsel %vm508, %v1754, %v1716
      %v1756 = vsel %vm510, %v1755, %v1720
      %v1757 = vsel %vm498, %v1666, %v1724
      %v1758 = vsel %vm500, %v1757, %v1728
      %v1759 = vsel %vm502, %v1758, %v1732
      %v1760 = vsel %vm504, %v1759, %v1736
      %v1761 = vsel %vm506, %v1760, %v1740
      %v1762 = vsel %vm508, %v1761, %v1744
      %v1763 = vsel %vm510, %v1762, %v1748
      %v1764 = vpack.c.bf16 %v1756, %v1756
      %v1765 = vpack.c.bf16 %v1763, %v1763
      %v1768 = vunpack.c.l.b16 %v1764
      %v1769 = vunpack.c.l.b16 %v1765
      %v1770 = vpack.c.b16 %v1769, %v1768
      %v1771 = vrot.slane %v1770, 6
      %1773 = vst [vmem:[#allocation3 + $0x10] sm:$0xcc] %v1771
      %v1774 = vld [vmem:[#allocation2 + $0x1] sm:$0xff]
      %v1775 = vld [vmem:[#allocation2 + $0x9] sm:$0xff]
      %v1776 = vld [vmem:[#allocation2 + $0x19] sm:$0xff]
      %v1777 = vld [vmem:[#allocation2 + $0x21] sm:$0xff]
      %v1778 = vld [vmem:[#allocation2 + $0x31] sm:$0xff]
      %v1779 = vld [vmem:[#allocation2 + $0x39] sm:$0xff]
      %v1780 = vld [vmem:[#allocation2 + $0x49] sm:$0xff]
      %v1781 = vld [vmem:[#allocation2 + $0x51] sm:$0xff]
      %1790 = vrot.lane.b32.xlu0 %v1774, 127
      %v1791 = vpop.permute.xlu0 %1790
      %1792 = vrot.lane.b32.xlu0 %v1775, 127
      %v1793 = vpop.permute.xlu0 %1792
      %1794 = vrot.lane.b32.xlu0 %v1776, 127
      %v1795 = vpop.permute.xlu0 %1794
      %1796 = vrot.lane.b32.xlu0 %v1777, 127
      %v1797 = vpop.permute.xlu0 %1796
      %1798 = vrot.lane.b32.xlu0 %v1778, 127
      %v1799 = vpop.permute.xlu0 %1798
      %1800 = vrot.lane.b32.xlu0 %v1779, 127
      %v1801 = vpop.permute.xlu0 %1800
      %1802 = vrot.lane.b32.xlu0 %v1780, 127
      %v1803 = vpop.permute.xlu0 %1802
      %1804 = vrot.lane.b32.xlu0 %v1781, 127
      %v1805 = vpop.permute.xlu0 %1804
      %v1814 = vcombine.low %v1791, %v1799
      %v1815 = vcombine.high %v1791, %v1799
      %v1817 = vunpack.c.l.s4 1983009808
      %v1818 = vunpack.c.0.s8 %v1817
      %v1819 = vlaneseq
      %v1820 = vshrl.u32 %v1819, 7
      %v1821 = vsub.s32 %v1818, %v1820
      %v1822 = vrot.slane %v1814, %v1821
      %v1824 = vunpack.c.l.s4 1983009808
      %v1825 = vunpack.c.0.s8 %v1824
      %v1826 = vlaneseq
      %v1827 = vshrl.u32 %v1826, 7
      %v1828 = vsub.s32 %v1825, %v1827
      %v1829 = vrot.slane %v1815, %v1828
      %v1830 = vcombine.low %v1795, %v1803
      %v1831 = vcombine.high %v1795, %v1803
      %v1833 = vunpack.c.l.s4 1983009808
      %v1834 = vunpack.c.0.s8 %v1833
      %v1835 = vlaneseq
      %v1836 = vshrl.u32 %v1835, 7
      %v1837 = vsub.s32 %v1834, %v1836
      %v1838 = vrot.slane %v1830, %v1837
      %v1840 = vunpack.c.l.s4 1983009808
      %v1841 = vunpack.c.0.s8 %v1840
      %v1842 = vlaneseq
      %v1843 = vshrl.u32 %v1842, 7
      %v1844 = vsub.s32 %v1841, %v1843
      %v1845 = vrot.slane %v1831, %v1844
      %v1846 = vcombine.low %v1822, %v1838
      %v1847 = vcombine.high %v1822, %v1838
      %v1849 = vunpack.c.l.s4 1934713408
      %v1850 = vunpack.c.0.s8 %v1849
      %v1851 = vlaneseq
      %v1852 = vshrl.u32 %v1851, 7
      %v1853 = vsub.s32 %v1850, %v1852
      %v1854 = vrot.slane %v1846, %v1853
      %v1856 = vunpack.c.l.s4 1934713408
      %v1857 = vunpack.c.0.s8 %v1856
      %v1858 = vlaneseq
      %v1859 = vshrl.u32 %v1858, 7
      %v1860 = vsub.s32 %v1857, %v1859
      %v1861 = vrot.slane %v1847, %v1860
      %v1862 = vcombine.low %v1829, %v1845
      %v1863 = vcombine.high %v1829, %v1845
      %v1865 = vunpack.c.l.s4 1934713408
      %v1866 = vunpack.c.0.s8 %v1865
      %v1867 = vlaneseq
      %v1868 = vshrl.u32 %v1867, 7
      %v1869 = vsub.s32 %v1866, %v1868
      %v1870 = vrot.slane %v1862, %v1869
      %v1872 = vunpack.c.l.s4 1934713408
      %v1873 = vunpack.c.0.s8 %v1872
      %v1874 = vlaneseq
      %v1875 = vshrl.u32 %v1874, 7
      %v1876 = vsub.s32 %v1873, %v1875
      %v1877 = vrot.slane %v1863, %v1876
      %v1878 = vcombine.high %v1854, 0.0
      %v1879 = vcombine.high %v1861, 0.0
      %v1880 = vcombine.high %v1870, 0.0
      %v1881 = vcombine.high %v1877, 0.0
      %v1882 = vcombine.low %v1793, %v1801
      %v1883 = vcombine.high %v1793, %v1801
      %v1885 = vunpack.c.l.s4 1983009808
      %v1886 = vunpack.c.0.s8 %v1885
      %v1887 = vlaneseq
      %v1888 = vshrl.u32 %v1887, 7
      %v1889 = vsub.s32 %v1886, %v1888
      %v1890 = vrot.slane %v1882, %v1889
      %v1892 = vunpack.c.l.s4 1983009808
      %v1893 = vunpack.c.0.s8 %v1892
      %v1894 = vlaneseq
      %v1895 = vshrl.u32 %v1894, 7
      %v1896 = vsub.s32 %v1893, %v1895
      %v1897 = vrot.slane %v1883, %v1896
      %v1898 = vcombine.low %v1797, %v1805
      %v1899 = vcombine.high %v1797, %v1805
      %v1901 = vunpack.c.l.s4 1983009808
      %v1902 = vunpack.c.0.s8 %v1901
      %v1903 = vlaneseq
      %v1904 = vshrl.u32 %v1903, 7
      %v1905 = vsub.s32 %v1902, %v1904
      %v1906 = vrot.slane %v1898, %v1905
      %v1908 = vunpack.c.l.s4 1983009808
      %v1909 = vunpack.c.0.s8 %v1908
      %v1910 = vlaneseq
      %v1911 = vshrl.u32 %v1910, 7
      %v1912 = vsub.s32 %v1909, %v1911
      %v1913 = vrot.slane %v1899, %v1912
      %v1914 = vcombine.low %v1890, %v1906
      %v1915 = vcombine.high %v1890, %v1906
      %v1917 = vunpack.c.l.s4 1934713408
      %v1918 = vunpack.c.0.s8 %v1917
      %v1919 = vlaneseq
      %v1920 = vshrl.u32 %v1919, 7
      %v1921 = vsub.s32 %v1918, %v1920
      %v1922 = vrot.slane %v1914, %v1921
      %v1924 = vunpack.c.l.s4 1934713408
      %v1925 = vunpack.c.0.s8 %v1924
      %v1926 = vlaneseq
      %v1927 = vshrl.u32 %v1926, 7
      %v1928 = vsub.s32 %v1925, %v1927
      %v1929 = vrot.slane %v1915, %v1928
      %v1930 = vcombine.low %v1897, %v1913
      %v1931 = vcombine.high %v1897, %v1913
      %v1933 = vunpack.c.l.s4 1934713408
      %v1934 = vunpack.c.0.s8 %v1933
      %v1935 = vlaneseq
      %v1936 = vshrl.u32 %v1935, 7
      %v1937 = vsub.s32 %v1934, %v1936
      %v1938 = vrot.slane %v1930, %v1937
      %v1940 = vunpack.c.l.s4 1934713408
      %v1941 = vunpack.c.0.s8 %v1940
      %v1942 = vlaneseq
      %v1943 = vshrl.u32 %v1942, 7
      %v1944 = vsub.s32 %v1941, %v1943
      %v1945 = vrot.slane %v1931, %v1944
      %v1946 = vcombine.high %v1922, 0.0
      %v1947 = vcombine.high %v1929, 0.0
      %v1948 = vcombine.high %v1938, 0.0
      %v1949 = vcombine.high %v1945, 0.0
      %1951 = vrot.lane.b32.xlu0 %v1878, 16
      %v1952 = vpop.permute.xlu0 %1951
      %1955 = vrot.lane.b32.xlu0 %v1861, 32
      %v1956 = vpop.permute.xlu0 %1955
      %1959 = vrot.lane.b32.xlu0 %v1879, 48
      %v1960 = vpop.permute.xlu0 %1959
      %1963 = vrot.lane.b32.xlu0 %v1870, 64
      %v1964 = vpop.permute.xlu0 %1963
      %1967 = vrot.lane.b32.xlu0 %v1880, 80
      %v1968 = vpop.permute.xlu0 %1967
      %1971 = vrot.lane.b32.xlu0 %v1877, 96
      %v1972 = vpop.permute.xlu0 %1971
      %1975 = vrot.lane.b32.xlu0 %v1881, 112
      %v1976 = vpop.permute.xlu0 %1975
      %1979 = vrot.lane.b32.xlu0 %v1946, 16
      %v1980 = vpop.permute.xlu0 %1979
      %1983 = vrot.lane.b32.xlu0 %v1929, 32
      %v1984 = vpop.permute.xlu0 %1983
      %1987 = vrot.lane.b32.xlu0 %v1947, 48
      %v1988 = vpop.permute.xlu0 %1987
      %1991 = vrot.lane.b32.xlu0 %v1938, 64
      %v1992 = vpop.permute.xlu0 %1991
      %1995 = vrot.lane.b32.xlu0 %v1948, 80
      %v1996 = vpop.permute.xlu0 %1995
      %1999 = vrot.lane.b32.xlu0 %v1945, 96
      %v2000 = vpop.permute.xlu0 %1999
      %2003 = vrot.lane.b32.xlu0 %v1949, 112
      %v2004 = vpop.permute.xlu0 %2003
      %v2006 = vsel %vm498, %v1854, %v1952
      %v2007 = vsel %vm500, %v2006, %v1956
      %v2008 = vsel %vm502, %v2007, %v1960
      %v2009 = vsel %vm504, %v2008, %v1964
      %v2010 = vsel %vm506, %v2009, %v1968
      %v2011 = vsel %vm508, %v2010, %v1972
      %v2012 = vsel %vm510, %v2011, %v1976
      %v2013 = vsel %vm498, %v1922, %v1980
      %v2014 = vsel %vm500, %v2013, %v1984
      %v2015 = vsel %vm502, %v2014, %v1988
      %v2016 = vsel %vm504, %v2015, %v1992
      %v2017 = vsel %vm506, %v2016, %v1996
      %v2018 = vsel %vm508, %v2017, %v2000
      %v2019 = vsel %vm510, %v2018, %v2004
      %v2020 = vpack.c.bf16 %v2012, %v2012
      %v2021 = vpack.c.bf16 %v2019, %v2019
      %v2024 = vunpack.c.l.b16 %v2020
      %v2025 = vunpack.c.l.b16 %v2021
      %v2026 = vpack.c.b16 %v2025, %v2024
      %2028 = vst [vmem:[#allocation3 + $0x18] sm:$0x33] %v2026
      %v2029 = vld [vmem:[#allocation2 + $0x1] sm:$0xff]
      %v2030 = vld [vmem:[#allocation2 + $0x9] sm:$0xff]
      %v2031 = vld [vmem:[#allocation2 + $0x19] sm:$0xff]
      %v2032 = vld [vmem:[#allocation2 + $0x21] sm:$0xff]
      %v2033 = vld [vmem:[#allocation2 + $0x31] sm:$0xff]
      %v2034 = vld [vmem:[#allocation2 + $0x39] sm:$0xff]
      %v2035 = vld [vmem:[#allocation2 + $0x49] sm:$0xff]
      %v2036 = vld [vmem:[#allocation2 + $0x51] sm:$0xff]
      %2045 = vrot.lane.b32.xlu0 %v2029, 126
      %v2046 = vpop.permute.xlu0 %2045
      %2047 = vrot.lane.b32.xlu0 %v2030, 126
      %v2048 = vpop.permute.xlu0 %2047
      %2049 = vrot.lane.b32.xlu0 %v2031, 126
      %v2050 = vpop.permute.xlu0 %2049
      %2051 = vrot.lane.b32.xlu0 %v2032, 126
      %v2052 = vpop.permute.xlu0 %2051
      %2053 = vrot.lane.b32.xlu0 %v2033, 126
      %v2054 = vpop.permute.xlu0 %2053
      %2055 = vrot.lane.b32.xlu0 %v2034, 126
      %v2056 = vpop.permute.xlu0 %2055
      %2057 = vrot.lane.b32.xlu0 %v2035, 126
      %v2058 = vpop.permute.xlu0 %2057
      %2059 = vrot.lane.b32.xlu0 %v2036, 126
      %v2060 = vpop.permute.xlu0 %2059
      %v2069 = vcombine.low %v2046, %v2054
      %v2070 = vcombine.high %v2046, %v2054
      %v2072 = vunpack.c.l.s4 1983009808
      %v2073 = vunpack.c.0.s8 %v2072
      %v2074 = vlaneseq
      %v2075 = vshrl.u32 %v2074, 7
      %v2076 = vsub.s32 %v2073, %v2075
      %v2077 = vrot.slane %v2069, %v2076
      %v2079 = vunpack.c.l.s4 1983009808
      %v2080 = vunpack.c.0.s8 %v2079
      %v2081 = vlaneseq
      %v2082 = vshrl.u32 %v2081, 7
      %v2083 = vsub.s32 %v2080, %v2082
      %v2084 = vrot.slane %v2070, %v2083
      %v2085 = vcombine.low %v2050, %v2058
      %v2086 = vcombine.high %v2050, %v2058
      %v2088 = vunpack.c.l.s4 1983009808
      %v2089 = vunpack.c.0.s8 %v2088
      %v2090 = vlaneseq
      %v2091 = vshrl.u32 %v2090, 7
      %v2092 = vsub.s32 %v2089, %v2091
      %v2093 = vrot.slane %v2085, %v2092
      %v2095 = vunpack.c.l.s4 1983009808
      %v2096 = vunpack.c.0.s8 %v2095
      %v2097 = vlaneseq
      %v2098 = vshrl.u32 %v2097, 7
      %v2099 = vsub.s32 %v2096, %v2098
      %v2100 = vrot.slane %v2086, %v2099
      %v2101 = vcombine.low %v2077, %v2093
      %v2102 = vcombine.high %v2077, %v2093
      %v2104 = vunpack.c.l.s4 1934713408
      %v2105 = vunpack.c.0.s8 %v2104
      %v2106 = vlaneseq
      %v2107 = vshrl.u32 %v2106, 7
      %v2108 = vsub.s32 %v2105, %v2107
      %v2109 = vrot.slane %v2101, %v2108
      %v2111 = vunpack.c.l.s4 1934713408
      %v2112 = vunpack.c.0.s8 %v2111
      %v2113 = vlaneseq
      %v2114 = vshrl.u32 %v2113, 7
      %v2115 = vsub.s32 %v2112, %v2114
      %v2116 = vrot.slane %v2102, %v2115
      %v2117 = vcombine.low %v2084, %v2100
      %v2118 = vcombine.high %v2084, %v2100
      %v2120 = vunpack.c.l.s4 1934713408
      %v2121 = vunpack.c.0.s8 %v2120
      %v2122 = vlaneseq
      %v2123 = vshrl.u32 %v2122, 7
      %v2124 = vsub.s32 %v2121, %v2123
      %v2125 = vrot.slane %v2117, %v2124
      %v2127 = vunpack.c.l.s4 1934713408
      %v2128 = vunpack.c.0.s8 %v2127
      %v2129 = vlaneseq
      %v2130 = vshrl.u32 %v2129, 7
      %v2131 = vsub.s32 %v2128, %v2130
      %v2132 = vrot.slane %v2118, %v2131
      %v2133 = vcombine.high %v2109, 0.0
      %v2134 = vcombine.high %v2116, 0.0
      %v2135 = vcombine.high %v2125, 0.0
      %v2136 = vcombine.high %v2132, 0.0
      %v2137 = vcombine.low %v2048, %v2056
      %v2138 = vcombine.high %v2048, %v2056
      %v2140 = vunpack.c.l.s4 1983009808
      %v2141 = vunpack.c.0.s8 %v2140
      %v2142 = vlaneseq
      %v2143 = vshrl.u32 %v2142, 7
      %v2144 = vsub.s32 %v2141, %v2143
      %v2145 = vrot.slane %v2137, %v2144
      %v2147 = vunpack.c.l.s4 1983009808
      %v2148 = vunpack.c.0.s8 %v2147
      %v2149 = vlaneseq
      %v2150 = vshrl.u32 %v2149, 7
      %v2151 = vsub.s32 %v2148, %v2150
      %v2152 = vrot.slane %v2138, %v2151
      %v2153 = vcombine.low %v2052, %v2060
      %v2154 = vcombine.high %v2052, %v2060
      %v2156 = vunpack.c.l.s4 1983009808
      %v2157 = vunpack.c.0.s8 %v2156
      %v2158 = vlaneseq
      %v2159 = vshrl.u32 %v2158, 7
      %v2160 = vsub.s32 %v2157, %v2159
      %v2161 = vrot.slane %v2153, %v2160
      %v2163 = vunpack.c.l.s4 1983009808
      %v2164 = vunpack.c.0.s8 %v2163
      %v2165 = vlaneseq
      %v2166 = vshrl.u32 %v2165, 7
      %v2167 = vsub.s32 %v2164, %v2166
      %v2168 = vrot.slane %v2154, %v2167
      %v2169 = vcombine.low %v2145, %v2161
      %v2170 = vcombine.high %v2145, %v2161
      %v2172 = vunpack.c.l.s4 1934713408
      %v2173 = vunpack.c.0.s8 %v2172
      %v2174 = vlaneseq
      %v2175 = vshrl.u32 %v2174, 7
      %v2176 = vsub.s32 %v2173, %v2175
      %v2177 = vrot.slane %v2169, %v2176
      %v2179 = vunpack.c.l.s4 1934713408
      %v2180 = vunpack.c.0.s8 %v2179
      %v2181 = vlaneseq
      %v2182 = vshrl.u32 %v2181, 7
      %v2183 = vsub.s32 %v2180, %v2182
      %v2184 = vrot.slane %v2170, %v2183
      %v2185 = vcombine.low %v2152, %v2168
      %v2186 = vcombine.high %v2152, %v2168
      %v2188 = vunpack.c.l.s4 1934713408
      %v2189 = vunpack.c.0.s8 %v2188
      %v2190 = vlaneseq
      %v2191 = vshrl.u32 %v2190, 7
      %v2192 = vsub.s32 %v2189, %v2191
      %v2193 = vrot.slane %v2185, %v2192
      %v2195 = vunpack.c.l.s4 1934713408
      %v2196 = vunpack.c.0.s8 %v2195
      %v2197 = vlaneseq
      %v2198 = vshrl.u32 %v2197, 7
      %v2199 = vsub.s32 %v2196, %v2198
      %v2200 = vrot.slane %v2186, %v2199
      %v2201 = vcombine.high %v2177, 0.0
      %v2202 = vcombine.high %v2184, 0.0
      %v2203 = vcombine.high %v2193, 0.0
      %v2204 = vcombine.high %v2200, 0.0
      %2206 = vrot.lane.b32.xlu0 %v2133, 16
      %v2207 = vpop.permute.xlu0 %2206
      %2210 = vrot.lane.b32.xlu0 %v2116, 32
      %v2211 = vpop.permute.xlu0 %2210
      %2214 = vrot.lane.b32.xlu0 %v2134, 48
      %v2215 = vpop.permute.xlu0 %2214
      %2218 = vrot.lane.b32.xlu0 %v2125, 64
      %v2219 = vpop.permute.xlu0 %2218
      %2222 = vrot.lane.b32.xlu0 %v2135, 80
      %v2223 = vpop.permute.xlu0 %2222
      %2226 = vrot.lane.b32.xlu0 %v2132, 96
      %v2227 = vpop.permute.xlu0 %2226
      %2230 = vrot.lane.b32.xlu0 %v2136, 112
      %v2231 = vpop.permute.xlu0 %2230
      %2234 = vrot.lane.b32.xlu0 %v2201, 16
      %v2235 = vpop.permute.xlu0 %2234
      %2238 = vrot.lane.b32.xlu0 %v2184, 32
      %v2239 = vpop.permute.xlu0 %2238
      %2242 = vrot.lane.b32.xlu0 %v2202, 48
      %v2243 = vpop.permute.xlu0 %2242
      %2246 = vrot.lane.b32.xlu0 %v2193, 64
      %v2247 = vpop.permute.xlu0 %2246
      %2250 = vrot.lane.b32.xlu0 %v2203, 80
      %v2251 = vpop.permute.xlu0 %2250
      %2254 = vrot.lane.b32.xlu0 %v2200, 96
      %v2255 = vpop.permute.xlu0 %2254
      %2258 = vrot.lane.b32.xlu0 %v2204, 112
      %v2259 = vpop.permute.xlu0 %2258
      %v2261 = vsel %vm498, %v2109, %v2207
      %v2262 = vsel %vm500, %v2261, %v2211
      %v2263 = vsel %vm502, %v2262, %v2215
      %v2264 = vsel %vm504, %v2263, %v2219
      %v2265 = vsel %vm506, %v2264, %v2223
      %v2266 = vsel %vm508, %v2265, %v2227
      %v2267 = vsel %vm510, %v2266, %v2231
      %v2268 = vsel %vm498, %v2177, %v2235
      %v2269 = vsel %vm500, %v2268, %v2239
      %v2270 = vsel %vm502, %v2269, %v2243
      %v2271 = vsel %vm504, %v2270, %v2247
      %v2272 = vsel %vm506, %v2271, %v2251
      %v2273 = vsel %vm508, %v2272, %v2255
      %v2274 = vsel %vm510, %v2273, %v2259
      %v2275 = vpack.c.bf16 %v2267, %v2267
      %v2276 = vpack.c.bf16 %v2274, %v2274
      %v2279 = vunpack.c.l.b16 %v2275
      %v2280 = vunpack.c.l.b16 %v2276
      %v2281 = vpack.c.b16 %v2280, %v2279
      %v2282 = vrot.slane %v2281, 6
      %2284 = vst [vmem:[#allocation3 + $0x18] sm:$0xcc] %v2282
      %v2285 = vld [vmem:[#allocation2 + $0x1] sm:$0xff]
      %v2286 = vld [vmem:[#allocation2 + $0x9] sm:$0xff]
      %v2287 = vld [vmem:[#allocation2 + $0x19] sm:$0xff]
      %v2288 = vld [vmem:[#allocation2 + $0x21] sm:$0xff]
      %v2289 = vld [vmem:[#allocation2 + $0x31] sm:$0xff]
      %v2290 = vld [vmem:[#allocation2 + $0x39] sm:$0xff]
      %v2291 = vld [vmem:[#allocation2 + $0x49] sm:$0xff]
      %v2292 = vld [vmem:[#allocation2 + $0x51] sm:$0xff]
      %2301 = vrot.lane.b32.xlu0 %v2285, 125
      %v2302 = vpop.permute.xlu0 %2301
      %2303 = vrot.lane.b32.xlu0 %v2286, 125
      %v2304 = vpop.permute.xlu0 %2303
      %2305 = vrot.lane.b32.xlu0 %v2287, 125
      %v2306 = vpop.permute.xlu0 %2305
      %2307 = vrot.lane.b32.xlu0 %v2288, 125
      %v2308 = vpop.permute.xlu0 %2307
      %2309 = vrot.lane.b32.xlu0 %v2289, 125
      %v2310 = vpop.permute.xlu0 %2309
      %2311 = vrot.lane.b32.xlu0 %v2290, 125
      %v2312 = vpop.permute.xlu0 %2311
      %2313 = vrot.lane.b32.xlu0 %v2291, 125
      %v2314 = vpop.permute.xlu0 %2313
      %2315 = vrot.lane.b32.xlu0 %v2292, 125
      %v2316 = vpop.permute.xlu0 %2315
      %v2325 = vcombine.low %v2302, %v2310
      %v2326 = vcombine.high %v2302, %v2310
      %v2328 = vunpack.c.l.s4 1983009808
      %v2329 = vunpack.c.0.s8 %v2328
      %v2330 = vlaneseq
      %v2331 = vshrl.u32 %v2330, 7
      %v2332 = vsub.s32 %v2329, %v2331
      %v2333 = vrot.slane %v2325, %v2332
      %v2335 = vunpack.c.l.s4 1983009808
      %v2336 = vunpack.c.0.s8 %v2335
      %v2337 = vlaneseq
      %v2338 = vshrl.u32 %v2337, 7
      %v2339 = vsub.s32 %v2336, %v2338
      %v2340 = vrot.slane %v2326, %v2339
      %v2341 = vcombine.low %v2306, %v2314
      %v2342 = vcombine.high %v2306, %v2314
      %v2344 = vunpack.c.l.s4 1983009808
      %v2345 = vunpack.c.0.s8 %v2344
      %v2346 = vlaneseq
      %v2347 = vshrl.u32 %v2346, 7
      %v2348 = vsub.s32 %v2345, %v2347
      %v2349 = vrot.slane %v2341, %v2348
      %v2351 = vunpack.c.l.s4 1983009808
      %v2352 = vunpack.c.0.s8 %v2351
      %v2353 = vlaneseq
      %v2354 = vshrl.u32 %v2353, 7
      %v2355 = vsub.s32 %v2352, %v2354
      %v2356 = vrot.slane %v2342, %v2355
      %v2357 = vcombine.low %v2333, %v2349
      %v2358 = vcombine.high %v2333, %v2349
      %v2360 = vunpack.c.l.s4 1934713408
      %v2361 = vunpack.c.0.s8 %v2360
      %v2362 = vlaneseq
      %v2363 = vshrl.u32 %v2362, 7
      %v2364 = vsub.s32 %v2361, %v2363
      %v2365 = vrot.slane %v2357, %v2364
      %v2367 = vunpack.c.l.s4 1934713408
      %v2368 = vunpack.c.0.s8 %v2367
      %v2369 = vlaneseq
      %v2370 = vshrl.u32 %v2369, 7
      %v2371 = vsub.s32 %v2368, %v2370
      %v2372 = vrot.slane %v2358, %v2371
      %v2373 = vcombine.low %v2340, %v2356
      %v2374 = vcombine.high %v2340, %v2356
      %v2376 = vunpack.c.l.s4 1934713408
      %v2377 = vunpack.c.0.s8 %v2376
      %v2378 = vlaneseq
      %v2379 = vshrl.u32 %v2378, 7
      %v2380 = vsub.s32 %v2377, %v2379
      %v2381 = vrot.slane %v2373, %v2380
      %v2383 = vunpack.c.l.s4 1934713408
      %v2384 = vunpack.c.0.s8 %v2383
      %v2385 = vlaneseq
      %v2386 = vshrl.u32 %v2385, 7
      %v2387 = vsub.s32 %v2384, %v2386
      %v2388 = vrot.slane %v2374, %v2387
      %v2389 = vcombine.high %v2365, 0.0
      %v2390 = vcombine.high %v2372, 0.0
      %v2391 = vcombine.high %v2381, 0.0
      %v2392 = vcombine.high %v2388, 0.0
      %v2393 = vcombine.low %v2304, %v2312
      %v2394 = vcombine.high %v2304, %v2312
      %v2396 = vunpack.c.l.s4 1983009808
      %v2397 = vunpack.c.0.s8 %v2396
      %v2398 = vlaneseq
      %v2399 = vshrl.u32 %v2398, 7
      %v2400 = vsub.s32 %v2397, %v2399
      %v2401 = vrot.slane %v2393, %v2400
      %v2403 = vunpack.c.l.s4 1983009808
      %v2404 = vunpack.c.0.s8 %v2403
      %v2405 = vlaneseq
      %v2406 = vshrl.u32 %v2405, 7
      %v2407 = vsub.s32 %v2404, %v2406
      %v2408 = vrot.slane %v2394, %v2407
      %v2409 = vcombine.low %v2308, %v2316
      %v2410 = vcombine.high %v2308, %v2316
      %v2412 = vunpack.c.l.s4 1983009808
      %v2413 = vunpack.c.0.s8 %v2412
      %v2414 = vlaneseq
      %v2415 = vshrl.u32 %v2414, 7
      %v2416 = vsub.s32 %v2413, %v2415
      %v2417 = vrot.slane %v2409, %v2416
      %v2419 = vunpack.c.l.s4 1983009808
      %v2420 = vunpack.c.0.s8 %v2419
      %v2421 = vlaneseq
      %v2422 = vshrl.u32 %v2421, 7
      %v2423 = vsub.s32 %v2420, %v2422
      %v2424 = vrot.slane %v2410, %v2423
      %v2425 = vcombine.low %v2401, %v2417
      %v2426 = vcombine.high %v2401, %v2417
      %v2428 = vunpack.c.l.s4 1934713408
      %v2429 = vunpack.c.0.s8 %v2428
      %v2430 = vlaneseq
      %v2431 = vshrl.u32 %v2430, 7
      %v2432 = vsub.s32 %v2429, %v2431
      %v2433 = vrot.slane %v2425, %v2432
      %v2435 = vunpack.c.l.s4 1934713408
      %v2436 = vunpack.c.0.s8 %v2435
      %v2437 = vlaneseq
      %v2438 = vshrl.u32 %v2437, 7
      %v2439 = vsub.s32 %v2436, %v2438
      %v2440 = vrot.slane %v2426, %v2439
      %v2441 = vcombine.low %v2408, %v2424
      %v2442 = vcombine.high %v2408, %v2424
      %v2444 = vunpack.c.l.s4 1934713408
      %v2445 = vunpack.c.0.s8 %v2444
      %v2446 = vlaneseq
      %v2447 = vshrl.u32 %v2446, 7
      %v2448 = vsub.s32 %v2445, %v2447
      %v2449 = vrot.slane %v2441, %v2448
      %v2451 = vunpack.c.l.s4 1934713408
      %v2452 = vunpack.c.0.s8 %v2451
      %v2453 = vlaneseq
      %v2454 = vshrl.u32 %v2453, 7
      %v2455 = vsub.s32 %v2452, %v2454
      %v2456 = vrot.slane %v2442, %v2455
      %v2457 = vcombine.high %v2433, 0.0
      %v2458 = vcombine.high %v2440, 0.0
      %v2459 = vcombine.high %v2449, 0.0
      %v2460 = vcombine.high %v2456, 0.0
      %2462 = vrot.lane.b32.xlu0 %v2389, 16
      %v2463 = vpop.permute.xlu0 %2462
      %2466 = vrot.lane.b32.xlu0 %v2372, 32
      %v2467 = vpop.permute.xlu0 %2466
      %2470 = vrot.lane.b32.xlu0 %v2390, 48
      %v2471 = vpop.permute.xlu0 %2470
      %2474 = vrot.lane.b32.xlu0 %v2381, 64
      %v2475 = vpop.permute.xlu0 %2474
      %2478 = vrot.lane.b32.xlu0 %v2391, 80
      %v2479 = vpop.permute.xlu0 %2478
      %2482 = vrot.lane.b32.xlu0 %v2388, 96
      %v2483 = vpop.permute.xlu0 %2482
      %2486 = vrot.lane.b32.xlu0 %v2392, 112
      %v2487 = vpop.permute.xlu0 %2486
      %2490 = vrot.lane.b32.xlu0 %v2457, 16
      %v2491 = vpop.permute.xlu0 %2490
      %2494 = vrot.lane.b32.xlu0 %v2440, 32
      %v2495 = vpop.permute.xlu0 %2494
      %2498 = vrot.lane.b32.xlu0 %v2458, 48
      %v2499 = vpop.permute.xlu0 %2498
      %2502 = vrot.lane.b32.xlu0 %v2449, 64
      %v2503 = vpop.permute.xlu0 %2502
      %2506 = vrot.lane.b32.xlu0 %v2459, 80
      %v2507 = vpop.permute.xlu0 %2506
      %2510 = vrot.lane.b32.xlu0 %v2456, 96
      %v2511 = vpop.permute.xlu0 %2510
      %2514 = vrot.lane.b32.xlu0 %v2460, 112
      %v2515 = vpop.permute.xlu0 %2514
      %v2517 = vsel %vm498, %v2365, %v2463
      %v2518 = vsel %vm500, %v2517, %v2467
      %v2519 = vsel %vm502, %v2518, %v2471
      %v2520 = vsel %vm504, %v2519, %v2475
      %v2521 = vsel %vm506, %v2520, %v2479
      %v2522 = vsel %vm508, %v2521, %v2483
      %v2523 = vsel %vm510, %v2522, %v2487
      %v2524 = vsel %vm498, %v2433, %v2491
      %v2525 = vsel %vm500, %v2524, %v2495
      %v2526 = vsel %vm502, %v2525, %v2499
      %v2527 = vsel %vm504, %v2526, %v2503
      %v2528 = vsel %vm506, %v2527, %v2507
      %v2529 = vsel %vm508, %v2528, %v2511
      %v2530 = vsel %vm510, %v2529, %v2515
      %v2531 = vpack.c.bf16 %v2523, %v2523
      %v2532 = vpack.c.bf16 %v2530, %v2530
      %v2535 = vunpack.c.l.b16 %v2531
      %v2536 = vunpack.c.l.b16 %v2532
      %v2537 = vpack.c.b16 %v2536, %v2535
      %2539 = vst [vmem:[#allocation3 + $0x20] sm:$0x33] %v2537
      %v2540 = vld [vmem:[#allocation2 + $0x1] sm:$0xff]
      %v2541 = vld [vmem:[#allocation2 + $0x9] sm:$0xff]
      %v2542 = vld [vmem:[#allocation2 + $0x19] sm:$0xff]
      %v2543 = vld [vmem:[#allocation2 + $0x21] sm:$0xff]
      %v2544 = vld [vmem:[#allocation2 + $0x31] sm:$0xff]
      %v2545 = vld [vmem:[#allocation2 + $0x39] sm:$0xff]
      %v2546 = vld [vmem:[#allocation2 + $0x49] sm:$0xff]
      %v2547 = vld [vmem:[#allocation2 + $0x51] sm:$0xff]
      %2556 = vrot.lane.b32.xlu0 %v2540, 124
      %v2557 = vpop.permute.xlu0 %2556
      %2558 = vrot.lane.b32.xlu0 %v2541, 124
      %v2559 = vpop.permute.xlu0 %2558
      %2560 = vrot.lane.b32.xlu0 %v2542, 124
      %v2561 = vpop.permute.xlu0 %2560
      %2562 = vrot.lane.b32.xlu0 %v2543, 124
      %v2563 = vpop.permute.xlu0 %2562
      %2564 = vrot.lane.b32.xlu0 %v2544, 124
      %v2565 = vpop.permute.xlu0 %2564
      %2566 = vrot.lane.b32.xlu0 %v2545, 124
      %v2567 = vpop.permute.xlu0 %2566
      %2568 = vrot.lane.b32.xlu0 %v2546, 124
      %v2569 = vpop.permute.xlu0 %2568
      %2570 = vrot.lane.b32.xlu0 %v2547, 124
      %v2571 = vpop.permute.xlu0 %2570
      %v2580 = vcombine.low %v2557, %v2565
      %v2581 = vcombine.high %v2557, %v2565
      %v2583 = vunpack.c.l.s4 1983009808
      %v2584 = vunpack.c.0.s8 %v2583
      %v2585 = vlaneseq
      %v2586 = vshrl.u32 %v2585, 7
      %v2587 = vsub.s32 %v2584, %v2586
      %v2588 = vrot.slane %v2580, %v2587
      %v2590 = vunpack.c.l.s4 1983009808
      %v2591 = vunpack.c.0.s8 %v2590
      %v2592 = vlaneseq
      %v2593 = vshrl.u32 %v2592, 7
      %v2594 = vsub.s32 %v2591, %v2593
      %v2595 = vrot.slane %v2581, %v2594
      %v2596 = vcombine.low %v2561, %v2569
      %v2597 = vcombine.high %v2561, %v2569
      %v2599 = vunpack.c.l.s4 1983009808
      %v2600 = vunpack.c.0.s8 %v2599
      %v2601 = vlaneseq
      %v2602 = vshrl.u32 %v2601, 7
      %v2603 = vsub.s32 %v2600, %v2602
      %v2604 = vrot.slane %v2596, %v2603
      %v2606 = vunpack.c.l.s4 1983009808
      %v2607 = vunpack.c.0.s8 %v2606
      %v2608 = vlaneseq
      %v2609 = vshrl.u32 %v2608, 7
      %v2610 = vsub.s32 %v2607, %v2609
      %v2611 = vrot.slane %v2597, %v2610
      %v2612 = vcombine.low %v2588, %v2604
      %v2613 = vcombine.high %v2588, %v2604
      %v2615 = vunpack.c.l.s4 1934713408
      %v2616 = vunpack.c.0.s8 %v2615
      %v2617 = vlaneseq
      %v2618 = vshrl.u32 %v2617, 7
      %v2619 = vsub.s32 %v2616, %v2618
      %v2620 = vrot.slane %v2612, %v2619
      %v2622 = vunpack.c.l.s4 1934713408
      %v2623 = vunpack.c.0.s8 %v2622
      %v2624 = vlaneseq
      %v2625 = vshrl.u32 %v2624, 7
      %v2626 = vsub.s32 %v2623, %v2625
      %v2627 = vrot.slane %v2613, %v2626
      %v2628 = vcombine.low %v2595, %v2611
      %v2629 = vcombine.high %v2595, %v2611
      %v2631 = vunpack.c.l.s4 1934713408
      %v2632 = vunpack.c.0.s8 %v2631
      %v2633 = vlaneseq
      %v2634 = vshrl.u32 %v2633, 7
      %v2635 = vsub.s32 %v2632, %v2634
      %v2636 = vrot.slane %v2628, %v2635
      %v2638 = vunpack.c.l.s4 1934713408
      %v2639 = vunpack.c.0.s8 %v2638
      %v2640 = vlaneseq
      %v2641 = vshrl.u32 %v2640, 7
      %v2642 = vsub.s32 %v2639, %v2641
      %v2643 = vrot.slane %v2629, %v2642
      %v2644 = vcombine.high %v2620, 0.0
      %v2645 = vcombine.high %v2627, 0.0
      %v2646 = vcombine.high %v2636, 0.0
      %v2647 = vcombine.high %v2643, 0.0
      %v2648 = vcombine.low %v2559, %v2567
      %v2649 = vcombine.high %v2559, %v2567
      %v2651 = vunpack.c.l.s4 1983009808
      %v2652 = vunpack.c.0.s8 %v2651
      %v2653 = vlaneseq
      %v2654 = vshrl.u32 %v2653, 7
      %v2655 = vsub.s32 %v2652, %v2654
      %v2656 = vrot.slane %v2648, %v2655
      %v2658 = vunpack.c.l.s4 1983009808
      %v2659 = vunpack.c.0.s8 %v2658
      %v2660 = vlaneseq
      %v2661 = vshrl.u32 %v2660, 7
      %v2662 = vsub.s32 %v2659, %v2661
      %v2663 = vrot.slane %v2649, %v2662
      %v2664 = vcombine.low %v2563, %v2571
      %v2665 = vcombine.high %v2563, %v2571
      %v2667 = vunpack.c.l.s4 1983009808
      %v2668 = vunpack.c.0.s8 %v2667
      %v2669 = vlaneseq
      %v2670 = vshrl.u32 %v2669, 7
      %v2671 = vsub.s32 %v2668, %v2670
      %v2672 = vrot.slane %v2664, %v2671
      %v2674 = vunpack.c.l.s4 1983009808
      %v2675 = vunpack.c.0.s8 %v2674
      %v2676 = vlaneseq
      %v2677 = vshrl.u32 %v2676, 7
      %v2678 = vsub.s32 %v2675, %v2677
      %v2679 = vrot.slane %v2665, %v2678
      %v2680 = vcombine.low %v2656, %v2672
      %v2681 = vcombine.high %v2656, %v2672
      %v2683 = vunpack.c.l.s4 1934713408
      %v2684 = vunpack.c.0.s8 %v2683
      %v2685 = vlaneseq
      %v2686 = vshrl.u32 %v2685, 7
      %v2687 = vsub.s32 %v2684, %v2686
      %v2688 = vrot.slane %v2680, %v2687
      %v2690 = vunpack.c.l.s4 1934713408
      %v2691 = vunpack.c.0.s8 %v2690
      %v2692 = vlaneseq
      %v2693 = vshrl.u32 %v2692, 7
      %v2694 = vsub.s32 %v2691, %v2693
      %v2695 = vrot.slane %v2681, %v2694
      %v2696 = vcombine.low %v2663, %v2679
      %v2697 = vcombine.high %v2663, %v2679
      %v2699 = vunpack.c.l.s4 1934713408
      %v2700 = vunpack.c.0.s8 %v2699
      %v2701 = vlaneseq
      %v2702 = vshrl.u32 %v2701, 7
      %v2703 = vsub.s32 %v2700, %v2702
      %v2704 = vrot.slane %v2696, %v2703
      %v2706 = vunpack.c.l.s4 1934713408
      %v2707 = vunpack.c.0.s8 %v2706
      %v2708 = vlaneseq
      %v2709 = vshrl.u32 %v2708, 7
      %v2710 = vsub.s32 %v2707, %v2709
      %v2711 = vrot.slane %v2697, %v2710
      %v2712 = vcombine.high %v2688, 0.0
      %v2713 = vcombine.high %v2695, 0.0
      %v2714 = vcombine.high %v2704, 0.0
      %v2715 = vcombine.high %v2711, 0.0
      %2717 = vrot.lane.b32.xlu0 %v2644, 16
      %v2718 = vpop.permute.xlu0 %2717
      %2721 = vrot.lane.b32.xlu0 %v2627, 32
      %v2722 = vpop.permute.xlu0 %2721
      %2725 = vrot.lane.b32.xlu0 %v2645, 48
      %v2726 = vpop.permute.xlu0 %2725
      %2729 = vrot.lane.b32.xlu0 %v2636, 64
      %v2730 = vpop.permute.xlu0 %2729
      %2733 = vrot.lane.b32.xlu0 %v2646, 80
      %v2734 = vpop.permute.xlu0 %2733
      %2737 = vrot.lane.b32.xlu0 %v2643, 96
      %v2738 = vpop.permute.xlu0 %2737
      %2741 = vrot.lane.b32.xlu0 %v2647, 112
      %v2742 = vpop.permute.xlu0 %2741
      %2745 = vrot.lane.b32.xlu0 %v2712, 16
      %v2746 = vpop.permute.xlu0 %2745
      %2749 = vrot.lane.b32.xlu0 %v2695, 32
      %v2750 = vpop.permute.xlu0 %2749
      %2753 = vrot.lane.b32.xlu0 %v2713, 48
      %v2754 = vpop.permute.xlu0 %2753
      %2757 = vrot.lane.b32.xlu0 %v2704, 64
      %v2758 = vpop.permute.xlu0 %2757
      %2761 = vrot.lane.b32.xlu0 %v2714, 80
      %v2762 = vpop.permute.xlu0 %2761
      %2765 = vrot.lane.b32.xlu0 %v2711, 96
      %v2766 = vpop.permute.xlu0 %2765
      %2769 = vrot.lane.b32.xlu0 %v2715, 112
      %v2770 = vpop.permute.xlu0 %2769
      %v2772 = vsel %vm498, %v2620, %v2718
      %v2773 = vsel %vm500, %v2772, %v2722
      %v2774 = vsel %vm502, %v2773, %v2726
      %v2775 = vsel %vm504, %v2774, %v2730
      %v2776 = vsel %vm506, %v2775, %v2734
      %v2777 = vsel %vm508, %v2776, %v2738
      %v2778 = vsel %vm510, %v2777, %v2742
      %v2779 = vsel %vm498, %v2688, %v2746
      %v2780 = vsel %vm500, %v2779, %v2750
      %v2781 = vsel %vm502, %v2780, %v2754
      %v2782 = vsel %vm504, %v2781, %v2758
      %v2783 = vsel %vm506, %v2782, %v2762
      %v2784 = vsel %vm508, %v2783, %v2766
      %v2785 = vsel %vm510, %v2784, %v2770
      %v2786 = vpack.c.bf16 %v2778, %v2778
      %v2787 = vpack.c.bf16 %v2785, %v2785
      %v2790 = vunpack.c.l.b16 %v2786
      %v2791 = vunpack.c.l.b16 %v2787
      %v2792 = vpack.c.b16 %v2791, %v2790
      %v2793 = vrot.slane %v2792, 6
      %2795 = vst [vmem:[#allocation3 + $0x20] sm:$0xcc] %v2793
      %v2796 = vld [vmem:[#allocation2 + $0x2] sm:$0xff]
      %v2797 = vld [vmem:[#allocation2 + $0xa] sm:$0xff]
      %v2798 = vld [vmem:[#allocation2 + $0x1a] sm:$0xff]
      %v2799 = vld [vmem:[#allocation2 + $0x22] sm:$0xff]
      %v2800 = vld [vmem:[#allocation2 + $0x32] sm:$0xff]
      %v2801 = vld [vmem:[#allocation2 + $0x3a] sm:$0xff]
      %v2802 = vld [vmem:[#allocation2 + $0x4a] sm:$0xff]
      %v2803 = vld [vmem:[#allocation2 + $0x52] sm:$0xff]
      %v2804 = vcombine.low %v2796, %v2800
      %v2805 = vcombine.high %v2796, %v2800
      %v2807 = vunpack.c.l.s4 1983009808
      %v2808 = vunpack.c.0.s8 %v2807
      %v2809 = vlaneseq
      %v2810 = vshrl.u32 %v2809, 7
      %v2811 = vsub.s32 %v2808, %v2810
      %v2812 = vrot.slane %v2804, %v2811
      %v2814 = vunpack.c.l.s4 1983009808
      %v2815 = vunpack.c.0.s8 %v2814
      %v2816 = vlaneseq
      %v2817 = vshrl.u32 %v2816, 7
      %v2818 = vsub.s32 %v2815, %v2817
      %v2819 = vrot.slane %v2805, %v2818
      %v2820 = vcombine.low %v2798, %v2802
      %v2821 = vcombine.high %v2798, %v2802
      %v2823 = vunpack.c.l.s4 1983009808
      %v2824 = vunpack.c.0.s8 %v2823
      %v2825 = vlaneseq
      %v2826 = vshrl.u32 %v2825, 7
      %v2827 = vsub.s32 %v2824, %v2826
      %v2828 = vrot.slane %v2820, %v2827
      %v2830 = vunpack.c.l.s4 1983009808
      %v2831 = vunpack.c.0.s8 %v2830
      %v2832 = vlaneseq
      %v2833 = vshrl.u32 %v2832, 7
      %v2834 = vsub.s32 %v2831, %v2833
      %v2835 = vrot.slane %v2821, %v2834
      %v2836 = vcombine.low %v2812, %v2828
      %v2837 = vcombine.high %v2812, %v2828
      %v2839 = vunpack.c.l.s4 1934713408
      %v2840 = vunpack.c.0.s8 %v2839
      %v2841 = vlaneseq
      %v2842 = vshrl.u32 %v2841, 7
      %v2843 = vsub.s32 %v2840, %v2842
      %v2844 = vrot.slane %v2836, %v2843
      %v2846 = vunpack.c.l.s4 1934713408
      %v2847 = vunpack.c.0.s8 %v2846
      %v2848 = vlaneseq
      %v2849 = vshrl.u32 %v2848, 7
      %v2850 = vsub.s32 %v2847, %v2849
      %v2851 = vrot.slane %v2837, %v2850
      %v2852 = vcombine.low %v2819, %v2835
      %v2853 = vcombine.high %v2819, %v2835
      %v2855 = vunpack.c.l.s4 1934713408
      %v2856 = vunpack.c.0.s8 %v2855
      %v2857 = vlaneseq
      %v2858 = vshrl.u32 %v2857, 7
      %v2859 = vsub.s32 %v2856, %v2858
      %v2860 = vrot.slane %v2852, %v2859
      %v2862 = vunpack.c.l.s4 1934713408
      %v2863 = vunpack.c.0.s8 %v2862
      %v2864 = vlaneseq
      %v2865 = vshrl.u32 %v2864, 7
      %v2866 = vsub.s32 %v2863, %v2865
      %v2867 = vrot.slane %v2853, %v2866
      %v2868 = vcombine.high %v2844, 0.0
      %v2869 = vcombine.high %v2851, 0.0
      %v2870 = vcombine.high %v2860, 0.0
      %v2871 = vcombine.high %v2867, 0.0
      %v2872 = vcombine.low %v2797, %v2801
      %v2873 = vcombine.high %v2797, %v2801
      %v2875 = vunpack.c.l.s4 1983009808
      %v2876 = vunpack.c.0.s8 %v2875
      %v2877 = vlaneseq
      %v2878 = vshrl.u32 %v2877, 7
      %v2879 = vsub.s32 %v2876, %v2878
      %v2880 = vrot.slane %v2872, %v2879
      %v2882 = vunpack.c.l.s4 1983009808
      %v2883 = vunpack.c.0.s8 %v2882
      %v2884 = vlaneseq
      %v2885 = vshrl.u32 %v2884, 7
      %v2886 = vsub.s32 %v2883, %v2885
      %v2887 = vrot.slane %v2873, %v2886
      %v2888 = vcombine.low %v2799, %v2803
      %v2889 = vcombine.high %v2799, %v2803
      %v2891 = vunpack.c.l.s4 1983009808
      %v2892 = vunpack.c.0.s8 %v2891
      %v2893 = vlaneseq
      %v2894 = vshrl.u32 %v2893, 7
      %v2895 = vsub.s32 %v2892, %v2894
      %v2896 = vrot.slane %v2888, %v2895
      %v2898 = vunpack.c.l.s4 1983009808
      %v2899 = vunpack.c.0.s8 %v2898
      %v2900 = vlaneseq
      %v2901 = vshrl.u32 %v2900, 7
      %v2902 = vsub.s32 %v2899, %v2901
      %v2903 = vrot.slane %v2889, %v2902
      %v2904 = vcombine.low %v2880, %v2896
      %v2905 = vcombine.high %v2880, %v2896
      %v2907 = vunpack.c.l.s4 1934713408
      %v2908 = vunpack.c.0.s8 %v2907
      %v2909 = vlaneseq
      %v2910 = vshrl.u32 %v2909, 7
      %v2911 = vsub.s32 %v2908, %v2910
      %v2912 = vrot.slane %v2904, %v2911
      %v2914 = vunpack.c.l.s4 1934713408
      %v2915 = vunpack.c.0.s8 %v2914
      %v2916 = vlaneseq
      %v2917 = vshrl.u32 %v2916, 7
      %v2918 = vsub.s32 %v2915, %v2917
      %v2919 = vrot.slane %v2905, %v2918
      %v2920 = vcombine.low %v2887, %v2903
      %v2921 = vcombine.high %v2887, %v2903
      %v2923 = vunpack.c.l.s4 1934713408
      %v2924 = vunpack.c.0.s8 %v2923
      %v2925 = vlaneseq
      %v2926 = vshrl.u32 %v2925, 7
      %v2927 = vsub.s32 %v2924, %v2926
      %v2928 = vrot.slane %v2920, %v2927
      %v2930 = vunpack.c.l.s4 1934713408
      %v2931 = vunpack.c.0.s8 %v2930
      %v2932 = vlaneseq
      %v2933 = vshrl.u32 %v2932, 7
      %v2934 = vsub.s32 %v2931, %v2933
      %v2935 = vrot.slane %v2921, %v2934
      %v2936 = vcombine.high %v2912, 0.0
      %v2937 = vcombine.high %v2919, 0.0
      %v2938 = vcombine.high %v2928, 0.0
      %v2939 = vcombine.high %v2935, 0.0
      %2941 = vrot.lane.b32.xlu0 %v2868, 16
      %v2942 = vpop.permute.xlu0 %2941
      %2945 = vrot.lane.b32.xlu0 %v2851, 32
      %v2946 = vpop.permute.xlu0 %2945
      %2949 = vrot.lane.b32.xlu0 %v2869, 48
      %v2950 = vpop.permute.xlu0 %2949
      %2953 = vrot.lane.b32.xlu0 %v2860, 64
      %v2954 = vpop.permute.xlu0 %2953
      %2957 = vrot.lane.b32.xlu0 %v2870, 80
      %v2958 = vpop.permute.xlu0 %2957
      %2961 = vrot.lane.b32.xlu0 %v2867, 96
      %v2962 = vpop.permute.xlu0 %2961
      %2965 = vrot.lane.b32.xlu0 %v2871, 112
      %v2966 = vpop.permute.xlu0 %2965
      %2969 = vrot.lane.b32.xlu0 %v2936, 16
      %v2970 = vpop.permute.xlu0 %2969
      %2973 = vrot.lane.b32.xlu0 %v2919, 32
      %v2974 = vpop.permute.xlu0 %2973
      %2977 = vrot.lane.b32.xlu0 %v2937, 48
      %v2978 = vpop.permute.xlu0 %2977
      %2981 = vrot.lane.b32.xlu0 %v2928, 64
      %v2982 = vpop.permute.xlu0 %2981
      %2985 = vrot.lane.b32.xlu0 %v2938, 80
      %v2986 = vpop.permute.xlu0 %2985
      %2989 = vrot.lane.b32.xlu0 %v2935, 96
      %v2990 = vpop.permute.xlu0 %2989
      %2993 = vrot.lane.b32.xlu0 %v2939, 112
      %v2994 = vpop.permute.xlu0 %2993
      %v2996 = vsel %vm498, %v2844, %v2942
      %v2997 = vsel %vm500, %v2996, %v2946
      %v2998 = vsel %vm502, %v2997, %v2950
      %v2999 = vsel %vm504, %v2998, %v2954
      %v3000 = vsel %vm506, %v2999, %v2958
      %v3001 = vsel %vm508, %v3000, %v2962
      %v3002 = vsel %vm510, %v3001, %v2966
      %v3003 = vsel %vm498, %v2912, %v2970
      %v3004 = vsel %vm500, %v3003, %v2974
      %v3005 = vsel %vm502, %v3004, %v2978
      %v3006 = vsel %vm504, %v3005, %v2982
      %v3007 = vsel %vm506, %v3006, %v2986
      %v3008 = vsel %vm508, %v3007, %v2990
      %v3009 = vsel %vm510, %v3008, %v2994
      %v3010 = vpack.c.bf16 %v3002, %v3002
      %v3011 = vpack.c.bf16 %v3009, %v3009
      %v3014 = vunpack.c.l.b16 %v3010
      %v3015 = vunpack.c.l.b16 %v3011
      %v3016 = vpack.c.b16 %v3015, %v3014
      %3018 = vst [vmem:[#allocation3 + $0x28] sm:$0x33] %v3016
      %v3019 = vld [vmem:[#allocation2 + $0x2] sm:$0xff]
      %v3020 = vld [vmem:[#allocation2 + $0xa] sm:$0xff]
      %v3021 = vld [vmem:[#allocation2 + $0x1a] sm:$0xff]
      %v3022 = vld [vmem:[#allocation2 + $0x22] sm:$0xff]
      %v3023 = vld [vmem:[#allocation2 + $0x32] sm:$0xff]
      %v3024 = vld [vmem:[#allocation2 + $0x3a] sm:$0xff]
      %v3025 = vld [vmem:[#allocation2 + $0x4a] sm:$0xff]
      %v3026 = vld [vmem:[#allocation2 + $0x52] sm:$0xff]
      %3035 = vrot.lane.b32.xlu0 %v3019, 127
      %v3036 = vpop.permute.xlu0 %3035
      %3037 = vrot.lane.b32.xlu0 %v3020, 127
      %v3038 = vpop.permute.xlu0 %3037
      %3039 = vrot.lane.b32.xlu0 %v3021, 127
      %v3040 = vpop.permute.xlu0 %3039
      %3041 = vrot.lane.b32.xlu0 %v3022, 127
      %v3042 = vpop.permute.xlu0 %3041
      %3043 = vrot.lane.b32.xlu0 %v3023, 127
      %v3044 = vpop.permute.xlu0 %3043
      %3045 = vrot.lane.b32.xlu0 %v3024, 127
      %v3046 = vpop.permute.xlu0 %3045
      %3047 = vrot.lane.b32.xlu0 %v3025, 127
      %v3048 = vpop.permute.xlu0 %3047
      %3049 = vrot.lane.b32.xlu0 %v3026, 127
      %v3050 = vpop.permute.xlu0 %3049
      %v3059 = vcombine.low %v3036, %v3044
      %v3060 = vcombine.high %v3036, %v3044
      %v3062 = vunpack.c.l.s4 1983009808
      %v3063 = vunpack.c.0.s8 %v3062
      %v3064 = vlaneseq
      %v3065 = vshrl.u32 %v3064, 7
      %v3066 = vsub.s32 %v3063, %v3065
      %v3067 = vrot.slane %v3059, %v3066
      %v3069 = vunpack.c.l.s4 1983009808
      %v3070 = vunpack.c.0.s8 %v3069
      %v3071 = vlaneseq
      %v3072 = vshrl.u32 %v3071, 7
      %v3073 = vsub.s32 %v3070, %v3072
      %v3074 = vrot.slane %v3060, %v3073
      %v3075 = vcombine.low %v3040, %v3048
      %v3076 = vcombine.high %v3040, %v3048
      %v3078 = vunpack.c.l.s4 1983009808
      %v3079 = vunpack.c.0.s8 %v3078
      %v3080 = vlaneseq
      %v3081 = vshrl.u32 %v3080, 7
      %v3082 = vsub.s32 %v3079, %v3081
      %v3083 = vrot.slane %v3075, %v3082
      %v3085 = vunpack.c.l.s4 1983009808
      %v3086 = vunpack.c.0.s8 %v3085
      %v3087 = vlaneseq
      %v3088 = vshrl.u32 %v3087, 7
      %v3089 = vsub.s32 %v3086, %v3088
      %v3090 = vrot.slane %v3076, %v3089
      %v3091 = vcombine.low %v3067, %v3083
      %v3092 = vcombine.high %v3067, %v3083
      %v3094 = vunpack.c.l.s4 1934713408
      %v3095 = vunpack.c.0.s8 %v3094
      %v3096 = vlaneseq
      %v3097 = vshrl.u32 %v3096, 7
      %v3098 = vsub.s32 %v3095, %v3097
      %v3099 = vrot.slane %v3091, %v3098
      %v3101 = vunpack.c.l.s4 1934713408
      %v3102 = vunpack.c.0.s8 %v3101
      %v3103 = vlaneseq
      %v3104 = vshrl.u32 %v3103, 7
      %v3105 = vsub.s32 %v3102, %v3104
      %v3106 = vrot.slane %v3092, %v3105
      %v3107 = vcombine.low %v3074, %v3090
      %v3108 = vcombine.high %v3074, %v3090
      %v3110 = vunpack.c.l.s4 1934713408
      %v3111 = vunpack.c.0.s8 %v3110
      %v3112 = vlaneseq
      %v3113 = vshrl.u32 %v3112, 7
      %v3114 = vsub.s32 %v3111, %v3113
      %v3115 = vrot.slane %v3107, %v3114
      %v3117 = vunpack.c.l.s4 1934713408
      %v3118 = vunpack.c.0.s8 %v3117
      %v3119 = vlaneseq
      %v3120 = vshrl.u32 %v3119, 7
      %v3121 = vsub.s32 %v3118, %v3120
      %v3122 = vrot.slane %v3108, %v3121
      %v3123 = vcombine.high %v3099, 0.0
      %v3124 = vcombine.high %v3106, 0.0
      %v3125 = vcombine.high %v3115, 0.0
      %v3126 = vcombine.high %v3122, 0.0
      %v3127 = vcombine.low %v3038, %v3046
      %v3128 = vcombine.high %v3038, %v3046
      %v3130 = vunpack.c.l.s4 1983009808
      %v3131 = vunpack.c.0.s8 %v3130
      %v3132 = vlaneseq
      %v3133 = vshrl.u32 %v3132, 7
      %v3134 = vsub.s32 %v3131, %v3133
      %v3135 = vrot.slane %v3127, %v3134
      %v3137 = vunpack.c.l.s4 1983009808
      %v3138 = vunpack.c.0.s8 %v3137
      %v3139 = vlaneseq
      %v3140 = vshrl.u32 %v3139, 7
      %v3141 = vsub.s32 %v3138, %v3140
      %v3142 = vrot.slane %v3128, %v3141
      %v3143 = vcombine.low %v3042, %v3050
      %v3144 = vcombine.high %v3042, %v3050
      %v3146 = vunpack.c.l.s4 1983009808
      %v3147 = vunpack.c.0.s8 %v3146
      %v3148 = vlaneseq
      %v3149 = vshrl.u32 %v3148, 7
      %v3150 = vsub.s32 %v3147, %v3149
      %v3151 = vrot.slane %v3143, %v3150
      %v3153 = vunpack.c.l.s4 1983009808
      %v3154 = vunpack.c.0.s8 %v3153
      %v3155 = vlaneseq
      %v3156 = vshrl.u32 %v3155, 7
      %v3157 = vsub.s32 %v3154, %v3156
      %v3158 = vrot.slane %v3144, %v3157
      %v3159 = vcombine.low %v3135, %v3151
      %v3160 = vcombine.high %v3135, %v3151
      %v3162 = vunpack.c.l.s4 1934713408
      %v3163 = vunpack.c.0.s8 %v3162
      %v3164 = vlaneseq
      %v3165 = vshrl.u32 %v3164, 7
      %v3166 = vsub.s32 %v3163, %v3165
      %v3167 = vrot.slane %v3159, %v3166
      %v3169 = vunpack.c.l.s4 1934713408
      %v3170 = vunpack.c.0.s8 %v3169
      %v3171 = vlaneseq
      %v3172 = vshrl.u32 %v3171, 7
      %v3173 = vsub.s32 %v3170, %v3172
      %v3174 = vrot.slane %v3160, %v3173
      %v3175 = vcombine.low %v3142, %v3158
      %v3176 = vcombine.high %v3142, %v3158
      %v3178 = vunpack.c.l.s4 1934713408
      %v3179 = vunpack.c.0.s8 %v3178
      %v3180 = vlaneseq
      %v3181 = vshrl.u32 %v3180, 7
      %v3182 = vsub.s32 %v3179, %v3181
      %v3183 = vrot.slane %v3175, %v3182
      %v3185 = vunpack.c.l.s4 1934713408
      %v3186 = vunpack.c.0.s8 %v3185
      %v3187 = vlaneseq
      %v3188 = vshrl.u32 %v3187, 7
      %v3189 = vsub.s32 %v3186, %v3188
      %v3190 = vrot.slane %v3176, %v3189
      %v3191 = vcombine.high %v3167, 0.0
      %v3192 = vcombine.high %v3174, 0.0
      %v3193 = vcombine.high %v3183, 0.0
      %v3194 = vcombine.high %v3190, 0.0
      %3196 = vrot.lane.b32.xlu0 %v3123, 16
      %v3197 = vpop.permute.xlu0 %3196
      %3200 = vrot.lane.b32.xlu0 %v3106, 32
      %v3201 = vpop.permute.xlu0 %3200
      %3204 = vrot.lane.b32.xlu0 %v3124, 48
      %v3205 = vpop.permute.xlu0 %3204
      %3208 = vrot.lane.b32.xlu0 %v3115, 64
      %v3209 = vpop.permute.xlu0 %3208
      %3212 = vrot.lane.b32.xlu0 %v3125, 80
      %v3213 = vpop.permute.xlu0 %3212
      %3216 = vrot.lane.b32.xlu0 %v3122, 96
      %v3217 = vpop.permute.xlu0 %3216
      %3220 = vrot.lane.b32.xlu0 %v3126, 112
      %v3221 = vpop.permute.xlu0 %3220
      %3224 = vrot.lane.b32.xlu0 %v3191, 16
      %v3225 = vpop.permute.xlu0 %3224
      %3228 = vrot.lane.b32.xlu0 %v3174, 32
      %v3229 = vpop.permute.xlu0 %3228
      %3232 = vrot.lane.b32.xlu0 %v3192, 48
      %v3233 = vpop.permute.xlu0 %3232
      %3236 = vrot.lane.b32.xlu0 %v3183, 64
      %v3237 = vpop.permute.xlu0 %3236
      %3240 = vrot.lane.b32.xlu0 %v3193, 80
      %v3241 = vpop.permute.xlu0 %3240
      %3244 = vrot.lane.b32.xlu0 %v3190, 96
      %v3245 = vpop.permute.xlu0 %3244
      %3248 = vrot.lane.b32.xlu0 %v3194, 112
      %v3249 = vpop.permute.xlu0 %3248
      %v3251 = vsel %vm498, %v3099, %v3197
      %v3252 = vsel %vm500, %v3251, %v3201
      %v3253 = vsel %vm502, %v3252, %v3205
      %v3254 = vsel %vm504, %v3253, %v3209
      %v3255 = vsel %vm506, %v3254, %v3213
      %v3256 = vsel %vm508, %v3255, %v3217
      %v3257 = vsel %vm510, %v3256, %v3221
      %v3258 = vsel %vm498, %v3167, %v3225
      %v3259 = vsel %vm500, %v3258, %v3229
      %v3260 = vsel %vm502, %v3259, %v3233
      %v3261 = vsel %vm504, %v3260, %v3237
      %v3262 = vsel %vm506, %v3261, %v3241
      %v3263 = vsel %vm508, %v3262, %v3245
      %v3264 = vsel %vm510, %v3263, %v3249
      %v3265 = vpack.c.bf16 %v3257, %v3257
      %v3266 = vpack.c.bf16 %v3264, %v3264
      %v3269 = vunpack.c.l.b16 %v3265
      %v3270 = vunpack.c.l.b16 %v3266
      %v3271 = vpack.c.b16 %v3270, %v3269
      %v3272 = vrot.slane %v3271, 6
      %3274 = vst [vmem:[#allocation3 + $0x28] sm:$0xcc] %v3272
      %v3275 = vld [vmem:[#allocation2 + $0x2] sm:$0xff]
      %v3276 = vld [vmem:[#allocation2 + $0xa] sm:$0xff]
      %v3277 = vld [vmem:[#allocation2 + $0x1a] sm:$0xff]
      %v3278 = vld [vmem:[#allocation2 + $0x22] sm:$0xff]
      %v3279 = vld [vmem:[#allocation2 + $0x32] sm:$0xff]
      %v3280 = vld [vmem:[#allocation2 + $0x3a] sm:$0xff]
      %v3281 = vld [vmem:[#allocation2 + $0x4a] sm:$0xff]
      %v3282 = vld [vmem:[#allocation2 + $0x52] sm:$0xff]
      %3291 = vrot.lane.b32.xlu0 %v3275, 126
      %v3292 = vpop.permute.xlu0 %3291
      %3293 = vrot.lane.b32.xlu0 %v3276, 126
      %v3294 = vpop.permute.xlu0 %3293
      %3295 = vrot.lane.b32.xlu0 %v3277, 126
      %v3296 = vpop.permute.xlu0 %3295
      %3297 = vrot.lane.b32.xlu0 %v3278, 126
      %v3298 = vpop.permute.xlu0 %3297
      %3299 = vrot.lane.b32.xlu0 %v3279, 126
      %v3300 = vpop.permute.xlu0 %3299
      %3301 = vrot.lane.b32.xlu0 %v3280, 126
      %v3302 = vpop.permute.xlu0 %3301
      %3303 = vrot.lane.b32.xlu0 %v3281, 126
      %v3304 = vpop.permute.xlu0 %3303
      %3305 = vrot.lane.b32.xlu0 %v3282, 126
      %v3306 = vpop.permute.xlu0 %3305
      %v3315 = vcombine.low %v3292, %v3300
      %v3316 = vcombine.high %v3292, %v3300
      %v3318 = vunpack.c.l.s4 1983009808
      %v3319 = vunpack.c.0.s8 %v3318
      %v3320 = vlaneseq
      %v3321 = vshrl.u32 %v3320, 7
      %v3322 = vsub.s32 %v3319, %v3321
      %v3323 = vrot.slane %v3315, %v3322
      %v3325 = vunpack.c.l.s4 1983009808
      %v3326 = vunpack.c.0.s8 %v3325
      %v3327 = vlaneseq
      %v3328 = vshrl.u32 %v3327, 7
      %v3329 = vsub.s32 %v3326, %v3328
      %v3330 = vrot.slane %v3316, %v3329
      %v3331 = vcombine.low %v3296, %v3304
      %v3332 = vcombine.high %v3296, %v3304
      %v3334 = vunpack.c.l.s4 1983009808
      %v3335 = vunpack.c.0.s8 %v3334
      %v3336 = vlaneseq
      %v3337 = vshrl.u32 %v3336, 7
      %v3338 = vsub.s32 %v3335, %v3337
      %v3339 = vrot.slane %v3331, %v3338
      %v3341 = vunpack.c.l.s4 1983009808
      %v3342 = vunpack.c.0.s8 %v3341
      %v3343 = vlaneseq
      %v3344 = vshrl.u32 %v3343, 7
      %v3345 = vsub.s32 %v3342, %v3344
      %v3346 = vrot.slane %v3332, %v3345
      %v3347 = vcombine.low %v3323, %v3339
      %v3348 = vcombine.high %v3323, %v3339
      %v3350 = vunpack.c.l.s4 1934713408
      %v3351 = vunpack.c.0.s8 %v3350
      %v3352 = vlaneseq
      %v3353 = vshrl.u32 %v3352, 7
      %v3354 = vsub.s32 %v3351, %v3353
      %v3355 = vrot.slane %v3347, %v3354
      %v3357 = vunpack.c.l.s4 1934713408
      %v3358 = vunpack.c.0.s8 %v3357
      %v3359 = vlaneseq
      %v3360 = vshrl.u32 %v3359, 7
      %v3361 = vsub.s32 %v3358, %v3360
      %v3362 = vrot.slane %v3348, %v3361
      %v3363 = vcombine.low %v3330, %v3346
      %v3364 = vcombine.high %v3330, %v3346
      %v3366 = vunpack.c.l.s4 1934713408
      %v3367 = vunpack.c.0.s8 %v3366
      %v3368 = vlaneseq
      %v3369 = vshrl.u32 %v3368, 7
      %v3370 = vsub.s32 %v3367, %v3369
      %v3371 = vrot.slane %v3363, %v3370
      %v3373 = vunpack.c.l.s4 1934713408
      %v3374 = vunpack.c.0.s8 %v3373
      %v3375 = vlaneseq
      %v3376 = vshrl.u32 %v3375, 7
      %v3377 = vsub.s32 %v3374, %v3376
      %v3378 = vrot.slane %v3364, %v3377
      %v3379 = vcombine.high %v3355, 0.0
      %v3380 = vcombine.high %v3362, 0.0
      %v3381 = vcombine.high %v3371, 0.0
      %v3382 = vcombine.high %v3378, 0.0
      %v3383 = vcombine.low %v3294, %v3302
      %v3384 = vcombine.high %v3294, %v3302
      %v3386 = vunpack.c.l.s4 1983009808
      %v3387 = vunpack.c.0.s8 %v3386
      %v3388 = vlaneseq
      %v3389 = vshrl.u32 %v3388, 7
      %v3390 = vsub.s32 %v3387, %v3389
      %v3391 = vrot.slane %v3383, %v3390
      %v3393 = vunpack.c.l.s4 1983009808
      %v3394 = vunpack.c.0.s8 %v3393
      %v3395 = vlaneseq
      %v3396 = vshrl.u32 %v3395, 7
      %v3397 = vsub.s32 %v3394, %v3396
      %v3398 = vrot.slane %v3384, %v3397
      %v3399 = vcombine.low %v3298, %v3306
      %v3400 = vcombine.high %v3298, %v3306
      %v3402 = vunpack.c.l.s4 1983009808
      %v3403 = vunpack.c.0.s8 %v3402
      %v3404 = vlaneseq
      %v3405 = vshrl.u32 %v3404, 7
      %v3406 = vsub.s32 %v3403, %v3405
      %v3407 = vrot.slane %v3399, %v3406
      %v3409 = vunpack.c.l.s4 1983009808
      %v3410 = vunpack.c.0.s8 %v3409
      %v3411 = vlaneseq
      %v3412 = vshrl.u32 %v3411, 7
      %v3413 = vsub.s32 %v3410, %v3412
      %v3414 = vrot.slane %v3400, %v3413
      %v3415 = vcombine.low %v3391, %v3407
      %v3416 = vcombine.high %v3391, %v3407
      %v3418 = vunpack.c.l.s4 1934713408
      %v3419 = vunpack.c.0.s8 %v3418
      %v3420 = vlaneseq
      %v3421 = vshrl.u32 %v3420, 7
      %v3422 = vsub.s32 %v3419, %v3421
      %v3423 = vrot.slane %v3415, %v3422
      %v3425 = vunpack.c.l.s4 1934713408
      %v3426 = vunpack.c.0.s8 %v3425
      %v3427 = vlaneseq
      %v3428 = vshrl.u32 %v3427, 7
      %v3429 = vsub.s32 %v3426, %v3428
      %v3430 = vrot.slane %v3416, %v3429
      %v3431 = vcombine.low %v3398, %v3414
      %v3432 = vcombine.high %v3398, %v3414
      %v3434 = vunpack.c.l.s4 1934713408
      %v3435 = vunpack.c.0.s8 %v3434
      %v3436 = vlaneseq
      %v3437 = vshrl.u32 %v3436, 7
      %v3438 = vsub.s32 %v3435, %v3437
      %v3439 = vrot.slane %v3431, %v3438
      %v3441 = vunpack.c.l.s4 1934713408
      %v3442 = vunpack.c.0.s8 %v3441
      %v3443 = vlaneseq
      %v3444 = vshrl.u32 %v3443, 7
      %v3445 = vsub.s32 %v3442, %v3444
      %v3446 = vrot.slane %v3432, %v3445
      %v3447 = vcombine.high %v3423, 0.0
      %v3448 = vcombine.high %v3430, 0.0
      %v3449 = vcombine.high %v3439, 0.0
      %v3450 = vcombine.high %v3446, 0.0
      %3452 = vrot.lane.b32.xlu0 %v3379, 16
      %v3453 = vpop.permute.xlu0 %3452
      %3456 = vrot.lane.b32.xlu0 %v3362, 32
      %v3457 = vpop.permute.xlu0 %3456
      %3460 = vrot.lane.b32.xlu0 %v3380, 48
      %v3461 = vpop.permute.xlu0 %3460
      %3464 = vrot.lane.b32.xlu0 %v3371, 64
      %v3465 = vpop.permute.xlu0 %3464
      %3468 = vrot.lane.b32.xlu0 %v3381, 80
      %v3469 = vpop.permute.xlu0 %3468
      %3472 = vrot.lane.b32.xlu0 %v3378, 96
      %v3473 = vpop.permute.xlu0 %3472
      %3476 = vrot.lane.b32.xlu0 %v3382, 112
      %v3477 = vpop.permute.xlu0 %3476
      %3480 = vrot.lane.b32.xlu0 %v3447, 16
      %v3481 = vpop.permute.xlu0 %3480
      %3484 = vrot.lane.b32.xlu0 %v3430, 32
      %v3485 = vpop.permute.xlu0 %3484
      %3488 = vrot.lane.b32.xlu0 %v3448, 48
      %v3489 = vpop.permute.xlu0 %3488
      %3492 = vrot.lane.b32.xlu0 %v3439, 64
      %v3493 = vpop.permute.xlu0 %3492
      %3496 = vrot.lane.b32.xlu0 %v3449, 80
      %v3497 = vpop.permute.xlu0 %3496
      %3500 = vrot.lane.b32.xlu0 %v3446, 96
      %v3501 = vpop.permute.xlu0 %3500
      %3504 = vrot.lane.b32.xlu0 %v3450, 112
      %v3505 = vpop.permute.xlu0 %3504
      %v3507 = vsel %vm498, %v3355, %v3453
      %v3508 = vsel %vm500, %v3507, %v3457
      %v3509 = vsel %vm502, %v3508, %v3461
      %v3510 = vsel %vm504, %v3509, %v3465
      %v3511 = vsel %vm506, %v3510, %v3469
      %v3512 = vsel %vm508, %v3511, %v3473
      %v3513 = vsel %vm510, %v3512, %v3477
      %v3514 = vsel %vm498, %v3423, %v3481
      %v3515 = vsel %vm500, %v3514, %v3485
      %v3516 = vsel %vm502, %v3515, %v3489
      %v3517 = vsel %vm504, %v3516, %v3493
      %v3518 = vsel %vm506, %v3517, %v3497
      %v3519 = vsel %vm508, %v3518, %v3501
      %v3520 = vsel %vm510, %v3519, %v3505
      %v3521 = vpack.c.bf16 %v3513, %v3513
      %v3522 = vpack.c.bf16 %v3520, %v3520
      %v3525 = vunpack.c.l.b16 %v3521
      %v3526 = vunpack.c.l.b16 %v3522
      %v3527 = vpack.c.b16 %v3526, %v3525
      %3529 = vst [vmem:[#allocation3 + $0x30] sm:$0x33] %v3527
      %v3530 = vld [vmem:[#allocation2 + $0x2] sm:$0xff]
      %v3531 = vld [vmem:[#allocation2 + $0xa] sm:$0xff]
      %v3532 = vld [vmem:[#allocation2 + $0x1a] sm:$0xff]
      %v3533 = vld [vmem:[#allocation2 + $0x22] sm:$0xff]
      %v3534 = vld [vmem:[#allocation2 + $0x32] sm:$0xff]
      %v3535 = vld [vmem:[#allocation2 + $0x3a] sm:$0xff]
      %v3536 = vld [vmem:[#allocation2 + $0x4a] sm:$0xff]
      %v3537 = vld [vmem:[#allocation2 + $0x52] sm:$0xff]
      %3546 = vrot.lane.b32.xlu0 %v3530, 125
      %v3547 = vpop.permute.xlu0 %3546
      %3548 = vrot.lane.b32.xlu0 %v3531, 125
      %v3549 = vpop.permute.xlu0 %3548
      %3550 = vrot.lane.b32.xlu0 %v3532, 125
      %v3551 = vpop.permute.xlu0 %3550
      %3552 = vrot.lane.b32.xlu0 %v3533, 125
      %v3553 = vpop.permute.xlu0 %3552
      %3554 = vrot.lane.b32.xlu0 %v3534, 125
      %v3555 = vpop.permute.xlu0 %3554
      %3556 = vrot.lane.b32.xlu0 %v3535, 125
      %v3557 = vpop.permute.xlu0 %3556
      %3558 = vrot.lane.b32.xlu0 %v3536, 125
      %v3559 = vpop.permute.xlu0 %3558
      %3560 = vrot.lane.b32.xlu0 %v3537, 125
      %v3561 = vpop.permute.xlu0 %3560
      %v3570 = vcombine.low %v3547, %v3555
      %v3571 = vcombine.high %v3547, %v3555
      %v3573 = vunpack.c.l.s4 1983009808
      %v3574 = vunpack.c.0.s8 %v3573
      %v3575 = vlaneseq
      %v3576 = vshrl.u32 %v3575, 7
      %v3577 = vsub.s32 %v3574, %v3576
      %v3578 = vrot.slane %v3570, %v3577
      %v3580 = vunpack.c.l.s4 1983009808
      %v3581 = vunpack.c.0.s8 %v3580
      %v3582 = vlaneseq
      %v3583 = vshrl.u32 %v3582, 7
      %v3584 = vsub.s32 %v3581, %v3583
      %v3585 = vrot.slane %v3571, %v3584
      %v3586 = vcombine.low %v3551, %v3559
      %v3587 = vcombine.high %v3551, %v3559
      %v3589 = vunpack.c.l.s4 1983009808
      %v3590 = vunpack.c.0.s8 %v3589
      %v3591 = vlaneseq
      %v3592 = vshrl.u32 %v3591, 7
      %v3593 = vsub.s32 %v3590, %v3592
      %v3594 = vrot.slane %v3586, %v3593
      %v3596 = vunpack.c.l.s4 1983009808
      %v3597 = vunpack.c.0.s8 %v3596
      %v3598 = vlaneseq
      %v3599 = vshrl.u32 %v3598, 7
      %v3600 = vsub.s32 %v3597, %v3599
      %v3601 = vrot.slane %v3587, %v3600
      %v3602 = vcombine.low %v3578, %v3594
      %v3603 = vcombine.high %v3578, %v3594
      %v3605 = vunpack.c.l.s4 1934713408
      %v3606 = vunpack.c.0.s8 %v3605
      %v3607 = vlaneseq
      %v3608 = vshrl.u32 %v3607, 7
      %v3609 = vsub.s32 %v3606, %v3608
      %v3610 = vrot.slane %v3602, %v3609
      %v3612 = vunpack.c.l.s4 1934713408
      %v3613 = vunpack.c.0.s8 %v3612
      %v3614 = vlaneseq
      %v3615 = vshrl.u32 %v3614, 7
      %v3616 = vsub.s32 %v3613, %v3615
      %v3617 = vrot.slane %v3603, %v3616
      %v3618 = vcombine.low %v3585, %v3601
      %v3619 = vcombine.high %v3585, %v3601
      %v3621 = vunpack.c.l.s4 1934713408
      %v3622 = vunpack.c.0.s8 %v3621
      %v3623 = vlaneseq
      %v3624 = vshrl.u32 %v3623, 7
      %v3625 = vsub.s32 %v3622, %v3624
      %v3626 = vrot.slane %v3618, %v3625
      %v3628 = vunpack.c.l.s4 1934713408
      %v3629 = vunpack.c.0.s8 %v3628
      %v3630 = vlaneseq
      %v3631 = vshrl.u32 %v3630, 7
      %v3632 = vsub.s32 %v3629, %v3631
      %v3633 = vrot.slane %v3619, %v3632
      %v3634 = vcombine.high %v3610, 0.0
      %v3635 = vcombine.high %v3617, 0.0
      %v3636 = vcombine.high %v3626, 0.0
      %v3637 = vcombine.high %v3633, 0.0
      %v3638 = vcombine.low %v3549, %v3557
      %v3639 = vcombine.high %v3549, %v3557
      %v3641 = vunpack.c.l.s4 1983009808
      %v3642 = vunpack.c.0.s8 %v3641
      %v3643 = vlaneseq
      %v3644 = vshrl.u32 %v3643, 7
      %v3645 = vsub.s32 %v3642, %v3644
      %v3646 = vrot.slane %v3638, %v3645
      %v3648 = vunpack.c.l.s4 1983009808
      %v3649 = vunpack.c.0.s8 %v3648
      %v3650 = vlaneseq
      %v3651 = vshrl.u32 %v3650, 7
      %v3652 = vsub.s32 %v3649, %v3651
      %v3653 = vrot.slane %v3639, %v3652
      %v3654 = vcombine.low %v3553, %v3561
      %v3655 = vcombine.high %v3553, %v3561
      %v3657 = vunpack.c.l.s4 1983009808
      %v3658 = vunpack.c.0.s8 %v3657
      %v3659 = vlaneseq
      %v3660 = vshrl.u32 %v3659, 7
      %v3661 = vsub.s32 %v3658, %v3660
      %v3662 = vrot.slane %v3654, %v3661
      %v3664 = vunpack.c.l.s4 1983009808
      %v3665 = vunpack.c.0.s8 %v3664
      %v3666 = vlaneseq
      %v3667 = vshrl.u32 %v3666, 7
      %v3668 = vsub.s32 %v3665, %v3667
      %v3669 = vrot.slane %v3655, %v3668
      %v3670 = vcombine.low %v3646, %v3662
      %v3671 = vcombine.high %v3646, %v3662
      %v3673 = vunpack.c.l.s4 1934713408
      %v3674 = vunpack.c.0.s8 %v3673
      %v3675 = vlaneseq
      %v3676 = vshrl.u32 %v3675, 7
      %v3677 = vsub.s32 %v3674, %v3676
      %v3678 = vrot.slane %v3670, %v3677
      %v3680 = vunpack.c.l.s4 1934713408
      %v3681 = vunpack.c.0.s8 %v3680
      %v3682 = vlaneseq
      %v3683 = vshrl.u32 %v3682, 7
      %v3684 = vsub.s32 %v3681, %v3683
      %v3685 = vrot.slane %v3671, %v3684
      %v3686 = vcombine.low %v3653, %v3669
      %v3687 = vcombine.high %v3653, %v3669
      %v3689 = vunpack.c.l.s4 1934713408
      %v3690 = vunpack.c.0.s8 %v3689
      %v3691 = vlaneseq
      %v3692 = vshrl.u32 %v3691, 7
      %v3693 = vsub.s32 %v3690, %v3692
      %v3694 = vrot.slane %v3686, %v3693
      %v3696 = vunpack.c.l.s4 1934713408
      %v3697 = vunpack.c.0.s8 %v3696
      %v3698 = vlaneseq
      %v3699 = vshrl.u32 %v3698, 7
      %v3700 = vsub.s32 %v3697, %v3699
      %v3701 = vrot.slane %v3687, %v3700
      %v3702 = vcombine.high %v3678, 0.0
      %v3703 = vcombine.high %v3685, 0.0
      %v3704 = vcombine.high %v3694, 0.0
      %v3705 = vcombine.high %v3701, 0.0
      %3707 = vrot.lane.b32.xlu0 %v3634, 16
      %v3708 = vpop.permute.xlu0 %3707
      %3711 = vrot.lane.b32.xlu0 %v3617, 32
      %v3712 = vpop.permute.xlu0 %3711
      %3715 = vrot.lane.b32.xlu0 %v3635, 48
      %v3716 = vpop.permute.xlu0 %3715
      %3719 = vrot.lane.b32.xlu0 %v3626, 64
      %v3720 = vpop.permute.xlu0 %3719
      %3723 = vrot.lane.b32.xlu0 %v3636, 80
      %v3724 = vpop.permute.xlu0 %3723
      %3727 = vrot.lane.b32.xlu0 %v3633, 96
      %v3728 = vpop.permute.xlu0 %3727
      %3731 = vrot.lane.b32.xlu0 %v3637, 112
      %v3732 = vpop.permute.xlu0 %3731
      %3735 = vrot.lane.b32.xlu0 %v3702, 16
      %v3736 = vpop.permute.xlu0 %3735
      %3739 = vrot.lane.b32.xlu0 %v3685, 32
      %v3740 = vpop.permute.xlu0 %3739
      %3743 = vrot.lane.b32.xlu0 %v3703, 48
      %v3744 = vpop.permute.xlu0 %3743
      %3747 = vrot.lane.b32.xlu0 %v3694, 64
      %v3748 = vpop.permute.xlu0 %3747
      %3751 = vrot.lane.b32.xlu0 %v3704, 80
      %v3752 = vpop.permute.xlu0 %3751
      %3755 = vrot.lane.b32.xlu0 %v3701, 96
      %v3756 = vpop.permute.xlu0 %3755
      %3759 = vrot.lane.b32.xlu0 %v3705, 112
      %v3760 = vpop.permute.xlu0 %3759
      %v3762 = vsel %vm498, %v3610, %v3708
      %v3763 = vsel %vm500, %v3762, %v3712
      %v3764 = vsel %vm502, %v3763, %v3716
      %v3765 = vsel %vm504, %v3764, %v3720
      %v3766 = vsel %vm506, %v3765, %v3724
      %v3767 = vsel %vm508, %v3766, %v3728
      %v3768 = vsel %vm510, %v3767, %v3732
      %v3769 = vsel %vm498, %v3678, %v3736
      %v3770 = vsel %vm500, %v3769, %v3740
      %v3771 = vsel %vm502, %v3770, %v3744
      %v3772 = vsel %vm504, %v3771, %v3748
      %v3773 = vsel %vm506, %v3772, %v3752
      %v3774 = vsel %vm508, %v3773, %v3756
      %v3775 = vsel %vm510, %v3774, %v3760
      %v3776 = vpack.c.bf16 %v3768, %v3768
      %v3777 = vpack.c.bf16 %v3775, %v3775
      %v3780 = vunpack.c.l.b16 %v3776
      %v3781 = vunpack.c.l.b16 %v3777
      %v3782 = vpack.c.b16 %v3781, %v3780
      %v3783 = vrot.slane %v3782, 6
      %3785 = vst [vmem:[#allocation3 + $0x30] sm:$0xcc] %v3783
      %v3786 = vld [vmem:[#allocation2 + $0x2] sm:$0xff]
      %v3787 = vld [vmem:[#allocation2 + $0xa] sm:$0xff]
      %v3788 = vld [vmem:[#allocation2 + $0x1a] sm:$0xff]
      %v3789 = vld [vmem:[#allocation2 + $0x22] sm:$0xff]
      %v3790 = vld [vmem:[#allocation2 + $0x32] sm:$0xff]
      %v3791 = vld [vmem:[#allocation2 + $0x3a] sm:$0xff]
      %v3792 = vld [vmem:[#allocation2 + $0x4a] sm:$0xff]
      %v3793 = vld [vmem:[#allocation2 + $0x52] sm:$0xff]
      %3802 = vrot.lane.b32.xlu0 %v3786, 124
      %v3803 = vpop.permute.xlu0 %3802
      %3804 = vrot.lane.b32.xlu0 %v3787, 124
      %v3805 = vpop.permute.xlu0 %3804
      %3806 = vrot.lane.b32.xlu0 %v3788, 124
      %v3807 = vpop.permute.xlu0 %3806
      %3808 = vrot.lane.b32.xlu0 %v3789, 124
      %v3809 = vpop.permute.xlu0 %3808
      %3810 = vrot.lane.b32.xlu0 %v3790, 124
      %v3811 = vpop.permute.xlu0 %3810
      %3812 = vrot.lane.b32.xlu0 %v3791, 124
      %v3813 = vpop.permute.xlu0 %3812
      %3814 = vrot.lane.b32.xlu0 %v3792, 124
      %v3815 = vpop.permute.xlu0 %3814
      %3816 = vrot.lane.b32.xlu0 %v3793, 124
      %v3817 = vpop.permute.xlu0 %3816
      %v3826 = vcombine.low %v3803, %v3811
      %v3827 = vcombine.high %v3803, %v3811
      %v3829 = vunpack.c.l.s4 1983009808
      %v3830 = vunpack.c.0.s8 %v3829
      %v3831 = vlaneseq
      %v3832 = vshrl.u32 %v3831, 7
      %v3833 = vsub.s32 %v3830, %v3832
      %v3834 = vrot.slane %v3826, %v3833
      %v3836 = vunpack.c.l.s4 1983009808
      %v3837 = vunpack.c.0.s8 %v3836
      %v3838 = vlaneseq
      %v3839 = vshrl.u32 %v3838, 7
      %v3840 = vsub.s32 %v3837, %v3839
      %v3841 = vrot.slane %v3827, %v3840
      %v3842 = vcombine.low %v3807, %v3815
      %v3843 = vcombine.high %v3807, %v3815
      %v3845 = vunpack.c.l.s4 1983009808
      %v3846 = vunpack.c.0.s8 %v3845
      %v3847 = vlaneseq
      %v3848 = vshrl.u32 %v3847, 7
      %v3849 = vsub.s32 %v3846, %v3848
      %v3850 = vrot.slane %v3842, %v3849
      %v3852 = vunpack.c.l.s4 1983009808
      %v3853 = vunpack.c.0.s8 %v3852
      %v3854 = vlaneseq
      %v3855 = vshrl.u32 %v3854, 7
      %v3856 = vsub.s32 %v3853, %v3855
      %v3857 = vrot.slane %v3843, %v3856
      %v3858 = vcombine.low %v3834, %v3850
      %v3859 = vcombine.high %v3834, %v3850
      %v3861 = vunpack.c.l.s4 1934713408
      %v3862 = vunpack.c.0.s8 %v3861
      %v3863 = vlaneseq
      %v3864 = vshrl.u32 %v3863, 7
      %v3865 = vsub.s32 %v3862, %v3864
      %v3866 = vrot.slane %v3858, %v3865
      %v3868 = vunpack.c.l.s4 1934713408
      %v3869 = vunpack.c.0.s8 %v3868
      %v3870 = vlaneseq
      %v3871 = vshrl.u32 %v3870, 7
      %v3872 = vsub.s32 %v3869, %v3871
      %v3873 = vrot.slane %v3859, %v3872
      %v3874 = vcombine.low %v3841, %v3857
      %v3875 = vcombine.high %v3841, %v3857
      %v3877 = vunpack.c.l.s4 1934713408
      %v3878 = vunpack.c.0.s8 %v3877
      %v3879 = vlaneseq
      %v3880 = vshrl.u32 %v3879, 7
      %v3881 = vsub.s32 %v3878, %v3880
      %v3882 = vrot.slane %v3874, %v3881
      %v3884 = vunpack.c.l.s4 1934713408
      %v3885 = vunpack.c.0.s8 %v3884
      %v3886 = vlaneseq
      %v3887 = vshrl.u32 %v3886, 7
      %v3888 = vsub.s32 %v3885, %v3887
      %v3889 = vrot.slane %v3875, %v3888
      %v3890 = vcombine.high %v3866, 0.0
      %v3891 = vcombine.high %v3873, 0.0
      %v3892 = vcombine.high %v3882, 0.0
      %v3893 = vcombine.high %v3889, 0.0
      %v3894 = vcombine.low %v3805, %v3813
      %v3895 = vcombine.high %v3805, %v3813
      %v3897 = vunpack.c.l.s4 1983009808
      %v3898 = vunpack.c.0.s8 %v3897
      %v3899 = vlaneseq
      %v3900 = vshrl.u32 %v3899, 7
      %v3901 = vsub.s32 %v3898, %v3900
      %v3902 = vrot.slane %v3894, %v3901
      %v3904 = vunpack.c.l.s4 1983009808
      %v3905 = vunpack.c.0.s8 %v3904
      %v3906 = vlaneseq
      %v3907 = vshrl.u32 %v3906, 7
      %v3908 = vsub.s32 %v3905, %v3907
      %v3909 = vrot.slane %v3895, %v3908
      %v3910 = vcombine.low %v3809, %v3817
      %v3911 = vcombine.high %v3809, %v3817
      %v3913 = vunpack.c.l.s4 1983009808
      %v3914 = vunpack.c.0.s8 %v3913
      %v3915 = vlaneseq
      %v3916 = vshrl.u32 %v3915, 7
      %v3917 = vsub.s32 %v3914, %v3916
      %v3918 = vrot.slane %v3910, %v3917
      %v3920 = vunpack.c.l.s4 1983009808
      %v3921 = vunpack.c.0.s8 %v3920
      %v3922 = vlaneseq
      %v3923 = vshrl.u32 %v3922, 7
      %v3924 = vsub.s32 %v3921, %v3923
      %v3925 = vrot.slane %v3911, %v3924
      %v3926 = vcombine.low %v3902, %v3918
      %v3927 = vcombine.high %v3902, %v3918
      %v3929 = vunpack.c.l.s4 1934713408
      %v3930 = vunpack.c.0.s8 %v3929
      %v3931 = vlaneseq
      %v3932 = vshrl.u32 %v3931, 7
      %v3933 = vsub.s32 %v3930, %v3932
      %v3934 = vrot.slane %v3926, %v3933
      %v3936 = vunpack.c.l.s4 1934713408
      %v3937 = vunpack.c.0.s8 %v3936
      %v3938 = vlaneseq
      %v3939 = vshrl.u32 %v3938, 7
      %v3940 = vsub.s32 %v3937, %v3939
      %v3941 = vrot.slane %v3927, %v3940
      %v3942 = vcombine.low %v3909, %v3925
      %v3943 = vcombine.high %v3909, %v3925
      %v3945 = vunpack.c.l.s4 1934713408
      %v3946 = vunpack.c.0.s8 %v3945
      %v3947 = vlaneseq
      %v3948 = vshrl.u32 %v3947, 7
      %v3949 = vsub.s32 %v3946, %v3948
      %v3950 = vrot.slane %v3942, %v3949
      %v3952 = vunpack.c.l.s4 1934713408
      %v3953 = vunpack.c.0.s8 %v3952
      %v3954 = vlaneseq
      %v3955 = vshrl.u32 %v3954, 7
      %v3956 = vsub.s32 %v3953, %v3955
      %v3957 = vrot.slane %v3943, %v3956
      %v3958 = vcombine.high %v3934, 0.0
      %v3959 = vcombine.high %v3941, 0.0
      %v3960 = vcombine.high %v3950, 0.0
      %v3961 = vcombine.high %v3957, 0.0
      %3963 = vrot.lane.b32.xlu0 %v3890, 16
      %v3964 = vpop.permute.xlu0 %3963
      %3967 = vrot.lane.b32.xlu0 %v3873, 32
      %v3968 = vpop.permute.xlu0 %3967
      %3971 = vrot.lane.b32.xlu0 %v3891, 48
      %v3972 = vpop.permute.xlu0 %3971
      %3975 = vrot.lane.b32.xlu0 %v3882, 64
      %v3976 = vpop.permute.xlu0 %3975
      %3979 = vrot.lane.b32.xlu0 %v3892, 80
      %v3980 = vpop.permute.xlu0 %3979
      %3983 = vrot.lane.b32.xlu0 %v3889, 96
      %v3984 = vpop.permute.xlu0 %3983
      %3987 = vrot.lane.b32.xlu0 %v3893, 112
      %v3988 = vpop.permute.xlu0 %3987
      %3991 = vrot.lane.b32.xlu0 %v3958, 16
      %v3992 = vpop.permute.xlu0 %3991
      %3995 = vrot.lane.b32.xlu0 %v3941, 32
      %v3996 = vpop.permute.xlu0 %3995
      %3999 = vrot.lane.b32.xlu0 %v3959, 48
      %v4000 = vpop.permute.xlu0 %3999
      %4003 = vrot.lane.b32.xlu0 %v3950, 64
      %v4004 = vpop.permute.xlu0 %4003
      %4007 = vrot.lane.b32.xlu0 %v3960, 80
      %v4008 = vpop.permute.xlu0 %4007
      %4011 = vrot.lane.b32.xlu0 %v3957, 96
      %v4012 = vpop.permute.xlu0 %4011
      %4015 = vrot.lane.b32.xlu0 %v3961, 112
      %v4016 = vpop.permute.xlu0 %4015
      %v4018 = vsel %vm498, %v3866, %v3964
      %v4019 = vsel %vm500, %v4018, %v3968
      %v4020 = vsel %vm502, %v4019, %v3972
      %v4021 = vsel %vm504, %v4020, %v3976
      %v4022 = vsel %vm506, %v4021, %v3980
      %v4023 = vsel %vm508, %v4022, %v3984
      %v4024 = vsel %vm510, %v4023, %v3988
      %v4025 = vsel %vm498, %v3934, %v3992
      %v4026 = vsel %vm500, %v4025, %v3996
      %v4027 = vsel %vm502, %v4026, %v4000
      %v4028 = vsel %vm504, %v4027, %v4004
      %v4029 = vsel %vm506, %v4028, %v4008
      %v4030 = vsel %vm508, %v4029, %v4012
      %v4031 = vsel %vm510, %v4030, %v4016
      %v4032 = vpack.c.bf16 %v4024, %v4024
      %v4033 = vpack.c.bf16 %v4031, %v4031
      %v4036 = vunpack.c.l.b16 %v4032
      %v4037 = vunpack.c.l.b16 %v4033
      %v4038 = vpack.c.b16 %v4037, %v4036
      %4040 = vst [vmem:[#allocation3 + $0x38] sm:$0x33] %v4038
      %v4041 = vld [vmem:[#allocation2 + $0x3] sm:$0xff]
      %v4042 = vld [vmem:[#allocation2 + $0xb] sm:$0xff]
      %v4043 = vld [vmem:[#allocation2 + $0x1b] sm:$0xff]
      %v4044 = vld [vmem:[#allocation2 + $0x23] sm:$0xff]
      %v4045 = vld [vmem:[#allocation2 + $0x33] sm:$0xff]
      %v4046 = vld [vmem:[#allocation2 + $0x3b] sm:$0xff]
      %v4047 = vld [vmem:[#allocation2 + $0x4b] sm:$0xff]
      %v4048 = vld [vmem:[#allocation2 + $0x53] sm:$0xff]
      %v4049 = vcombine.low %v4041, %v4045
      %v4050 = vcombine.high %v4041, %v4045
      %v4052 = vunpack.c.l.s4 1983009808
      %v4053 = vunpack.c.0.s8 %v4052
      %v4054 = vlaneseq
      %v4055 = vshrl.u32 %v4054, 7
      %v4056 = vsub.s32 %v4053, %v4055
      %v4057 = vrot.slane %v4049, %v4056
      %v4059 = vunpack.c.l.s4 1983009808
      %v4060 = vunpack.c.0.s8 %v4059
      %v4061 = vlaneseq
      %v4062 = vshrl.u32 %v4061, 7
      %v4063 = vsub.s32 %v4060, %v4062
      %v4064 = vrot.slane %v4050, %v4063
      %v4065 = vcombine.low %v4043, %v4047
      %v4066 = vcombine.high %v4043, %v4047
      %v4068 = vunpack.c.l.s4 1983009808
      %v4069 = vunpack.c.0.s8 %v4068
      %v4070 = vlaneseq
      %v4071 = vshrl.u32 %v4070, 7
      %v4072 = vsub.s32 %v4069, %v4071
      %v4073 = vrot.slane %v4065, %v4072
      %v4075 = vunpack.c.l.s4 1983009808
      %v4076 = vunpack.c.0.s8 %v4075
      %v4077 = vlaneseq
      %v4078 = vshrl.u32 %v4077, 7
      %v4079 = vsub.s32 %v4076, %v4078
      %v4080 = vrot.slane %v4066, %v4079
      %v4081 = vcombine.low %v4057, %v4073
      %v4082 = vcombine.high %v4057, %v4073
      %v4084 = vunpack.c.l.s4 1934713408
      %v4085 = vunpack.c.0.s8 %v4084
      %v4086 = vlaneseq
      %v4087 = vshrl.u32 %v4086, 7
      %v4088 = vsub.s32 %v4085, %v4087
      %v4089 = vrot.slane %v4081, %v4088
      %v4091 = vunpack.c.l.s4 1934713408
      %v4092 = vunpack.c.0.s8 %v4091
      %v4093 = vlaneseq
      %v4094 = vshrl.u32 %v4093, 7
      %v4095 = vsub.s32 %v4092, %v4094
      %v4096 = vrot.slane %v4082, %v4095
      %v4097 = vcombine.low %v4064, %v4080
      %v4098 = vcombine.high %v4064, %v4080
      %v4100 = vunpack.c.l.s4 1934713408
      %v4101 = vunpack.c.0.s8 %v4100
      %v4102 = vlaneseq
      %v4103 = vshrl.u32 %v4102, 7
      %v4104 = vsub.s32 %v4101, %v4103
      %v4105 = vrot.slane %v4097, %v4104
      %v4107 = vunpack.c.l.s4 1934713408
      %v4108 = vunpack.c.0.s8 %v4107
      %v4109 = vlaneseq
      %v4110 = vshrl.u32 %v4109, 7
      %v4111 = vsub.s32 %v4108, %v4110
      %v4112 = vrot.slane %v4098, %v4111
      %v4113 = vcombine.high %v4089, 0.0
      %v4114 = vcombine.high %v4096, 0.0
      %v4115 = vcombine.high %v4105, 0.0
      %v4116 = vcombine.high %v4112, 0.0
      %v4117 = vcombine.low %v4042, %v4046
      %v4118 = vcombine.high %v4042, %v4046
      %v4120 = vunpack.c.l.s4 1983009808
      %v4121 = vunpack.c.0.s8 %v4120
      %v4122 = vlaneseq
      %v4123 = vshrl.u32 %v4122, 7
      %v4124 = vsub.s32 %v4121, %v4123
      %v4125 = vrot.slane %v4117, %v4124
      %v4127 = vunpack.c.l.s4 1983009808
      %v4128 = vunpack.c.0.s8 %v4127
      %v4129 = vlaneseq
      %v4130 = vshrl.u32 %v4129, 7
      %v4131 = vsub.s32 %v4128, %v4130
      %v4132 = vrot.slane %v4118, %v4131
      %v4133 = vcombine.low %v4044, %v4048
      %v4134 = vcombine.high %v4044, %v4048
      %v4136 = vunpack.c.l.s4 1983009808
      %v4137 = vunpack.c.0.s8 %v4136
      %v4138 = vlaneseq
      %v4139 = vshrl.u32 %v4138, 7
      %v4140 = vsub.s32 %v4137, %v4139
      %v4141 = vrot.slane %v4133, %v4140
      %v4143 = vunpack.c.l.s4 1983009808
      %v4144 = vunpack.c.0.s8 %v4143
      %v4145 = vlaneseq
      %v4146 = vshrl.u32 %v4145, 7
      %v4147 = vsub.s32 %v4144, %v4146
      %v4148 = vrot.slane %v4134, %v4147
      %v4149 = vcombine.low %v4125, %v4141
      %v4150 = vcombine.high %v4125, %v4141
      %v4152 = vunpack.c.l.s4 1934713408
      %v4153 = vunpack.c.0.s8 %v4152
      %v4154 = vlaneseq
      %v4155 = vshrl.u32 %v4154, 7
      %v4156 = vsub.s32 %v4153, %v4155
      %v4157 = vrot.slane %v4149, %v4156
      %v4159 = vunpack.c.l.s4 1934713408
      %v4160 = vunpack.c.0.s8 %v4159
      %v4161 = vlaneseq
      %v4162 = vshrl.u32 %v4161, 7
      %v4163 = vsub.s32 %v4160, %v4162
      %v4164 = vrot.slane %v4150, %v4163
      %v4165 = vcombine.low %v4132, %v4148
      %v4166 = vcombine.high %v4132, %v4148
      %v4168 = vunpack.c.l.s4 1934713408
      %v4169 = vunpack.c.0.s8 %v4168
      %v4170 = vlaneseq
      %v4171 = vshrl.u32 %v4170, 7
      %v4172 = vsub.s32 %v4169, %v4171
      %v4173 = vrot.slane %v4165, %v4172
      %v4175 = vunpack.c.l.s4 1934713408
      %v4176 = vunpack.c.0.s8 %v4175
      %v4177 = vlaneseq
      %v4178 = vshrl.u32 %v4177, 7
      %v4179 = vsub.s32 %v4176, %v4178
      %v4180 = vrot.slane %v4166, %v4179
      %v4181 = vcombine.high %v4157, 0.0
      %v4182 = vcombine.high %v4164, 0.0
      %v4183 = vcombine.high %v4173, 0.0
      %v4184 = vcombine.high %v4180, 0.0
      %4186 = vrot.lane.b32.xlu0 %v4113, 16
      %v4187 = vpop.permute.xlu0 %4186
      %4190 = vrot.lane.b32.xlu0 %v4096, 32
      %v4191 = vpop.permute.xlu0 %4190
      %4194 = vrot.lane.b32.xlu0 %v4114, 48
      %v4195 = vpop.permute.xlu0 %4194
      %4198 = vrot.lane.b32.xlu0 %v4105, 64
      %v4199 = vpop.permute.xlu0 %4198
      %4202 = vrot.lane.b32.xlu0 %v4115, 80
      %v4203 = vpop.permute.xlu0 %4202
      %4206 = vrot.lane.b32.xlu0 %v4112, 96
      %v4207 = vpop.permute.xlu0 %4206
      %4210 = vrot.lane.b32.xlu0 %v4116, 112
      %v4211 = vpop.permute.xlu0 %4210
      %4214 = vrot.lane.b32.xlu0 %v4181, 16
      %v4215 = vpop.permute.xlu0 %4214
      %4218 = vrot.lane.b32.xlu0 %v4164, 32
      %v4219 = vpop.permute.xlu0 %4218
      %4222 = vrot.lane.b32.xlu0 %v4182, 48
      %v4223 = vpop.permute.xlu0 %4222
      %4226 = vrot.lane.b32.xlu0 %v4173, 64
      %v4227 = vpop.permute.xlu0 %4226
      %4230 = vrot.lane.b32.xlu0 %v4183, 80
      %v4231 = vpop.permute.xlu0 %4230
      %4234 = vrot.lane.b32.xlu0 %v4180, 96
      %v4235 = vpop.permute.xlu0 %4234
      %4238 = vrot.lane.b32.xlu0 %v4184, 112
      %v4239 = vpop.permute.xlu0 %4238
      %v4241 = vsel %vm498, %v4089, %v4187
      %v4242 = vsel %vm500, %v4241, %v4191
      %v4243 = vsel %vm502, %v4242, %v4195
      %v4244 = vsel %vm504, %v4243, %v4199
      %v4245 = vsel %vm506, %v4244, %v4203
      %v4246 = vsel %vm508, %v4245, %v4207
      %v4247 = vsel %vm510, %v4246, %v4211
      %v4248 = vsel %vm498, %v4157, %v4215
      %v4249 = vsel %vm500, %v4248, %v4219
      %v4250 = vsel %vm502, %v4249, %v4223
      %v4251 = vsel %vm504, %v4250, %v4227
      %v4252 = vsel %vm506, %v4251, %v4231
      %v4253 = vsel %vm508, %v4252, %v4235
      %v4254 = vsel %vm510, %v4253, %v4239
      %v4255 = vpack.c.bf16 %v4247, %v4247
      %v4256 = vpack.c.bf16 %v4254, %v4254
      %v4259 = vunpack.c.l.b16 %v4255
      %v4260 = vunpack.c.l.b16 %v4256
      %v4261 = vpack.c.b16 %v4260, %v4259
      %v4262 = vrot.slane %v4261, 6
      %4264 = vst [vmem:[#allocation3 + $0x38] sm:$0xcc] %v4262
      %v4265 = vld [vmem:[#allocation2 + $0x3] sm:$0xff]
      %v4266 = vld [vmem:[#allocation2 + $0xb] sm:$0xff]
      %v4267 = vld [vmem:[#allocation2 + $0x1b] sm:$0xff]
      %v4268 = vld [vmem:[#allocation2 + $0x23] sm:$0xff]
      %v4269 = vld [vmem:[#allocation2 + $0x33] sm:$0xff]
      %v4270 = vld [vmem:[#allocation2 + $0x3b] sm:$0xff]
      %v4271 = vld [vmem:[#allocation2 + $0x4b] sm:$0xff]
      %v4272 = vld [vmem:[#allocation2 + $0x53] sm:$0xff]
      %4281 = vrot.lane.b32.xlu0 %v4265, 127
      %v4282 = vpop.permute.xlu0 %4281
      %4283 = vrot.lane.b32.xlu0 %v4266, 127
      %v4284 = vpop.permute.xlu0 %4283
      %4285 = vrot.lane.b32.xlu0 %v4267, 127
      %v4286 = vpop.permute.xlu0 %4285
      %4287 = vrot.lane.b32.xlu0 %v4268, 127
      %v4288 = vpop.permute.xlu0 %4287
      %4289 = vrot.lane.b32.xlu0 %v4269, 127
      %v4290 = vpop.permute.xlu0 %4289
      %4291 = vrot.lane.b32.xlu0 %v4270, 127
      %v4292 = vpop.permute.xlu0 %4291
      %4293 = vrot.lane.b32.xlu0 %v4271, 127
      %v4294 = vpop.permute.xlu0 %4293
      %4295 = vrot.lane.b32.xlu0 %v4272, 127
      %v4296 = vpop.permute.xlu0 %4295
      %v4305 = vcombine.low %v4282, %v4290
      %v4306 = vcombine.high %v4282, %v4290
      %v4308 = vunpack.c.l.s4 1983009808
      %v4309 = vunpack.c.0.s8 %v4308
      %v4310 = vlaneseq
      %v4311 = vshrl.u32 %v4310, 7
      %v4312 = vsub.s32 %v4309, %v4311
      %v4313 = vrot.slane %v4305, %v4312
      %v4315 = vunpack.c.l.s4 1983009808
      %v4316 = vunpack.c.0.s8 %v4315
      %v4317 = vlaneseq
      %v4318 = vshrl.u32 %v4317, 7
      %v4319 = vsub.s32 %v4316, %v4318
      %v4320 = vrot.slane %v4306, %v4319
      %v4321 = vcombine.low %v4286, %v4294
      %v4322 = vcombine.high %v4286, %v4294
      %v4324 = vunpack.c.l.s4 1983009808
      %v4325 = vunpack.c.0.s8 %v4324
      %v4326 = vlaneseq
      %v4327 = vshrl.u32 %v4326, 7
      %v4328 = vsub.s32 %v4325, %v4327
      %v4329 = vrot.slane %v4321, %v4328
      %v4331 = vunpack.c.l.s4 1983009808
      %v4332 = vunpack.c.0.s8 %v4331
      %v4333 = vlaneseq
      %v4334 = vshrl.u32 %v4333, 7
      %v4335 = vsub.s32 %v4332, %v4334
      %v4336 = vrot.slane %v4322, %v4335
      %v4337 = vcombine.low %v4313, %v4329
      %v4338 = vcombine.high %v4313, %v4329
      %v4340 = vunpack.c.l.s4 1934713408
      %v4341 = vunpack.c.0.s8 %v4340
      %v4342 = vlaneseq
      %v4343 = vshrl.u32 %v4342, 7
      %v4344 = vsub.s32 %v4341, %v4343
      %v4345 = vrot.slane %v4337, %v4344
      %v4347 = vunpack.c.l.s4 1934713408
      %v4348 = vunpack.c.0.s8 %v4347
      %v4349 = vlaneseq
      %v4350 = vshrl.u32 %v4349, 7
      %v4351 = vsub.s32 %v4348, %v4350
      %v4352 = vrot.slane %v4338, %v4351
      %v4353 = vcombine.low %v4320, %v4336
      %v4354 = vcombine.high %v4320, %v4336
      %v4356 = vunpack.c.l.s4 1934713408
      %v4357 = vunpack.c.0.s8 %v4356
      %v4358 = vlaneseq
      %v4359 = vshrl.u32 %v4358, 7
      %v4360 = vsub.s32 %v4357, %v4359
      %v4361 = vrot.slane %v4353, %v4360
      %v4363 = vunpack.c.l.s4 1934713408
      %v4364 = vunpack.c.0.s8 %v4363
      %v4365 = vlaneseq
      %v4366 = vshrl.u32 %v4365, 7
      %v4367 = vsub.s32 %v4364, %v4366
      %v4368 = vrot.slane %v4354, %v4367
      %v4369 = vcombine.high %v4345, 0.0
      %v4370 = vcombine.high %v4352, 0.0
      %v4371 = vcombine.high %v4361, 0.0
      %v4372 = vcombine.high %v4368, 0.0
      %v4373 = vcombine.low %v4284, %v4292
      %v4374 = vcombine.high %v4284, %v4292
      %v4376 = vunpack.c.l.s4 1983009808
      %v4377 = vunpack.c.0.s8 %v4376
      %v4378 = vlaneseq
      %v4379 = vshrl.u32 %v4378, 7
      %v4380 = vsub.s32 %v4377, %v4379
      %v4381 = vrot.slane %v4373, %v4380
      %v4383 = vunpack.c.l.s4 1983009808
      %v4384 = vunpack.c.0.s8 %v4383
      %v4385 = vlaneseq
      %v4386 = vshrl.u32 %v4385, 7
      %v4387 = vsub.s32 %v4384, %v4386
      %v4388 = vrot.slane %v4374, %v4387
      %v4389 = vcombine.low %v4288, %v4296
      %v4390 = vcombine.high %v4288, %v4296
      %v4392 = vunpack.c.l.s4 1983009808
      %v4393 = vunpack.c.0.s8 %v4392
      %v4394 = vlaneseq
      %v4395 = vshrl.u32 %v4394, 7
      %v4396 = vsub.s32 %v4393, %v4395
      %v4397 = vrot.slane %v4389, %v4396
      %v4399 = vunpack.c.l.s4 1983009808
      %v4400 = vunpack.c.0.s8 %v4399
      %v4401 = vlaneseq
      %v4402 = vshrl.u32 %v4401, 7
      %v4403 = vsub.s32 %v4400, %v4402
      %v4404 = vrot.slane %v4390, %v4403
      %v4405 = vcombine.low %v4381, %v4397
      %v4406 = vcombine.high %v4381, %v4397
      %v4408 = vunpack.c.l.s4 1934713408
      %v4409 = vunpack.c.0.s8 %v4408
      %v4410 = vlaneseq
      %v4411 = vshrl.u32 %v4410, 7
      %v4412 = vsub.s32 %v4409, %v4411
      %v4413 = vrot.slane %v4405, %v4412
      %v4415 = vunpack.c.l.s4 1934713408
      %v4416 = vunpack.c.0.s8 %v4415
      %v4417 = vlaneseq
      %v4418 = vshrl.u32 %v4417, 7
      %v4419 = vsub.s32 %v4416, %v4418
      %v4420 = vrot.slane %v4406, %v4419
      %v4421 = vcombine.low %v4388, %v4404
      %v4422 = vcombine.high %v4388, %v4404
      %v4424 = vunpack.c.l.s4 1934713408
      %v4425 = vunpack.c.0.s8 %v4424
      %v4426 = vlaneseq
      %v4427 = vshrl.u32 %v4426, 7
      %v4428 = vsub.s32 %v4425, %v4427
      %v4429 = vrot.slane %v4421, %v4428
      %v4431 = vunpack.c.l.s4 1934713408
      %v4432 = vunpack.c.0.s8 %v4431
      %v4433 = vlaneseq
      %v4434 = vshrl.u32 %v4433, 7
      %v4435 = vsub.s32 %v4432, %v4434
      %v4436 = vrot.slane %v4422, %v4435
      %v4437 = vcombine.high %v4413, 0.0
      %v4438 = vcombine.high %v4420, 0.0
      %v4439 = vcombine.high %v4429, 0.0
      %v4440 = vcombine.high %v4436, 0.0
      %4442 = vrot.lane.b32.xlu0 %v4369, 16
      %v4443 = vpop.permute.xlu0 %4442
      %4446 = vrot.lane.b32.xlu0 %v4352, 32
      %v4447 = vpop.permute.xlu0 %4446
      %4450 = vrot.lane.b32.xlu0 %v4370, 48
      %v4451 = vpop.permute.xlu0 %4450
      %4454 = vrot.lane.b32.xlu0 %v4361, 64
      %v4455 = vpop.permute.xlu0 %4454
      %4458 = vrot.lane.b32.xlu0 %v4371, 80
      %v4459 = vpop.permute.xlu0 %4458
      %4462 = vrot.lane.b32.xlu0 %v4368, 96
      %v4463 = vpop.permute.xlu0 %4462
      %4466 = vrot.lane.b32.xlu0 %v4372, 112
      %v4467 = vpop.permute.xlu0 %4466
      %4470 = vrot.lane.b32.xlu0 %v4437, 16
      %v4471 = vpop.permute.xlu0 %4470
      %4474 = vrot.lane.b32.xlu0 %v4420, 32
      %v4475 = vpop.permute.xlu0 %4474
      %4478 = vrot.lane.b32.xlu0 %v4438, 48
      %v4479 = vpop.permute.xlu0 %4478
      %4482 = vrot.lane.b32.xlu0 %v4429, 64
      %v4483 = vpop.permute.xlu0 %4482
      %4486 = vrot.lane.b32.xlu0 %v4439, 80
      %v4487 = vpop.permute.xlu0 %4486
      %4490 = vrot.lane.b32.xlu0 %v4436, 96
      %v4491 = vpop.permute.xlu0 %4490
      %4494 = vrot.lane.b32.xlu0 %v4440, 112
      %v4495 = vpop.permute.xlu0 %4494
      %v4497 = vsel %vm498, %v4345, %v4443
      %v4498 = vsel %vm500, %v4497, %v4447
      %v4499 = vsel %vm502, %v4498, %v4451
      %v4500 = vsel %vm504, %v4499, %v4455
      %v4501 = vsel %vm506, %v4500, %v4459
      %v4502 = vsel %vm508, %v4501, %v4463
      %v4503 = vsel %vm510, %v4502, %v4467
      %v4504 = vsel %vm498, %v4413, %v4471
      %v4505 = vsel %vm500, %v4504, %v4475
      %v4506 = vsel %vm502, %v4505, %v4479
      %v4507 = vsel %vm504, %v4506, %v4483
      %v4508 = vsel %vm506, %v4507, %v4487
      %v4509 = vsel %vm508, %v4508, %v4491
      %v4510 = vsel %vm510, %v4509, %v4495
      %v4511 = vpack.c.bf16 %v4503, %v4503
      %v4512 = vpack.c.bf16 %v4510, %v4510
      %v4515 = vunpack.c.l.b16 %v4511
      %v4516 = vunpack.c.l.b16 %v4512
      %v4517 = vpack.c.b16 %v4516, %v4515
      %4519 = vst [vmem:[#allocation3 + $0x40] sm:$0x33] %v4517
      %v4520 = vld [vmem:[#allocation2 + $0x3] sm:$0xff]
      %v4521 = vld [vmem:[#allocation2 + $0xb] sm:$0xff]
      %v4522 = vld [vmem:[#allocation2 + $0x1b] sm:$0xff]
      %v4523 = vld [vmem:[#allocation2 + $0x23] sm:$0xff]
      %v4524 = vld [vmem:[#allocation2 + $0x33] sm:$0xff]
      %v4525 = vld [vmem:[#allocation2 + $0x3b] sm:$0xff]
      %v4526 = vld [vmem:[#allocation2 + $0x4b] sm:$0xff]
      %v4527 = vld [vmem:[#allocation2 + $0x53] sm:$0xff]
      %4536 = vrot.lane.b32.xlu0 %v4520, 126
      %v4537 = vpop.permute.xlu0 %4536
      %4538 = vrot.lane.b32.xlu0 %v4521, 126
      %v4539 = vpop.permute.xlu0 %4538
      %4540 = vrot.lane.b32.xlu0 %v4522, 126
      %v4541 = vpop.permute.xlu0 %4540
      %4542 = vrot.lane.b32.xlu0 %v4523, 126
      %v4543 = vpop.permute.xlu0 %4542
      %4544 = vrot.lane.b32.xlu0 %v4524, 126
      %v4545 = vpop.permute.xlu0 %4544
      %4546 = vrot.lane.b32.xlu0 %v4525, 126
      %v4547 = vpop.permute.xlu0 %4546
      %4548 = vrot.lane.b32.xlu0 %v4526, 126
      %v4549 = vpop.permute.xlu0 %4548
      %4550 = vrot.lane.b32.xlu0 %v4527, 126
      %v4551 = vpop.permute.xlu0 %4550
      %v4560 = vcombine.low %v4537, %v4545
      %v4561 = vcombine.high %v4537, %v4545
      %v4563 = vunpack.c.l.s4 1983009808
      %v4564 = vunpack.c.0.s8 %v4563
      %v4565 = vlaneseq
      %v4566 = vshrl.u32 %v4565, 7
      %v4567 = vsub.s32 %v4564, %v4566
      %v4568 = vrot.slane %v4560, %v4567
      %v4570 = vunpack.c.l.s4 1983009808
      %v4571 = vunpack.c.0.s8 %v4570
      %v4572 = vlaneseq
      %v4573 = vshrl.u32 %v4572, 7
      %v4574 = vsub.s32 %v4571, %v4573
      %v4575 = vrot.slane %v4561, %v4574
      %v4576 = vcombine.low %v4541, %v4549
      %v4577 = vcombine.high %v4541, %v4549
      %v4579 = vunpack.c.l.s4 1983009808
      %v4580 = vunpack.c.0.s8 %v4579
      %v4581 = vlaneseq
      %v4582 = vshrl.u32 %v4581, 7
      %v4583 = vsub.s32 %v4580, %v4582
      %v4584 = vrot.slane %v4576, %v4583
      %v4586 = vunpack.c.l.s4 1983009808
      %v4587 = vunpack.c.0.s8 %v4586
      %v4588 = vlaneseq
      %v4589 = vshrl.u32 %v4588, 7
      %v4590 = vsub.s32 %v4587, %v4589
      %v4591 = vrot.slane %v4577, %v4590
      %v4592 = vcombine.low %v4568, %v4584
      %v4593 = vcombine.high %v4568, %v4584
      %v4595 = vunpack.c.l.s4 1934713408
      %v4596 = vunpack.c.0.s8 %v4595
      %v4597 = vlaneseq
      %v4598 = vshrl.u32 %v4597, 7
      %v4599 = vsub.s32 %v4596, %v4598
      %v4600 = vrot.slane %v4592, %v4599
      %v4602 = vunpack.c.l.s4 1934713408
      %v4603 = vunpack.c.0.s8 %v4602
      %v4604 = vlaneseq
      %v4605 = vshrl.u32 %v4604, 7
      %v4606 = vsub.s32 %v4603, %v4605
      %v4607 = vrot.slane %v4593, %v4606
      %v4608 = vcombine.low %v4575, %v4591
      %v4609 = vcombine.high %v4575, %v4591
      %v4611 = vunpack.c.l.s4 1934713408
      %v4612 = vunpack.c.0.s8 %v4611
      %v4613 = vlaneseq
      %v4614 = vshrl.u32 %v4613, 7
      %v4615 = vsub.s32 %v4612, %v4614
      %v4616 = vrot.slane %v4608, %v4615
      %v4618 = vunpack.c.l.s4 1934713408
      %v4619 = vunpack.c.0.s8 %v4618
      %v4620 = vlaneseq
      %v4621 = vshrl.u32 %v4620, 7
      %v4622 = vsub.s32 %v4619, %v4621
      %v4623 = vrot.slane %v4609, %v4622
      %v4624 = vcombine.high %v4600, 0.0
      %v4625 = vcombine.high %v4607, 0.0
      %v4626 = vcombine.high %v4616, 0.0
      %v4627 = vcombine.high %v4623, 0.0
      %v4628 = vcombine.low %v4539, %v4547
      %v4629 = vcombine.high %v4539, %v4547
      %v4631 = vunpack.c.l.s4 1983009808
      %v4632 = vunpack.c.0.s8 %v4631
      %v4633 = vlaneseq
      %v4634 = vshrl.u32 %v4633, 7
      %v4635 = vsub.s32 %v4632, %v4634
      %v4636 = vrot.slane %v4628, %v4635
      %v4638 = vunpack.c.l.s4 1983009808
      %v4639 = vunpack.c.0.s8 %v4638
      %v4640 = vlaneseq
      %v4641 = vshrl.u32 %v4640, 7
      %v4642 = vsub.s32 %v4639, %v4641
      %v4643 = vrot.slane %v4629, %v4642
      %v4644 = vcombine.low %v4543, %v4551
      %v4645 = vcombine.high %v4543, %v4551
      %v4647 = vunpack.c.l.s4 1983009808
      %v4648 = vunpack.c.0.s8 %v4647
      %v4649 = vlaneseq
      %v4650 = vshrl.u32 %v4649, 7
      %v4651 = vsub.s32 %v4648, %v4650
      %v4652 = vrot.slane %v4644, %v4651
      %v4654 = vunpack.c.l.s4 1983009808
      %v4655 = vunpack.c.0.s8 %v4654
      %v4656 = vlaneseq
      %v4657 = vshrl.u32 %v4656, 7
      %v4658 = vsub.s32 %v4655, %v4657
      %v4659 = vrot.slane %v4645, %v4658
      %v4660 = vcombine.low %v4636, %v4652
      %v4661 = vcombine.high %v4636, %v4652
      %v4663 = vunpack.c.l.s4 1934713408
      %v4664 = vunpack.c.0.s8 %v4663
      %v4665 = vlaneseq
      %v4666 = vshrl.u32 %v4665, 7
      %v4667 = vsub.s32 %v4664, %v4666
      %v4668 = vrot.slane %v4660, %v4667
      %v4670 = vunpack.c.l.s4 1934713408
      %v4671 = vunpack.c.0.s8 %v4670
      %v4672 = vlaneseq
      %v4673 = vshrl.u32 %v4672, 7
      %v4674 = vsub.s32 %v4671, %v4673
      %v4675 = vrot.slane %v4661, %v4674
      %v4676 = vcombine.low %v4643, %v4659
      %v4677 = vcombine.high %v4643, %v4659
      %v4679 = vunpack.c.l.s4 1934713408
      %v4680 = vunpack.c.0.s8 %v4679
      %v4681 = vlaneseq
      %v4682 = vshrl.u32 %v4681, 7
      %v4683 = vsub.s32 %v4680, %v4682
      %v4684 = vrot.slane %v4676, %v4683
      %v4686 = vunpack.c.l.s4 1934713408
      %v4687 = vunpack.c.0.s8 %v4686
      %v4688 = vlaneseq
      %v4689 = vshrl.u32 %v4688, 7
      %v4690 = vsub.s32 %v4687, %v4689
      %v4691 = vrot.slane %v4677, %v4690
      %v4692 = vcombine.high %v4668, 0.0
      %v4693 = vcombine.high %v4675, 0.0
      %v4694 = vcombine.high %v4684, 0.0
      %v4695 = vcombine.high %v4691, 0.0
      %4697 = vrot.lane.b32.xlu0 %v4624, 16
      %v4698 = vpop.permute.xlu0 %4697
      %4701 = vrot.lane.b32.xlu0 %v4607, 32
      %v4702 = vpop.permute.xlu0 %4701
      %4705 = vrot.lane.b32.xlu0 %v4625, 48
      %v4706 = vpop.permute.xlu0 %4705
      %4709 = vrot.lane.b32.xlu0 %v4616, 64
      %v4710 = vpop.permute.xlu0 %4709
      %4713 = vrot.lane.b32.xlu0 %v4626, 80
      %v4714 = vpop.permute.xlu0 %4713
      %4717 = vrot.lane.b32.xlu0 %v4623, 96
      %v4718 = vpop.permute.xlu0 %4717
      %4721 = vrot.lane.b32.xlu0 %v4627, 112
      %v4722 = vpop.permute.xlu0 %4721
      %4725 = vrot.lane.b32.xlu0 %v4692, 16
      %v4726 = vpop.permute.xlu0 %4725
      %4729 = vrot.lane.b32.xlu0 %v4675, 32
      %v4730 = vpop.permute.xlu0 %4729
      %4733 = vrot.lane.b32.xlu0 %v4693, 48
      %v4734 = vpop.permute.xlu0 %4733
      %4737 = vrot.lane.b32.xlu0 %v4684, 64
      %v4738 = vpop.permute.xlu0 %4737
      %4741 = vrot.lane.b32.xlu0 %v4694, 80
      %v4742 = vpop.permute.xlu0 %4741
      %4745 = vrot.lane.b32.xlu0 %v4691, 96
      %v4746 = vpop.permute.xlu0 %4745
      %4749 = vrot.lane.b32.xlu0 %v4695, 112
      %v4750 = vpop.permute.xlu0 %4749
      %v4752 = vsel %vm498, %v4600, %v4698
      %v4753 = vsel %vm500, %v4752, %v4702
      %v4754 = vsel %vm502, %v4753, %v4706
      %v4755 = vsel %vm504, %v4754, %v4710
      %v4756 = vsel %vm506, %v4755, %v4714
      %v4757 = vsel %vm508, %v4756, %v4718
      %v4758 = vsel %vm510, %v4757, %v4722
      %v4759 = vsel %vm498, %v4668, %v4726
      %v4760 = vsel %vm500, %v4759, %v4730
      %v4761 = vsel %vm502, %v4760, %v4734
      %v4762 = vsel %vm504, %v4761, %v4738
      %v4763 = vsel %vm506, %v4762, %v4742
      %v4764 = vsel %vm508, %v4763, %v4746
      %v4765 = vsel %vm510, %v4764, %v4750
      %v4766 = vpack.c.bf16 %v4758, %v4758
      %v4767 = vpack.c.bf16 %v4765, %v4765
      %v4770 = vunpack.c.l.b16 %v4766
      %v4771 = vunpack.c.l.b16 %v4767
      %v4772 = vpack.c.b16 %v4771, %v4770
      %v4773 = vrot.slane %v4772, 6
      %4775 = vst [vmem:[#allocation3 + $0x40] sm:$0xcc] %v4773
      %v4776 = vld [vmem:[#allocation2 + $0x3] sm:$0xff]
      %v4777 = vld [vmem:[#allocation2 + $0xb] sm:$0xff]
      %v4778 = vld [vmem:[#allocation2 + $0x1b] sm:$0xff]
      %v4779 = vld [vmem:[#allocation2 + $0x23] sm:$0xff]
      %v4780 = vld [vmem:[#allocation2 + $0x33] sm:$0xff]
      %v4781 = vld [vmem:[#allocation2 + $0x3b] sm:$0xff]
      %v4782 = vld [vmem:[#allocation2 + $0x4b] sm:$0xff]
      %v4783 = vld [vmem:[#allocation2 + $0x53] sm:$0xff]
      %4792 = vrot.lane.b32.xlu0 %v4776, 125
      %v4793 = vpop.permute.xlu0 %4792
      %4794 = vrot.lane.b32.xlu0 %v4777, 125
      %v4795 = vpop.permute.xlu0 %4794
      %4796 = vrot.lane.b32.xlu0 %v4778, 125
      %v4797 = vpop.permute.xlu0 %4796
      %4798 = vrot.lane.b32.xlu0 %v4779, 125
      %v4799 = vpop.permute.xlu0 %4798
      %4800 = vrot.lane.b32.xlu0 %v4780, 125
      %v4801 = vpop.permute.xlu0 %4800
      %4802 = vrot.lane.b32.xlu0 %v4781, 125
      %v4803 = vpop.permute.xlu0 %4802
      %4804 = vrot.lane.b32.xlu0 %v4782, 125
      %v4805 = vpop.permute.xlu0 %4804
      %4806 = vrot.lane.b32.xlu0 %v4783, 125
      %v4807 = vpop.permute.xlu0 %4806
      %v4816 = vcombine.low %v4793, %v4801
      %v4817 = vcombine.high %v4793, %v4801
      %v4819 = vunpack.c.l.s4 1983009808
      %v4820 = vunpack.c.0.s8 %v4819
      %v4821 = vlaneseq
      %v4822 = vshrl.u32 %v4821, 7
      %v4823 = vsub.s32 %v4820, %v4822
      %v4824 = vrot.slane %v4816, %v4823
      %v4826 = vunpack.c.l.s4 1983009808
      %v4827 = vunpack.c.0.s8 %v4826
      %v4828 = vlaneseq
      %v4829 = vshrl.u32 %v4828, 7
      %v4830 = vsub.s32 %v4827, %v4829
      %v4831 = vrot.slane %v4817, %v4830
      %v4832 = vcombine.low %v4797, %v4805
      %v4833 = vcombine.high %v4797, %v4805
      %v4835 = vunpack.c.l.s4 1983009808
      %v4836 = vunpack.c.0.s8 %v4835
      %v4837 = vlaneseq
      %v4838 = vshrl.u32 %v4837, 7
      %v4839 = vsub.s32 %v4836, %v4838
      %v4840 = vrot.slane %v4832, %v4839
      %v4842 = vunpack.c.l.s4 1983009808
      %v4843 = vunpack.c.0.s8 %v4842
      %v4844 = vlaneseq
      %v4845 = vshrl.u32 %v4844, 7
      %v4846 = vsub.s32 %v4843, %v4845
      %v4847 = vrot.slane %v4833, %v4846
      %v4848 = vcombine.low %v4824, %v4840
      %v4849 = vcombine.high %v4824, %v4840
      %v4851 = vunpack.c.l.s4 1934713408
      %v4852 = vunpack.c.0.s8 %v4851
      %v4853 = vlaneseq
      %v4854 = vshrl.u32 %v4853, 7
      %v4855 = vsub.s32 %v4852, %v4854
      %v4856 = vrot.slane %v4848, %v4855
      %v4858 = vunpack.c.l.s4 1934713408
      %v4859 = vunpack.c.0.s8 %v4858
      %v4860 = vlaneseq
      %v4861 = vshrl.u32 %v4860, 7
      %v4862 = vsub.s32 %v4859, %v4861
      %v4863 = vrot.slane %v4849, %v4862
      %v4864 = vcombine.low %v4831, %v4847
      %v4865 = vcombine.high %v4831, %v4847
      %v4867 = vunpack.c.l.s4 1934713408
      %v4868 = vunpack.c.0.s8 %v4867
      %v4869 = vlaneseq
      %v4870 = vshrl.u32 %v4869, 7
      %v4871 = vsub.s32 %v4868, %v4870
      %v4872 = vrot.slane %v4864, %v4871
      %v4874 = vunpack.c.l.s4 1934713408
      %v4875 = vunpack.c.0.s8 %v4874
      %v4876 = vlaneseq
      %v4877 = vshrl.u32 %v4876, 7
      %v4878 = vsub.s32 %v4875, %v4877
      %v4879 = vrot.slane %v4865, %v4878
      %v4880 = vcombine.high %v4856, 0.0
      %v4881 = vcombine.high %v4863, 0.0
      %v4882 = vcombine.high %v4872, 0.0
      %v4883 = vcombine.high %v4879, 0.0
      %v4884 = vcombine.low %v4795, %v4803
      %v4885 = vcombine.high %v4795, %v4803
      %v4887 = vunpack.c.l.s4 1983009808
      %v4888 = vunpack.c.0.s8 %v4887
      %v4889 = vlaneseq
      %v4890 = vshrl.u32 %v4889, 7
      %v4891 = vsub.s32 %v4888, %v4890
      %v4892 = vrot.slane %v4884, %v4891
      %v4894 = vunpack.c.l.s4 1983009808
      %v4895 = vunpack.c.0.s8 %v4894
      %v4896 = vlaneseq
      %v4897 = vshrl.u32 %v4896, 7
      %v4898 = vsub.s32 %v4895, %v4897
      %v4899 = vrot.slane %v4885, %v4898
      %v4900 = vcombine.low %v4799, %v4807
      %v4901 = vcombine.high %v4799, %v4807
      %v4903 = vunpack.c.l.s4 1983009808
      %v4904 = vunpack.c.0.s8 %v4903
      %v4905 = vlaneseq
      %v4906 = vshrl.u32 %v4905, 7
      %v4907 = vsub.s32 %v4904, %v4906
      %v4908 = vrot.slane %v4900, %v4907
      %v4910 = vunpack.c.l.s4 1983009808
      %v4911 = vunpack.c.0.s8 %v4910
      %v4912 = vlaneseq
      %v4913 = vshrl.u32 %v4912, 7
      %v4914 = vsub.s32 %v4911, %v4913
      %v4915 = vrot.slane %v4901, %v4914
      %v4916 = vcombine.low %v4892, %v4908
      %v4917 = vcombine.high %v4892, %v4908
      %v4919 = vunpack.c.l.s4 1934713408
      %v4920 = vunpack.c.0.s8 %v4919
      %v4921 = vlaneseq
      %v4922 = vshrl.u32 %v4921, 7
      %v4923 = vsub.s32 %v4920, %v4922
      %v4924 = vrot.slane %v4916, %v4923
      %v4926 = vunpack.c.l.s4 1934713408
      %v4927 = vunpack.c.0.s8 %v4926
      %v4928 = vlaneseq
      %v4929 = vshrl.u32 %v4928, 7
      %v4930 = vsub.s32 %v4927, %v4929
      %v4931 = vrot.slane %v4917, %v4930
      %v4932 = vcombine.low %v4899, %v4915
      %v4933 = vcombine.high %v4899, %v4915
      %v4935 = vunpack.c.l.s4 1934713408
      %v4936 = vunpack.c.0.s8 %v4935
      %v4937 = vlaneseq
      %v4938 = vshrl.u32 %v4937, 7
      %v4939 = vsub.s32 %v4936, %v4938
      %v4940 = vrot.slane %v4932, %v4939
      %v4942 = vunpack.c.l.s4 1934713408
      %v4943 = vunpack.c.0.s8 %v4942
      %v4944 = vlaneseq
      %v4945 = vshrl.u32 %v4944, 7
      %v4946 = vsub.s32 %v4943, %v4945
      %v4947 = vrot.slane %v4933, %v4946
      %v4948 = vcombine.high %v4924, 0.0
      %v4949 = vcombine.high %v4931, 0.0
      %v4950 = vcombine.high %v4940, 0.0
      %v4951 = vcombine.high %v4947, 0.0
      %4953 = vrot.lane.b32.xlu0 %v4880, 16
      %v4954 = vpop.permute.xlu0 %4953
      %4957 = vrot.lane.b32.xlu0 %v4863, 32
      %v4958 = vpop.permute.xlu0 %4957
      %4961 = vrot.lane.b32.xlu0 %v4881, 48
      %v4962 = vpop.permute.xlu0 %4961
      %4965 = vrot.lane.b32.xlu0 %v4872, 64
      %v4966 = vpop.permute.xlu0 %4965
      %4969 = vrot.lane.b32.xlu0 %v4882, 80
      %v4970 = vpop.permute.xlu0 %4969
      %4973 = vrot.lane.b32.xlu0 %v4879, 96
      %v4974 = vpop.permute.xlu0 %4973
      %4977 = vrot.lane.b32.xlu0 %v4883, 112
      %v4978 = vpop.permute.xlu0 %4977
      %4981 = vrot.lane.b32.xlu0 %v4948, 16
      %v4982 = vpop.permute.xlu0 %4981
      %4985 = vrot.lane.b32.xlu0 %v4931, 32
      %v4986 = vpop.permute.xlu0 %4985
      %4989 = vrot.lane.b32.xlu0 %v4949, 48
      %v4990 = vpop.permute.xlu0 %4989
      %4993 = vrot.lane.b32.xlu0 %v4940, 64
      %v4994 = vpop.permute.xlu0 %4993
      %4997 = vrot.lane.b32.xlu0 %v4950, 80
      %v4998 = vpop.permute.xlu0 %4997
      %5001 = vrot.lane.b32.xlu0 %v4947, 96
      %v5002 = vpop.permute.xlu0 %5001
      %5005 = vrot.lane.b32.xlu0 %v4951, 112
      %v5006 = vpop.permute.xlu0 %5005
      %v5008 = vsel %vm498, %v4856, %v4954
      %v5009 = vsel %vm500, %v5008, %v4958
      %v5010 = vsel %vm502, %v5009, %v4962
      %v5011 = vsel %vm504, %v5010, %v4966
      %v5012 = vsel %vm506, %v5011, %v4970
      %v5013 = vsel %vm508, %v5012, %v4974
      %v5014 = vsel %vm510, %v5013, %v4978
      %v5015 = vsel %vm498, %v4924, %v4982
      %v5016 = vsel %vm500, %v5015, %v4986
      %v5017 = vsel %vm502, %v5016, %v4990
      %v5018 = vsel %vm504, %v5017, %v4994
      %v5019 = vsel %vm506, %v5018, %v4998
      %v5020 = vsel %vm508, %v5019, %v5002
      %v5021 = vsel %vm510, %v5020, %v5006
      %v5022 = vpack.c.bf16 %v5014, %v5014
      %v5023 = vpack.c.bf16 %v5021, %v5021
      %v5026 = vunpack.c.l.b16 %v5022
      %v5027 = vunpack.c.l.b16 %v5023
      %v5028 = vpack.c.b16 %v5027, %v5026
      %5030 = vst [vmem:[#allocation3 + $0x48] sm:$0x33] %v5028
      %v5031 = vld [vmem:[#allocation2 + $0x3] sm:$0xff]
      %v5032 = vld [vmem:[#allocation2 + $0xb] sm:$0xff]
      %v5033 = vld [vmem:[#allocation2 + $0x1b] sm:$0xff]
      %v5034 = vld [vmem:[#allocation2 + $0x23] sm:$0xff]
      %v5035 = vld [vmem:[#allocation2 + $0x33] sm:$0xff]
      %v5036 = vld [vmem:[#allocation2 + $0x3b] sm:$0xff]
      %v5037 = vld [vmem:[#allocation2 + $0x4b] sm:$0xff]
      %v5038 = vld [vmem:[#allocation2 + $0x53] sm:$0xff]
      %5047 = vrot.lane.b32.xlu0 %v5031, 124
      %v5048 = vpop.permute.xlu0 %5047
      %5049 = vrot.lane.b32.xlu0 %v5032, 124
      %v5050 = vpop.permute.xlu0 %5049
      %5051 = vrot.lane.b32.xlu0 %v5033, 124
      %v5052 = vpop.permute.xlu0 %5051
      %5053 = vrot.lane.b32.xlu0 %v5034, 124
      %v5054 = vpop.permute.xlu0 %5053
      %5055 = vrot.lane.b32.xlu0 %v5035, 124
      %v5056 = vpop.permute.xlu0 %5055
      %5057 = vrot.lane.b32.xlu0 %v5036, 124
      %v5058 = vpop.permute.xlu0 %5057
      %5059 = vrot.lane.b32.xlu0 %v5037, 124
      %v5060 = vpop.permute.xlu0 %5059
      %5061 = vrot.lane.b32.xlu0 %v5038, 124
      %v5062 = vpop.permute.xlu0 %5061
      %v5071 = vcombine.low %v5048, %v5056
      %v5072 = vcombine.high %v5048, %v5056
      %v5074 = vunpack.c.l.s4 1983009808
      %v5075 = vunpack.c.0.s8 %v5074
      %v5076 = vlaneseq
      %v5077 = vshrl.u32 %v5076, 7
      %v5078 = vsub.s32 %v5075, %v5077
      %v5079 = vrot.slane %v5071, %v5078
      %v5081 = vunpack.c.l.s4 1983009808
      %v5082 = vunpack.c.0.s8 %v5081
      %v5083 = vlaneseq
      %v5084 = vshrl.u32 %v5083, 7
      %v5085 = vsub.s32 %v5082, %v5084
      %v5086 = vrot.slane %v5072, %v5085
      %v5087 = vcombine.low %v5052, %v5060
      %v5088 = vcombine.high %v5052, %v5060
      %v5090 = vunpack.c.l.s4 1983009808
      %v5091 = vunpack.c.0.s8 %v5090
      %v5092 = vlaneseq
      %v5093 = vshrl.u32 %v5092, 7
      %v5094 = vsub.s32 %v5091, %v5093
      %v5095 = vrot.slane %v5087, %v5094
      %v5097 = vunpack.c.l.s4 1983009808
      %v5098 = vunpack.c.0.s8 %v5097
      %v5099 = vlaneseq
      %v5100 = vshrl.u32 %v5099, 7
      %v5101 = vsub.s32 %v5098, %v5100
      %v5102 = vrot.slane %v5088, %v5101
      %v5103 = vcombine.low %v5079, %v5095
      %v5104 = vcombine.high %v5079, %v5095
      %v5106 = vunpack.c.l.s4 1934713408
      %v5107 = vunpack.c.0.s8 %v5106
      %v5108 = vlaneseq
      %v5109 = vshrl.u32 %v5108, 7
      %v5110 = vsub.s32 %v5107, %v5109
      %v5111 = vrot.slane %v5103, %v5110
      %v5113 = vunpack.c.l.s4 1934713408
      %v5114 = vunpack.c.0.s8 %v5113
      %v5115 = vlaneseq
      %v5116 = vshrl.u32 %v5115, 7
      %v5117 = vsub.s32 %v5114, %v5116
      %v5118 = vrot.slane %v5104, %v5117
      %v5119 = vcombine.low %v5086, %v5102
      %v5120 = vcombine.high %v5086, %v5102
      %v5122 = vunpack.c.l.s4 1934713408
      %v5123 = vunpack.c.0.s8 %v5122
      %v5124 = vlaneseq
      %v5125 = vshrl.u32 %v5124, 7
      %v5126 = vsub.s32 %v5123, %v5125
      %v5127 = vrot.slane %v5119, %v5126
      %v5129 = vunpack.c.l.s4 1934713408
      %v5130 = vunpack.c.0.s8 %v5129
      %v5131 = vlaneseq
      %v5132 = vshrl.u32 %v5131, 7
      %v5133 = vsub.s32 %v5130, %v5132
      %v5134 = vrot.slane %v5120, %v5133
      %v5135 = vcombine.high %v5111, 0.0
      %v5136 = vcombine.high %v5118, 0.0
      %v5137 = vcombine.high %v5127, 0.0
      %v5138 = vcombine.high %v5134, 0.0
      %v5139 = vcombine.low %v5050, %v5058
      %v5140 = vcombine.high %v5050, %v5058
      %v5142 = vunpack.c.l.s4 1983009808
      %v5143 = vunpack.c.0.s8 %v5142
      %v5144 = vlaneseq
      %v5145 = vshrl.u32 %v5144, 7
      %v5146 = vsub.s32 %v5143, %v5145
      %v5147 = vrot.slane %v5139, %v5146
      %v5149 = vunpack.c.l.s4 1983009808
      %v5150 = vunpack.c.0.s8 %v5149
      %v5151 = vlaneseq
      %v5152 = vshrl.u32 %v5151, 7
      %v5153 = vsub.s32 %v5150, %v5152
      %v5154 = vrot.slane %v5140, %v5153
      %v5155 = vcombine.low %v5054, %v5062
      %v5156 = vcombine.high %v5054, %v5062
      %v5158 = vunpack.c.l.s4 1983009808
      %v5159 = vunpack.c.0.s8 %v5158
      %v5160 = vlaneseq
      %v5161 = vshrl.u32 %v5160, 7
      %v5162 = vsub.s32 %v5159, %v5161
      %v5163 = vrot.slane %v5155, %v5162
      %v5165 = vunpack.c.l.s4 1983009808
      %v5166 = vunpack.c.0.s8 %v5165
      %v5167 = vlaneseq
      %v5168 = vshrl.u32 %v5167, 7
      %v5169 = vsub.s32 %v5166, %v5168
      %v5170 = vrot.slane %v5156, %v5169
      %v5171 = vcombine.low %v5147, %v5163
      %v5172 = vcombine.high %v5147, %v5163
      %v5174 = vunpack.c.l.s4 1934713408
      %v5175 = vunpack.c.0.s8 %v5174
      %v5176 = vlaneseq
      %v5177 = vshrl.u32 %v5176, 7
      %v5178 = vsub.s32 %v5175, %v5177
      %v5179 = vrot.slane %v5171, %v5178
      %v5181 = vunpack.c.l.s4 1934713408
      %v5182 = vunpack.c.0.s8 %v5181
      %v5183 = vlaneseq
      %v5184 = vshrl.u32 %v5183, 7
      %v5185 = vsub.s32 %v5182, %v5184
      %v5186 = vrot.slane %v5172, %v5185
      %v5187 = vcombine.low %v5154, %v5170
      %v5188 = vcombine.high %v5154, %v5170
      %v5190 = vunpack.c.l.s4 1934713408
      %v5191 = vunpack.c.0.s8 %v5190
      %v5192 = vlaneseq
      %v5193 = vshrl.u32 %v5192, 7
      %v5194 = vsub.s32 %v5191, %v5193
      %v5195 = vrot.slane %v5187, %v5194
      %v5197 = vunpack.c.l.s4 1934713408
      %v5198 = vunpack.c.0.s8 %v5197
      %v5199 = vlaneseq
      %v5200 = vshrl.u32 %v5199, 7
      %v5201 = vsub.s32 %v5198, %v5200
      %v5202 = vrot.slane %v5188, %v5201
      %v5203 = vcombine.high %v5179, 0.0
      %v5204 = vcombine.high %v5186, 0.0
      %v5205 = vcombine.high %v5195, 0.0
      %v5206 = vcombine.high %v5202, 0.0
      %5208 = vrot.lane.b32.xlu0 %v5135, 16
      %v5209 = vpop.permute.xlu0 %5208
      %5212 = vrot.lane.b32.xlu0 %v5118, 32
      %v5213 = vpop.permute.xlu0 %5212
      %5216 = vrot.lane.b32.xlu0 %v5136, 48
      %v5217 = vpop.permute.xlu0 %5216
      %5220 = vrot.lane.b32.xlu0 %v5127, 64
      %v5221 = vpop.permute.xlu0 %5220
      %5224 = vrot.lane.b32.xlu0 %v5137, 80
      %v5225 = vpop.permute.xlu0 %5224
      %5228 = vrot.lane.b32.xlu0 %v5134, 96
      %v5229 = vpop.permute.xlu0 %5228
      %5232 = vrot.lane.b32.xlu0 %v5138, 112
      %v5233 = vpop.permute.xlu0 %5232
      %5236 = vrot.lane.b32.xlu0 %v5203, 16
      %v5237 = vpop.permute.xlu0 %5236
      %5240 = vrot.lane.b32.xlu0 %v5186, 32
      %v5241 = vpop.permute.xlu0 %5240
      %5244 = vrot.lane.b32.xlu0 %v5204, 48
      %v5245 = vpop.permute.xlu0 %5244
      %5248 = vrot.lane.b32.xlu0 %v5195, 64
      %v5249 = vpop.permute.xlu0 %5248
      %5252 = vrot.lane.b32.xlu0 %v5205, 80
      %v5253 = vpop.permute.xlu0 %5252
      %5256 = vrot.lane.b32.xlu0 %v5202, 96
      %v5257 = vpop.permute.xlu0 %5256
      %5260 = vrot.lane.b32.xlu0 %v5206, 112
      %v5261 = vpop.permute.xlu0 %5260
      %v5263 = vsel %vm498, %v5111, %v5209
      %v5264 = vsel %vm500, %v5263, %v5213
      %v5265 = vsel %vm502, %v5264, %v5217
      %v5266 = vsel %vm504, %v5265, %v5221
      %v5267 = vsel %vm506, %v5266, %v5225
      %v5268 = vsel %vm508, %v5267, %v5229
      %v5269 = vsel %vm510, %v5268, %v5233
      %v5270 = vsel %vm498, %v5179, %v5237
      %v5271 = vsel %vm500, %v5270, %v5241
      %v5272 = vsel %vm502, %v5271, %v5245
      %v5273 = vsel %vm504, %v5272, %v5249
      %v5274 = vsel %vm506, %v5273, %v5253
      %v5275 = vsel %vm508, %v5274, %v5257
      %v5276 = vsel %vm510, %v5275, %v5261
      %v5277 = vpack.c.bf16 %v5269, %v5269
      %v5278 = vpack.c.bf16 %v5276, %v5276
      %v5281 = vunpack.c.l.b16 %v5277
      %v5282 = vunpack.c.l.b16 %v5278
      %v5283 = vpack.c.b16 %v5282, %v5281
      %v5284 = vrot.slane %v5283, 6
      %5286 = vst [vmem:[#allocation3 + $0x48] sm:$0xcc] %v5284
      %v5287 = vld [vmem:[#allocation2 + $0x4] sm:$0xff]
      %v5288 = vld [vmem:[#allocation2 + $0xc] sm:$0xff]
      %v5289 = vld [vmem:[#allocation2 + $0x1c] sm:$0xff]
      %v5290 = vld [vmem:[#allocation2 + $0x24] sm:$0xff]
      %v5291 = vld [vmem:[#allocation2 + $0x34] sm:$0xff]
      %v5292 = vld [vmem:[#allocation2 + $0x3c] sm:$0xff]
      %v5293 = vld [vmem:[#allocation2 + $0x4c] sm:$0xff]
      %v5294 = vld [vmem:[#allocation2 + $0x54] sm:$0xff]
      %v5295 = vcombine.low %v5287, %v5291
      %v5296 = vcombine.high %v5287, %v5291
      %v5298 = vunpack.c.l.s4 1983009808
      %v5299 = vunpack.c.0.s8 %v5298
      %v5300 = vlaneseq
      %v5301 = vshrl.u32 %v5300, 7
      %v5302 = vsub.s32 %v5299, %v5301
      %v5303 = vrot.slane %v5295, %v5302
      %v5305 = vunpack.c.l.s4 1983009808
      %v5306 = vunpack.c.0.s8 %v5305
      %v5307 = vlaneseq
      %v5308 = vshrl.u32 %v5307, 7
      %v5309 = vsub.s32 %v5306, %v5308
      %v5310 = vrot.slane %v5296, %v5309
      %v5311 = vcombine.low %v5289, %v5293
      %v5312 = vcombine.high %v5289, %v5293
      %v5314 = vunpack.c.l.s4 1983009808
      %v5315 = vunpack.c.0.s8 %v5314
      %v5316 = vlaneseq
      %v5317 = vshrl.u32 %v5316, 7
      %v5318 = vsub.s32 %v5315, %v5317
      %v5319 = vrot.slane %v5311, %v5318
      %v5321 = vunpack.c.l.s4 1983009808
      %v5322 = vunpack.c.0.s8 %v5321
      %v5323 = vlaneseq
      %v5324 = vshrl.u32 %v5323, 7
      %v5325 = vsub.s32 %v5322, %v5324
      %v5326 = vrot.slane %v5312, %v5325
      %v5327 = vcombine.low %v5303, %v5319
      %v5328 = vcombine.high %v5303, %v5319
      %v5330 = vunpack.c.l.s4 1934713408
      %v5331 = vunpack.c.0.s8 %v5330
      %v5332 = vlaneseq
      %v5333 = vshrl.u32 %v5332, 7
      %v5334 = vsub.s32 %v5331, %v5333
      %v5335 = vrot.slane %v5327, %v5334
      %v5337 = vunpack.c.l.s4 1934713408
      %v5338 = vunpack.c.0.s8 %v5337
      %v5339 = vlaneseq
      %v5340 = vshrl.u32 %v5339, 7
      %v5341 = vsub.s32 %v5338, %v5340
      %v5342 = vrot.slane %v5328, %v5341
      %v5343 = vcombine.low %v5310, %v5326
      %v5344 = vcombine.high %v5310, %v5326
      %v5346 = vunpack.c.l.s4 1934713408
      %v5347 = vunpack.c.0.s8 %v5346
      %v5348 = vlaneseq
      %v5349 = vshrl.u32 %v5348, 7
      %v5350 = vsub.s32 %v5347, %v5349
      %v5351 = vrot.slane %v5343, %v5350
      %v5353 = vunpack.c.l.s4 1934713408
      %v5354 = vunpack.c.0.s8 %v5353
      %v5355 = vlaneseq
      %v5356 = vshrl.u32 %v5355, 7
      %v5357 = vsub.s32 %v5354, %v5356
      %v5358 = vrot.slane %v5344, %v5357
      %v5359 = vcombine.high %v5335, 0.0
      %v5360 = vcombine.high %v5342, 0.0
      %v5361 = vcombine.high %v5351, 0.0
      %v5362 = vcombine.high %v5358, 0.0
      %v5363 = vcombine.low %v5288, %v5292
      %v5364 = vcombine.high %v5288, %v5292
      %v5366 = vunpack.c.l.s4 1983009808
      %v5367 = vunpack.c.0.s8 %v5366
      %v5368 = vlaneseq
      %v5369 = vshrl.u32 %v5368, 7
      %v5370 = vsub.s32 %v5367, %v5369
      %v5371 = vrot.slane %v5363, %v5370
      %v5373 = vunpack.c.l.s4 1983009808
      %v5374 = vunpack.c.0.s8 %v5373
      %v5375 = vlaneseq
      %v5376 = vshrl.u32 %v5375, 7
      %v5377 = vsub.s32 %v5374, %v5376
      %v5378 = vrot.slane %v5364, %v5377
      %v5379 = vcombine.low %v5290, %v5294
      %v5380 = vcombine.high %v5290, %v5294
      %v5382 = vunpack.c.l.s4 1983009808
      %v5383 = vunpack.c.0.s8 %v5382
      %v5384 = vlaneseq
      %v5385 = vshrl.u32 %v5384, 7
      %v5386 = vsub.s32 %v5383, %v5385
      %v5387 = vrot.slane %v5379, %v5386
      %v5389 = vunpack.c.l.s4 1983009808
      %v5390 = vunpack.c.0.s8 %v5389
      %v5391 = vlaneseq
      %v5392 = vshrl.u32 %v5391, 7
      %v5393 = vsub.s32 %v5390, %v5392
      %v5394 = vrot.slane %v5380, %v5393
      %v5395 = vcombine.low %v5371, %v5387
      %v5396 = vcombine.high %v5371, %v5387
      %v5398 = vunpack.c.l.s4 1934713408
      %v5399 = vunpack.c.0.s8 %v5398
      %v5400 = vlaneseq
      %v5401 = vshrl.u32 %v5400, 7
      %v5402 = vsub.s32 %v5399, %v5401
      %v5403 = vrot.slane %v5395, %v5402
      %v5405 = vunpack.c.l.s4 1934713408
      %v5406 = vunpack.c.0.s8 %v5405
      %v5407 = vlaneseq
      %v5408 = vshrl.u32 %v5407, 7
      %v5409 = vsub.s32 %v5406, %v5408
      %v5410 = vrot.slane %v5396, %v5409
      %v5411 = vcombine.low %v5378, %v5394
      %v5412 = vcombine.high %v5378, %v5394
      %v5414 = vunpack.c.l.s4 1934713408
      %v5415 = vunpack.c.0.s8 %v5414
      %v5416 = vlaneseq
      %v5417 = vshrl.u32 %v5416, 7
      %v5418 = vsub.s32 %v5415, %v5417
      %v5419 = vrot.slane %v5411, %v5418
      %v5421 = vunpack.c.l.s4 1934713408
      %v5422 = vunpack.c.0.s8 %v5421
      %v5423 = vlaneseq
      %v5424 = vshrl.u32 %v5423, 7
      %v5425 = vsub.s32 %v5422, %v5424
      %v5426 = vrot.slane %v5412, %v5425
      %v5427 = vcombine.high %v5403, 0.0
      %v5428 = vcombine.high %v5410, 0.0
      %v5429 = vcombine.high %v5419, 0.0
      %v5430 = vcombine.high %v5426, 0.0
      %5432 = vrot.lane.b32.xlu0 %v5359, 16
      %v5433 = vpop.permute.xlu0 %5432
      %5436 = vrot.lane.b32.xlu0 %v5342, 32
      %v5437 = vpop.permute.xlu0 %5436
      %5440 = vrot.lane.b32.xlu0 %v5360, 48
      %v5441 = vpop.permute.xlu0 %5440
      %5444 = vrot.lane.b32.xlu0 %v5351, 64
      %v5445 = vpop.permute.xlu0 %5444
      %5448 = vrot.lane.b32.xlu0 %v5361, 80
      %v5449 = vpop.permute.xlu0 %5448
      %5452 = vrot.lane.b32.xlu0 %v5358, 96
      %v5453 = vpop.permute.xlu0 %5452
      %5456 = vrot.lane.b32.xlu0 %v5362, 112
      %v5457 = vpop.permute.xlu0 %5456
      %5460 = vrot.lane.b32.xlu0 %v5427, 16
      %v5461 = vpop.permute.xlu0 %5460
      %5464 = vrot.lane.b32.xlu0 %v5410, 32
      %v5465 = vpop.permute.xlu0 %5464
      %5468 = vrot.lane.b32.xlu0 %v5428, 48
      %v5469 = vpop.permute.xlu0 %5468
      %5472 = vrot.lane.b32.xlu0 %v5419, 64
      %v5473 = vpop.permute.xlu0 %5472
      %5476 = vrot.lane.b32.xlu0 %v5429, 80
      %v5477 = vpop.permute.xlu0 %5476
      %5480 = vrot.lane.b32.xlu0 %v5426, 96
      %v5481 = vpop.permute.xlu0 %5480
      %5484 = vrot.lane.b32.xlu0 %v5430, 112
      %v5485 = vpop.permute.xlu0 %5484
      %v5487 = vsel %vm498, %v5335, %v5433
      %v5488 = vsel %vm500, %v5487, %v5437
      %v5489 = vsel %vm502, %v5488, %v5441
      %v5490 = vsel %vm504, %v5489, %v5445
      %v5491 = vsel %vm506, %v5490, %v5449
      %v5492 = vsel %vm508, %v5491, %v5453
      %v5493 = vsel %vm510, %v5492, %v5457
      %v5494 = vsel %vm498, %v5403, %v5461
      %v5495 = vsel %vm500, %v5494, %v5465
      %v5496 = vsel %vm502, %v5495, %v5469
      %v5497 = vsel %vm504, %v5496, %v5473
      %v5498 = vsel %vm506, %v5497, %v5477
      %v5499 = vsel %vm508, %v5498, %v5481
      %v5500 = vsel %vm510, %v5499, %v5485
      %v5501 = vpack.c.bf16 %v5493, %v5493
      %v5502 = vpack.c.bf16 %v5500, %v5500
      %v5505 = vunpack.c.l.b16 %v5501
      %v5506 = vunpack.c.l.b16 %v5502
      %v5507 = vpack.c.b16 %v5506, %v5505
      %5509 = vst [vmem:[#allocation3 + $0x50] sm:$0x33] %v5507
      %v5510 = vld [vmem:[#allocation2 + $0x4] sm:$0xff]
      %v5511 = vld [vmem:[#allocation2 + $0xc] sm:$0xff]
      %v5512 = vld [vmem:[#allocation2 + $0x1c] sm:$0xff]
      %v5513 = vld [vmem:[#allocation2 + $0x24] sm:$0xff]
      %v5514 = vld [vmem:[#allocation2 + $0x34] sm:$0xff]
      %v5515 = vld [vmem:[#allocation2 + $0x3c] sm:$0xff]
      %v5516 = vld [vmem:[#allocation2 + $0x4c] sm:$0xff]
      %v5517 = vld [vmem:[#allocation2 + $0x54] sm:$0xff]
      %5526 = vrot.lane.b32.xlu0 %v5510, 127
      %v5527 = vpop.permute.xlu0 %5526
      %5528 = vrot.lane.b32.xlu0 %v5511, 127
      %v5529 = vpop.permute.xlu0 %5528
      %5530 = vrot.lane.b32.xlu0 %v5512, 127
      %v5531 = vpop.permute.xlu0 %5530
      %5532 = vrot.lane.b32.xlu0 %v5513, 127
      %v5533 = vpop.permute.xlu0 %5532
      %5534 = vrot.lane.b32.xlu0 %v5514, 127
      %v5535 = vpop.permute.xlu0 %5534
      %5536 = vrot.lane.b32.xlu0 %v5515, 127
      %v5537 = vpop.permute.xlu0 %5536
      %5538 = vrot.lane.b32.xlu0 %v5516, 127
      %v5539 = vpop.permute.xlu0 %5538
      %5540 = vrot.lane.b32.xlu0 %v5517, 127
      %v5541 = vpop.permute.xlu0 %5540
      %v5550 = vcombine.low %v5527, %v5535
      %v5551 = vcombine.high %v5527, %v5535
      %v5553 = vunpack.c.l.s4 1983009808
      %v5554 = vunpack.c.0.s8 %v5553
      %v5555 = vlaneseq
      %v5556 = vshrl.u32 %v5555, 7
      %v5557 = vsub.s32 %v5554, %v5556
      %v5558 = vrot.slane %v5550, %v5557
      %v5560 = vunpack.c.l.s4 1983009808
      %v5561 = vunpack.c.0.s8 %v5560
      %v5562 = vlaneseq
      %v5563 = vshrl.u32 %v5562, 7
      %v5564 = vsub.s32 %v5561, %v5563
      %v5565 = vrot.slane %v5551, %v5564
      %v5566 = vcombine.low %v5531, %v5539
      %v5567 = vcombine.high %v5531, %v5539
      %v5569 = vunpack.c.l.s4 1983009808
      %v5570 = vunpack.c.0.s8 %v5569
      %v5571 = vlaneseq
      %v5572 = vshrl.u32 %v5571, 7
      %v5573 = vsub.s32 %v5570, %v5572
      %v5574 = vrot.slane %v5566, %v5573
      %v5576 = vunpack.c.l.s4 1983009808
      %v5577 = vunpack.c.0.s8 %v5576
      %v5578 = vlaneseq
      %v5579 = vshrl.u32 %v5578, 7
      %v5580 = vsub.s32 %v5577, %v5579
      %v5581 = vrot.slane %v5567, %v5580
      %v5582 = vcombine.low %v5558, %v5574
      %v5583 = vcombine.high %v5558, %v5574
      %v5585 = vunpack.c.l.s4 1934713408
      %v5586 = vunpack.c.0.s8 %v5585
      %v5587 = vlaneseq
      %v5588 = vshrl.u32 %v5587, 7
      %v5589 = vsub.s32 %v5586, %v5588
      %v5590 = vrot.slane %v5582, %v5589
      %v5592 = vunpack.c.l.s4 1934713408
      %v5593 = vunpack.c.0.s8 %v5592
      %v5594 = vlaneseq
      %v5595 = vshrl.u32 %v5594, 7
      %v5596 = vsub.s32 %v5593, %v5595
      %v5597 = vrot.slane %v5583, %v5596
      %v5598 = vcombine.low %v5565, %v5581
      %v5599 = vcombine.high %v5565, %v5581
      %v5601 = vunpack.c.l.s4 1934713408
      %v5602 = vunpack.c.0.s8 %v5601
      %v5603 = vlaneseq
      %v5604 = vshrl.u32 %v5603, 7
      %v5605 = vsub.s32 %v5602, %v5604
      %v5606 = vrot.slane %v5598, %v5605
      %v5608 = vunpack.c.l.s4 1934713408
      %v5609 = vunpack.c.0.s8 %v5608
      %v5610 = vlaneseq
      %v5611 = vshrl.u32 %v5610, 7
      %v5612 = vsub.s32 %v5609, %v5611
      %v5613 = vrot.slane %v5599, %v5612
      %v5614 = vcombine.high %v5590, 0.0
      %v5615 = vcombine.high %v5597, 0.0
      %v5616 = vcombine.high %v5606, 0.0
      %v5617 = vcombine.high %v5613, 0.0
      %v5618 = vcombine.low %v5529, %v5537
      %v5619 = vcombine.high %v5529, %v5537
      %v5621 = vunpack.c.l.s4 1983009808
      %v5622 = vunpack.c.0.s8 %v5621
      %v5623 = vlaneseq
      %v5624 = vshrl.u32 %v5623, 7
      %v5625 = vsub.s32 %v5622, %v5624
      %v5626 = vrot.slane %v5618, %v5625
      %v5628 = vunpack.c.l.s4 1983009808
      %v5629 = vunpack.c.0.s8 %v5628
      %v5630 = vlaneseq
      %v5631 = vshrl.u32 %v5630, 7
      %v5632 = vsub.s32 %v5629, %v5631
      %v5633 = vrot.slane %v5619, %v5632
      %v5634 = vcombine.low %v5533, %v5541
      %v5635 = vcombine.high %v5533, %v5541
      %v5637 = vunpack.c.l.s4 1983009808
      %v5638 = vunpack.c.0.s8 %v5637
      %v5639 = vlaneseq
      %v5640 = vshrl.u32 %v5639, 7
      %v5641 = vsub.s32 %v5638, %v5640
      %v5642 = vrot.slane %v5634, %v5641
      %v5644 = vunpack.c.l.s4 1983009808
      %v5645 = vunpack.c.0.s8 %v5644
      %v5646 = vlaneseq
      %v5647 = vshrl.u32 %v5646, 7
      %v5648 = vsub.s32 %v5645, %v5647
      %v5649 = vrot.slane %v5635, %v5648
      %v5650 = vcombine.low %v5626, %v5642
      %v5651 = vcombine.high %v5626, %v5642
      %v5653 = vunpack.c.l.s4 1934713408
      %v5654 = vunpack.c.0.s8 %v5653
      %v5655 = vlaneseq
      %v5656 = vshrl.u32 %v5655, 7
      %v5657 = vsub.s32 %v5654, %v5656
      %v5658 = vrot.slane %v5650, %v5657
      %v5660 = vunpack.c.l.s4 1934713408
      %v5661 = vunpack.c.0.s8 %v5660
      %v5662 = vlaneseq
      %v5663 = vshrl.u32 %v5662, 7
      %v5664 = vsub.s32 %v5661, %v5663
      %v5665 = vrot.slane %v5651, %v5664
      %v5666 = vcombine.low %v5633, %v5649
      %v5667 = vcombine.high %v5633, %v5649
      %v5669 = vunpack.c.l.s4 1934713408
      %v5670 = vunpack.c.0.s8 %v5669
      %v5671 = vlaneseq
      %v5672 = vshrl.u32 %v5671, 7
      %v5673 = vsub.s32 %v5670, %v5672
      %v5674 = vrot.slane %v5666, %v5673
      %v5676 = vunpack.c.l.s4 1934713408
      %v5677 = vunpack.c.0.s8 %v5676
      %v5678 = vlaneseq
      %v5679 = vshrl.u32 %v5678, 7
      %v5680 = vsub.s32 %v5677, %v5679
      %v5681 = vrot.slane %v5667, %v5680
      %v5682 = vcombine.high %v5658, 0.0
      %v5683 = vcombine.high %v5665, 0.0
      %v5684 = vcombine.high %v5674, 0.0
      %v5685 = vcombine.high %v5681, 0.0
      %5687 = vrot.lane.b32.xlu0 %v5614, 16
      %v5688 = vpop.permute.xlu0 %5687
      %5691 = vrot.lane.b32.xlu0 %v5597, 32
      %v5692 = vpop.permute.xlu0 %5691
      %5695 = vrot.lane.b32.xlu0 %v5615, 48
      %v5696 = vpop.permute.xlu0 %5695
      %5699 = vrot.lane.b32.xlu0 %v5606, 64
      %v5700 = vpop.permute.xlu0 %5699
      %5703 = vrot.lane.b32.xlu0 %v5616, 80
      %v5704 = vpop.permute.xlu0 %5703
      %5707 = vrot.lane.b32.xlu0 %v5613, 96
      %v5708 = vpop.permute.xlu0 %5707
      %5711 = vrot.lane.b32.xlu0 %v5617, 112
      %v5712 = vpop.permute.xlu0 %5711
      %5715 = vrot.lane.b32.xlu0 %v5682, 16
      %v5716 = vpop.permute.xlu0 %5715
      %5719 = vrot.lane.b32.xlu0 %v5665, 32
      %v5720 = vpop.permute.xlu0 %5719
      %5723 = vrot.lane.b32.xlu0 %v5683, 48
      %v5724 = vpop.permute.xlu0 %5723
      %5727 = vrot.lane.b32.xlu0 %v5674, 64
      %v5728 = vpop.permute.xlu0 %5727
      %5731 = vrot.lane.b32.xlu0 %v5684, 80
      %v5732 = vpop.permute.xlu0 %5731
      %5735 = vrot.lane.b32.xlu0 %v5681, 96
      %v5736 = vpop.permute.xlu0 %5735
      %5739 = vrot.lane.b32.xlu0 %v5685, 112
      %v5740 = vpop.permute.xlu0 %5739
      %v5742 = vsel %vm498, %v5590, %v5688
      %v5743 = vsel %vm500, %v5742, %v5692
      %v5744 = vsel %vm502, %v5743, %v5696
      %v5745 = vsel %vm504, %v5744, %v5700
      %v5746 = vsel %vm506, %v5745, %v5704
      %v5747 = vsel %vm508, %v5746, %v5708
      %v5748 = vsel %vm510, %v5747, %v5712
      %v5749 = vsel %vm498, %v5658, %v5716
      %v5750 = vsel %vm500, %v5749, %v5720
      %v5751 = vsel %vm502, %v5750, %v5724
      %v5752 = vsel %vm504, %v5751, %v5728
      %v5753 = vsel %vm506, %v5752, %v5732
      %v5754 = vsel %vm508, %v5753, %v5736
      %v5755 = vsel %vm510, %v5754, %v5740
      %v5756 = vpack.c.bf16 %v5748, %v5748
      %v5757 = vpack.c.bf16 %v5755, %v5755
      %v5760 = vunpack.c.l.b16 %v5756
      %v5761 = vunpack.c.l.b16 %v5757
      %v5762 = vpack.c.b16 %v5761, %v5760
      %v5763 = vrot.slane %v5762, 6
      %5765 = vst [vmem:[#allocation3 + $0x50] sm:$0xcc] %v5763
      %v5766 = vld [vmem:[#allocation2 + $0x4] sm:$0xff]
      %v5767 = vld [vmem:[#allocation2 + $0xc] sm:$0xff]
      %v5768 = vld [vmem:[#allocation2 + $0x1c] sm:$0xff]
      %v5769 = vld [vmem:[#allocation2 + $0x24] sm:$0xff]
      %v5770 = vld [vmem:[#allocation2 + $0x34] sm:$0xff]
      %v5771 = vld [vmem:[#allocation2 + $0x3c] sm:$0xff]
      %v5772 = vld [vmem:[#allocation2 + $0x4c] sm:$0xff]
      %v5773 = vld [vmem:[#allocation2 + $0x54] sm:$0xff]
      %5782 = vrot.lane.b32.xlu0 %v5766, 126
      %v5783 = vpop.permute.xlu0 %5782
      %5784 = vrot.lane.b32.xlu0 %v5767, 126
      %v5785 = vpop.permute.xlu0 %5784
      %5786 = vrot.lane.b32.xlu0 %v5768, 126
      %v5787 = vpop.permute.xlu0 %5786
      %5788 = vrot.lane.b32.xlu0 %v5769, 126
      %v5789 = vpop.permute.xlu0 %5788
      %5790 = vrot.lane.b32.xlu0 %v5770, 126
      %v5791 = vpop.permute.xlu0 %5790
      %5792 = vrot.lane.b32.xlu0 %v5771, 126
      %v5793 = vpop.permute.xlu0 %5792
      %5794 = vrot.lane.b32.xlu0 %v5772, 126
      %v5795 = vpop.permute.xlu0 %5794
      %5796 = vrot.lane.b32.xlu0 %v5773, 126
      %v5797 = vpop.permute.xlu0 %5796
      %v5806 = vcombine.low %v5783, %v5791
      %v5807 = vcombine.high %v5783, %v5791
      %v5809 = vunpack.c.l.s4 1983009808
      %v5810 = vunpack.c.0.s8 %v5809
      %v5811 = vlaneseq
      %v5812 = vshrl.u32 %v5811, 7
      %v5813 = vsub.s32 %v5810, %v5812
      %v5814 = vrot.slane %v5806, %v5813
      %v5816 = vunpack.c.l.s4 1983009808
      %v5817 = vunpack.c.0.s8 %v5816
      %v5818 = vlaneseq
      %v5819 = vshrl.u32 %v5818, 7
      %v5820 = vsub.s32 %v5817, %v5819
      %v5821 = vrot.slane %v5807, %v5820
      %v5822 = vcombine.low %v5787, %v5795
      %v5823 = vcombine.high %v5787, %v5795
      %v5825 = vunpack.c.l.s4 1983009808
      %v5826 = vunpack.c.0.s8 %v5825
      %v5827 = vlaneseq
      %v5828 = vshrl.u32 %v5827, 7
      %v5829 = vsub.s32 %v5826, %v5828
      %v5830 = vrot.slane %v5822, %v5829
      %v5832 = vunpack.c.l.s4 1983009808
      %v5833 = vunpack.c.0.s8 %v5832
      %v5834 = vlaneseq
      %v5835 = vshrl.u32 %v5834, 7
      %v5836 = vsub.s32 %v5833, %v5835
      %v5837 = vrot.slane %v5823, %v5836
      %v5838 = vcombine.low %v5814, %v5830
      %v5839 = vcombine.high %v5814, %v5830
      %v5841 = vunpack.c.l.s4 1934713408
      %v5842 = vunpack.c.0.s8 %v5841
      %v5843 = vlaneseq
      %v5844 = vshrl.u32 %v5843, 7
      %v5845 = vsub.s32 %v5842, %v5844
      %v5846 = vrot.slane %v5838, %v5845
      %v5848 = vunpack.c.l.s4 1934713408
      %v5849 = vunpack.c.0.s8 %v5848
      %v5850 = vlaneseq
      %v5851 = vshrl.u32 %v5850, 7
      %v5852 = vsub.s32 %v5849, %v5851
      %v5853 = vrot.slane %v5839, %v5852
      %v5854 = vcombine.low %v5821, %v5837
      %v5855 = vcombine.high %v5821, %v5837
      %v5857 = vunpack.c.l.s4 1934713408
      %v5858 = vunpack.c.0.s8 %v5857
      %v5859 = vlaneseq
      %v5860 = vshrl.u32 %v5859, 7
      %v5861 = vsub.s32 %v5858, %v5860
      %v5862 = vrot.slane %v5854, %v5861
      %v5864 = vunpack.c.l.s4 1934713408
      %v5865 = vunpack.c.0.s8 %v5864
      %v5866 = vlaneseq
      %v5867 = vshrl.u32 %v5866, 7
      %v5868 = vsub.s32 %v5865, %v5867
      %v5869 = vrot.slane %v5855, %v5868
      %v5870 = vcombine.high %v5846, 0.0
      %v5871 = vcombine.high %v5853, 0.0
      %v5872 = vcombine.high %v5862, 0.0
      %v5873 = vcombine.high %v5869, 0.0
      %v5874 = vcombine.low %v5785, %v5793
      %v5875 = vcombine.high %v5785, %v5793
      %v5877 = vunpack.c.l.s4 1983009808
      %v5878 = vunpack.c.0.s8 %v5877
      %v5879 = vlaneseq
      %v5880 = vshrl.u32 %v5879, 7
      %v5881 = vsub.s32 %v5878, %v5880
      %v5882 = vrot.slane %v5874, %v5881
      %v5884 = vunpack.c.l.s4 1983009808
      %v5885 = vunpack.c.0.s8 %v5884
      %v5886 = vlaneseq
      %v5887 = vshrl.u32 %v5886, 7
      %v5888 = vsub.s32 %v5885, %v5887
      %v5889 = vrot.slane %v5875, %v5888
      %v5890 = vcombine.low %v5789, %v5797
      %v5891 = vcombine.high %v5789, %v5797
      %v5893 = vunpack.c.l.s4 1983009808
      %v5894 = vunpack.c.0.s8 %v5893
      %v5895 = vlaneseq
      %v5896 = vshrl.u32 %v5895, 7
      %v5897 = vsub.s32 %v5894, %v5896
      %v5898 = vrot.slane %v5890, %v5897
      %v5900 = vunpack.c.l.s4 1983009808
      %v5901 = vunpack.c.0.s8 %v5900
      %v5902 = vlaneseq
      %v5903 = vshrl.u32 %v5902, 7
      %v5904 = vsub.s32 %v5901, %v5903
      %v5905 = vrot.slane %v5891, %v5904
      %v5906 = vcombine.low %v5882, %v5898
      %v5907 = vcombine.high %v5882, %v5898
      %v5909 = vunpack.c.l.s4 1934713408
      %v5910 = vunpack.c.0.s8 %v5909
      %v5911 = vlaneseq
      %v5912 = vshrl.u32 %v5911, 7
      %v5913 = vsub.s32 %v5910, %v5912
      %v5914 = vrot.slane %v5906, %v5913
      %v5916 = vunpack.c.l.s4 1934713408
      %v5917 = vunpack.c.0.s8 %v5916
      %v5918 = vlaneseq
      %v5919 = vshrl.u32 %v5918, 7
      %v5920 = vsub.s32 %v5917, %v5919
      %v5921 = vrot.slane %v5907, %v5920
      %v5922 = vcombine.low %v5889, %v5905
      %v5923 = vcombine.high %v5889, %v5905
      %v5925 = vunpack.c.l.s4 1934713408
      %v5926 = vunpack.c.0.s8 %v5925
      %v5927 = vlaneseq
      %v5928 = vshrl.u32 %v5927, 7
      %v5929 = vsub.s32 %v5926, %v5928
      %v5930 = vrot.slane %v5922, %v5929
      %v5932 = vunpack.c.l.s4 1934713408
      %v5933 = vunpack.c.0.s8 %v5932
      %v5934 = vlaneseq
      %v5935 = vshrl.u32 %v5934, 7
      %v5936 = vsub.s32 %v5933, %v5935
      %v5937 = vrot.slane %v5923, %v5936
      %v5938 = vcombine.high %v5914, 0.0
      %v5939 = vcombine.high %v5921, 0.0
      %v5940 = vcombine.high %v5930, 0.0
      %v5941 = vcombine.high %v5937, 0.0
      %5943 = vrot.lane.b32.xlu0 %v5870, 16
      %v5944 = vpop.permute.xlu0 %5943
      %5947 = vrot.lane.b32.xlu0 %v5853, 32
      %v5948 = vpop.permute.xlu0 %5947
      %5951 = vrot.lane.b32.xlu0 %v5871, 48
      %v5952 = vpop.permute.xlu0 %5951
      %5955 = vrot.lane.b32.xlu0 %v5862, 64
      %v5956 = vpop.permute.xlu0 %5955
      %5959 = vrot.lane.b32.xlu0 %v5872, 80
      %v5960 = vpop.permute.xlu0 %5959
      %5963 = vrot.lane.b32.xlu0 %v5869, 96
      %v5964 = vpop.permute.xlu0 %5963
      %5967 = vrot.lane.b32.xlu0 %v5873, 112
      %v5968 = vpop.permute.xlu0 %5967
      %5971 = vrot.lane.b32.xlu0 %v5938, 16
      %v5972 = vpop.permute.xlu0 %5971
      %5975 = vrot.lane.b32.xlu0 %v5921, 32
      %v5976 = vpop.permute.xlu0 %5975
      %5979 = vrot.lane.b32.xlu0 %v5939, 48
      %v5980 = vpop.permute.xlu0 %5979
      %5983 = vrot.lane.b32.xlu0 %v5930, 64
      %v5984 = vpop.permute.xlu0 %5983
      %5987 = vrot.lane.b32.xlu0 %v5940, 80
      %v5988 = vpop.permute.xlu0 %5987
      %5991 = vrot.lane.b32.xlu0 %v5937, 96
      %v5992 = vpop.permute.xlu0 %5991
      %5995 = vrot.lane.b32.xlu0 %v5941, 112
      %v5996 = vpop.permute.xlu0 %5995
      %v5998 = vsel %vm498, %v5846, %v5944
      %v5999 = vsel %vm500, %v5998, %v5948
      %v6000 = vsel %vm502, %v5999, %v5952
      %v6001 = vsel %vm504, %v6000, %v5956
      %v6002 = vsel %vm506, %v6001, %v5960
      %v6003 = vsel %vm508, %v6002, %v5964
      %v6004 = vsel %vm510, %v6003, %v5968
      %v6005 = vsel %vm498, %v5914, %v5972
      %v6006 = vsel %vm500, %v6005, %v5976
      %v6007 = vsel %vm502, %v6006, %v5980
      %v6008 = vsel %vm504, %v6007, %v5984
      %v6009 = vsel %vm506, %v6008, %v5988
      %v6010 = vsel %vm508, %v6009, %v5992
      %v6011 = vsel %vm510, %v6010, %v5996
      %v6012 = vpack.c.bf16 %v6004, %v6004
      %v6013 = vpack.c.bf16 %v6011, %v6011
      %v6016 = vunpack.c.l.b16 %v6012
      %v6017 = vunpack.c.l.b16 %v6013
      %v6018 = vpack.c.b16 %v6017, %v6016
      %6020 = vst [vmem:[#allocation3 + $0x58] sm:$0x33] %v6018
      %v6021 = vld [vmem:[#allocation2 + $0x4] sm:$0xff]
      %v6022 = vld [vmem:[#allocation2 + $0xc] sm:$0xff]
      %v6023 = vld [vmem:[#allocation2 + $0x1c] sm:$0xff]
      %v6024 = vld [vmem:[#allocation2 + $0x24] sm:$0xff]
      %v6025 = vld [vmem:[#allocation2 + $0x34] sm:$0xff]
      %v6026 = vld [vmem:[#allocation2 + $0x3c] sm:$0xff]
      %v6027 = vld [vmem:[#allocation2 + $0x4c] sm:$0xff]
      %v6028 = vld [vmem:[#allocation2 + $0x54] sm:$0xff]
      %6037 = vrot.lane.b32.xlu0 %v6021, 125
      %v6038 = vpop.permute.xlu0 %6037
      %6039 = vrot.lane.b32.xlu0 %v6022, 125
      %v6040 = vpop.permute.xlu0 %6039
      %6041 = vrot.lane.b32.xlu0 %v6023, 125
      %v6042 = vpop.permute.xlu0 %6041
      %6043 = vrot.lane.b32.xlu0 %v6024, 125
      %v6044 = vpop.permute.xlu0 %6043
      %6045 = vrot.lane.b32.xlu0 %v6025, 125
      %v6046 = vpop.permute.xlu0 %6045
      %6047 = vrot.lane.b32.xlu0 %v6026, 125
      %v6048 = vpop.permute.xlu0 %6047
      %6049 = vrot.lane.b32.xlu0 %v6027, 125
      %v6050 = vpop.permute.xlu0 %6049
      %6051 = vrot.lane.b32.xlu0 %v6028, 125
      %v6052 = vpop.permute.xlu0 %6051
      %v6061 = vcombine.low %v6038, %v6046
      %v6062 = vcombine.high %v6038, %v6046
      %v6064 = vunpack.c.l.s4 1983009808
      %v6065 = vunpack.c.0.s8 %v6064
      %v6066 = vlaneseq
      %v6067 = vshrl.u32 %v6066, 7
      %v6068 = vsub.s32 %v6065, %v6067
      %v6069 = vrot.slane %v6061, %v6068
      %v6071 = vunpack.c.l.s4 1983009808
      %v6072 = vunpack.c.0.s8 %v6071
      %v6073 = vlaneseq
      %v6074 = vshrl.u32 %v6073, 7
      %v6075 = vsub.s32 %v6072, %v6074
      %v6076 = vrot.slane %v6062, %v6075
      %v6077 = vcombine.low %v6042, %v6050
      %v6078 = vcombine.high %v6042, %v6050
      %v6080 = vunpack.c.l.s4 1983009808
      %v6081 = vunpack.c.0.s8 %v6080
      %v6082 = vlaneseq
      %v6083 = vshrl.u32 %v6082, 7
      %v6084 = vsub.s32 %v6081, %v6083
      %v6085 = vrot.slane %v6077, %v6084
      %v6087 = vunpack.c.l.s4 1983009808
      %v6088 = vunpack.c.0.s8 %v6087
      %v6089 = vlaneseq
      %v6090 = vshrl.u32 %v6089, 7
      %v6091 = vsub.s32 %v6088, %v6090
      %v6092 = vrot.slane %v6078, %v6091
      %v6093 = vcombine.low %v6069, %v6085
      %v6094 = vcombine.high %v6069, %v6085
      %v6096 = vunpack.c.l.s4 1934713408
      %v6097 = vunpack.c.0.s8 %v6096
      %v6098 = vlaneseq
      %v6099 = vshrl.u32 %v6098, 7
      %v6100 = vsub.s32 %v6097, %v6099
      %v6101 = vrot.slane %v6093, %v6100
      %v6103 = vunpack.c.l.s4 1934713408
      %v6104 = vunpack.c.0.s8 %v6103
      %v6105 = vlaneseq
      %v6106 = vshrl.u32 %v6105, 7
      %v6107 = vsub.s32 %v6104, %v6106
      %v6108 = vrot.slane %v6094, %v6107
      %v6109 = vcombine.low %v6076, %v6092
      %v6110 = vcombine.high %v6076, %v6092
      %v6112 = vunpack.c.l.s4 1934713408
      %v6113 = vunpack.c.0.s8 %v6112
      %v6114 = vlaneseq
      %v6115 = vshrl.u32 %v6114, 7
      %v6116 = vsub.s32 %v6113, %v6115
      %v6117 = vrot.slane %v6109, %v6116
      %v6119 = vunpack.c.l.s4 1934713408
      %v6120 = vunpack.c.0.s8 %v6119
      %v6121 = vlaneseq
      %v6122 = vshrl.u32 %v6121, 7
      %v6123 = vsub.s32 %v6120, %v6122
      %v6124 = vrot.slane %v6110, %v6123
      %v6125 = vcombine.high %v6101, 0.0
      %v6126 = vcombine.high %v6108, 0.0
      %v6127 = vcombine.high %v6117, 0.0
      %v6128 = vcombine.high %v6124, 0.0
      %v6129 = vcombine.low %v6040, %v6048
      %v6130 = vcombine.high %v6040, %v6048
      %v6132 = vunpack.c.l.s4 1983009808
      %v6133 = vunpack.c.0.s8 %v6132
      %v6134 = vlaneseq
      %v6135 = vshrl.u32 %v6134, 7
      %v6136 = vsub.s32 %v6133, %v6135
      %v6137 = vrot.slane %v6129, %v6136
      %v6139 = vunpack.c.l.s4 1983009808
      %v6140 = vunpack.c.0.s8 %v6139
      %v6141 = vlaneseq
      %v6142 = vshrl.u32 %v6141, 7
      %v6143 = vsub.s32 %v6140, %v6142
      %v6144 = vrot.slane %v6130, %v6143
      %v6145 = vcombine.low %v6044, %v6052
      %v6146 = vcombine.high %v6044, %v6052
      %v6148 = vunpack.c.l.s4 1983009808
      %v6149 = vunpack.c.0.s8 %v6148
      %v6150 = vlaneseq
      %v6151 = vshrl.u32 %v6150, 7
      %v6152 = vsub.s32 %v6149, %v6151
      %v6153 = vrot.slane %v6145, %v6152
      %v6155 = vunpack.c.l.s4 1983009808
      %v6156 = vunpack.c.0.s8 %v6155
      %v6157 = vlaneseq
      %v6158 = vshrl.u32 %v6157, 7
      %v6159 = vsub.s32 %v6156, %v6158
      %v6160 = vrot.slane %v6146, %v6159
      %v6161 = vcombine.low %v6137, %v6153
      %v6162 = vcombine.high %v6137, %v6153
      %v6164 = vunpack.c.l.s4 1934713408
      %v6165 = vunpack.c.0.s8 %v6164
      %v6166 = vlaneseq
      %v6167 = vshrl.u32 %v6166, 7
      %v6168 = vsub.s32 %v6165, %v6167
      %v6169 = vrot.slane %v6161, %v6168
      %v6171 = vunpack.c.l.s4 1934713408
      %v6172 = vunpack.c.0.s8 %v6171
      %v6173 = vlaneseq
      %v6174 = vshrl.u32 %v6173, 7
      %v6175 = vsub.s32 %v6172, %v6174
      %v6176 = vrot.slane %v6162, %v6175
      %v6177 = vcombine.low %v6144, %v6160
      %v6178 = vcombine.high %v6144, %v6160
      %v6180 = vunpack.c.l.s4 1934713408
      %v6181 = vunpack.c.0.s8 %v6180
      %v6182 = vlaneseq
      %v6183 = vshrl.u32 %v6182, 7
      %v6184 = vsub.s32 %v6181, %v6183
      %v6185 = vrot.slane %v6177, %v6184
      %v6187 = vunpack.c.l.s4 1934713408
      %v6188 = vunpack.c.0.s8 %v6187
      %v6189 = vlaneseq
      %v6190 = vshrl.u32 %v6189, 7
      %v6191 = vsub.s32 %v6188, %v6190
      %v6192 = vrot.slane %v6178, %v6191
      %v6193 = vcombine.high %v6169, 0.0
      %v6194 = vcombine.high %v6176, 0.0
      %v6195 = vcombine.high %v6185, 0.0
      %v6196 = vcombine.high %v6192, 0.0
      %6198 = vrot.lane.b32.xlu0 %v6125, 16
      %v6199 = vpop.permute.xlu0 %6198
      %6202 = vrot.lane.b32.xlu0 %v6108, 32
      %v6203 = vpop.permute.xlu0 %6202
      %6206 = vrot.lane.b32.xlu0 %v6126, 48
      %v6207 = vpop.permute.xlu0 %6206
      %6210 = vrot.lane.b32.xlu0 %v6117, 64
      %v6211 = vpop.permute.xlu0 %6210
      %6214 = vrot.lane.b32.xlu0 %v6127, 80
      %v6215 = vpop.permute.xlu0 %6214
      %6218 = vrot.lane.b32.xlu0 %v6124, 96
      %v6219 = vpop.permute.xlu0 %6218
      %6222 = vrot.lane.b32.xlu0 %v6128, 112
      %v6223 = vpop.permute.xlu0 %6222
      %6226 = vrot.lane.b32.xlu0 %v6193, 16
      %v6227 = vpop.permute.xlu0 %6226
      %6230 = vrot.lane.b32.xlu0 %v6176, 32
      %v6231 = vpop.permute.xlu0 %6230
      %6234 = vrot.lane.b32.xlu0 %v6194, 48
      %v6235 = vpop.permute.xlu0 %6234
      %6238 = vrot.lane.b32.xlu0 %v6185, 64
      %v6239 = vpop.permute.xlu0 %6238
      %6242 = vrot.lane.b32.xlu0 %v6195, 80
      %v6243 = vpop.permute.xlu0 %6242
      %6246 = vrot.lane.b32.xlu0 %v6192, 96
      %v6247 = vpop.permute.xlu0 %6246
      %6250 = vrot.lane.b32.xlu0 %v6196, 112
      %v6251 = vpop.permute.xlu0 %6250
      %v6253 = vsel %vm498, %v6101, %v6199
      %v6254 = vsel %vm500, %v6253, %v6203
      %v6255 = vsel %vm502, %v6254, %v6207
      %v6256 = vsel %vm504, %v6255, %v6211
      %v6257 = vsel %vm506, %v6256, %v6215
      %v6258 = vsel %vm508, %v6257, %v6219
      %v6259 = vsel %vm510, %v6258, %v6223
      %v6260 = vsel %vm498, %v6169, %v6227
      %v6261 = vsel %vm500, %v6260, %v6231
      %v6262 = vsel %vm502, %v6261, %v6235
      %v6263 = vsel %vm504, %v6262, %v6239
      %v6264 = vsel %vm506, %v6263, %v6243
      %v6265 = vsel %vm508, %v6264, %v6247
      %v6266 = vsel %vm510, %v6265, %v6251
      %v6267 = vpack.c.bf16 %v6259, %v6259
      %v6268 = vpack.c.bf16 %v6266, %v6266
      %v6271 = vunpack.c.l.b16 %v6267
      %v6272 = vunpack.c.l.b16 %v6268
      %v6273 = vpack.c.b16 %v6272, %v6271
      %v6274 = vrot.slane %v6273, 6
      %6276 = vst [vmem:[#allocation3 + $0x58] sm:$0xcc] %v6274
      %v6277 = vld [vmem:[#allocation2 + $0x4] sm:$0xff]
      %v6278 = vld [vmem:[#allocation2 + $0xc] sm:$0xff]
      %v6279 = vld [vmem:[#allocation2 + $0x1c] sm:$0xff]
      %v6280 = vld [vmem:[#allocation2 + $0x24] sm:$0xff]
      %v6281 = vld [vmem:[#allocation2 + $0x34] sm:$0xff]
      %v6282 = vld [vmem:[#allocation2 + $0x3c] sm:$0xff]
      %v6283 = vld [vmem:[#allocation2 + $0x4c] sm:$0xff]
      %v6284 = vld [vmem:[#allocation2 + $0x54] sm:$0xff]
      %6293 = vrot.lane.b32.xlu0 %v6277, 124
      %v6294 = vpop.permute.xlu0 %6293
      %6295 = vrot.lane.b32.xlu0 %v6278, 124
      %v6296 = vpop.permute.xlu0 %6295
      %6297 = vrot.lane.b32.xlu0 %v6279, 124
      %v6298 = vpop.permute.xlu0 %6297
      %6299 = vrot.lane.b32.xlu0 %v6280, 124
      %v6300 = vpop.permute.xlu0 %6299
      %6301 = vrot.lane.b32.xlu0 %v6281, 124
      %v6302 = vpop.permute.xlu0 %6301
      %6303 = vrot.lane.b32.xlu0 %v6282, 124
      %v6304 = vpop.permute.xlu0 %6303
      %6305 = vrot.lane.b32.xlu0 %v6283, 124
      %v6306 = vpop.permute.xlu0 %6305
      %6307 = vrot.lane.b32.xlu0 %v6284, 124
      %v6308 = vpop.permute.xlu0 %6307
      %v6317 = vcombine.low %v6294, %v6302
      %v6318 = vcombine.high %v6294, %v6302
      %v6320 = vunpack.c.l.s4 1983009808
      %v6321 = vunpack.c.0.s8 %v6320
      %v6322 = vlaneseq
      %v6323 = vshrl.u32 %v6322, 7
      %v6324 = vsub.s32 %v6321, %v6323
      %v6325 = vrot.slane %v6317, %v6324
      %v6327 = vunpack.c.l.s4 1983009808
      %v6328 = vunpack.c.0.s8 %v6327
      %v6329 = vlaneseq
      %v6330 = vshrl.u32 %v6329, 7
      %v6331 = vsub.s32 %v6328, %v6330
      %v6332 = vrot.slane %v6318, %v6331
      %v6333 = vcombine.low %v6298, %v6306
      %v6334 = vcombine.high %v6298, %v6306
      %v6336 = vunpack.c.l.s4 1983009808
      %v6337 = vunpack.c.0.s8 %v6336
      %v6338 = vlaneseq
      %v6339 = vshrl.u32 %v6338, 7
      %v6340 = vsub.s32 %v6337, %v6339
      %v6341 = vrot.slane %v6333, %v6340
      %v6343 = vunpack.c.l.s4 1983009808
      %v6344 = vunpack.c.0.s8 %v6343
      %v6345 = vlaneseq
      %v6346 = vshrl.u32 %v6345, 7
      %v6347 = vsub.s32 %v6344, %v6346
      %v6348 = vrot.slane %v6334, %v6347
      %v6349 = vcombine.low %v6325, %v6341
      %v6350 = vcombine.high %v6325, %v6341
      %v6352 = vunpack.c.l.s4 1934713408
      %v6353 = vunpack.c.0.s8 %v6352
      %v6354 = vlaneseq
      %v6355 = vshrl.u32 %v6354, 7
      %v6356 = vsub.s32 %v6353, %v6355
      %v6357 = vrot.slane %v6349, %v6356
      %v6359 = vunpack.c.l.s4 1934713408
      %v6360 = vunpack.c.0.s8 %v6359
      %v6361 = vlaneseq
      %v6362 = vshrl.u32 %v6361, 7
      %v6363 = vsub.s32 %v6360, %v6362
      %v6364 = vrot.slane %v6350, %v6363
      %v6365 = vcombine.low %v6332, %v6348
      %v6366 = vcombine.high %v6332, %v6348
      %v6368 = vunpack.c.l.s4 1934713408
      %v6369 = vunpack.c.0.s8 %v6368
      %v6370 = vlaneseq
      %v6371 = vshrl.u32 %v6370, 7
      %v6372 = vsub.s32 %v6369, %v6371
      %v6373 = vrot.slane %v6365, %v6372
      %v6375 = vunpack.c.l.s4 1934713408
      %v6376 = vunpack.c.0.s8 %v6375
      %v6377 = vlaneseq
      %v6378 = vshrl.u32 %v6377, 7
      %v6379 = vsub.s32 %v6376, %v6378
      %v6380 = vrot.slane %v6366, %v6379
      %v6381 = vcombine.high %v6357, 0.0
      %v6382 = vcombine.high %v6364, 0.0
      %v6383 = vcombine.high %v6373, 0.0
      %v6384 = vcombine.high %v6380, 0.0
      %v6385 = vcombine.low %v6296, %v6304
      %v6386 = vcombine.high %v6296, %v6304
      %v6388 = vunpack.c.l.s4 1983009808
      %v6389 = vunpack.c.0.s8 %v6388
      %v6390 = vlaneseq
      %v6391 = vshrl.u32 %v6390, 7
      %v6392 = vsub.s32 %v6389, %v6391
      %v6393 = vrot.slane %v6385, %v6392
      %v6395 = vunpack.c.l.s4 1983009808
      %v6396 = vunpack.c.0.s8 %v6395
      %v6397 = vlaneseq
      %v6398 = vshrl.u32 %v6397, 7
      %v6399 = vsub.s32 %v6396, %v6398
      %v6400 = vrot.slane %v6386, %v6399
      %v6401 = vcombine.low %v6300, %v6308
      %v6402 = vcombine.high %v6300, %v6308
      %v6404 = vunpack.c.l.s4 1983009808
      %v6405 = vunpack.c.0.s8 %v6404
      %v6406 = vlaneseq
      %v6407 = vshrl.u32 %v6406, 7
      %v6408 = vsub.s32 %v6405, %v6407
      %v6409 = vrot.slane %v6401, %v6408
      %v6411 = vunpack.c.l.s4 1983009808
      %v6412 = vunpack.c.0.s8 %v6411
      %v6413 = vlaneseq
      %v6414 = vshrl.u32 %v6413, 7
      %v6415 = vsub.s32 %v6412, %v6414
      %v6416 = vrot.slane %v6402, %v6415
      %v6417 = vcombine.low %v6393, %v6409
      %v6418 = vcombine.high %v6393, %v6409
      %v6420 = vunpack.c.l.s4 1934713408
      %v6421 = vunpack.c.0.s8 %v6420
      %v6422 = vlaneseq
      %v6423 = vshrl.u32 %v6422, 7
      %v6424 = vsub.s32 %v6421, %v6423
      %v6425 = vrot.slane %v6417, %v6424
      %v6427 = vunpack.c.l.s4 1934713408
      %v6428 = vunpack.c.0.s8 %v6427
      %v6429 = vlaneseq
      %v6430 = vshrl.u32 %v6429, 7
      %v6431 = vsub.s32 %v6428, %v6430
      %v6432 = vrot.slane %v6418, %v6431
      %v6433 = vcombine.low %v6400, %v6416
      %v6434 = vcombine.high %v6400, %v6416
      %v6436 = vunpack.c.l.s4 1934713408
      %v6437 = vunpack.c.0.s8 %v6436
      %v6438 = vlaneseq
      %v6439 = vshrl.u32 %v6438, 7
      %v6440 = vsub.s32 %v6437, %v6439
      %v6441 = vrot.slane %v6433, %v6440
      %v6443 = vunpack.c.l.s4 1934713408
      %v6444 = vunpack.c.0.s8 %v6443
      %v6445 = vlaneseq
      %v6446 = vshrl.u32 %v6445, 7
      %v6447 = vsub.s32 %v6444, %v6446
      %v6448 = vrot.slane %v6434, %v6447
      %v6449 = vcombine.high %v6425, 0.0
      %v6450 = vcombine.high %v6432, 0.0
      %v6451 = vcombine.high %v6441, 0.0
      %v6452 = vcombine.high %v6448, 0.0
      %6454 = vrot.lane.b32.xlu0 %v6381, 16
      %v6455 = vpop.permute.xlu0 %6454
      %6458 = vrot.lane.b32.xlu0 %v6364, 32
      %v6459 = vpop.permute.xlu0 %6458
      %6462 = vrot.lane.b32.xlu0 %v6382, 48
      %v6463 = vpop.permute.xlu0 %6462
      %6466 = vrot.lane.b32.xlu0 %v6373, 64
      %v6467 = vpop.permute.xlu0 %6466
      %6470 = vrot.lane.b32.xlu0 %v6383, 80
      %v6471 = vpop.permute.xlu0 %6470
      %6474 = vrot.lane.b32.xlu0 %v6380, 96
      %v6475 = vpop.permute.xlu0 %6474
      %6478 = vrot.lane.b32.xlu0 %v6384, 112
      %v6479 = vpop.permute.xlu0 %6478
      %6482 = vrot.lane.b32.xlu0 %v6449, 16
      %v6483 = vpop.permute.xlu0 %6482
      %6486 = vrot.lane.b32.xlu0 %v6432, 32
      %v6487 = vpop.permute.xlu0 %6486
      %6490 = vrot.lane.b32.xlu0 %v6450, 48
      %v6491 = vpop.permute.xlu0 %6490
      %6494 = vrot.lane.b32.xlu0 %v6441, 64
      %v6495 = vpop.permute.xlu0 %6494
      %6498 = vrot.lane.b32.xlu0 %v6451, 80
      %v6499 = vpop.permute.xlu0 %6498
      %6502 = vrot.lane.b32.xlu0 %v6448, 96
      %v6503 = vpop.permute.xlu0 %6502
      %6506 = vrot.lane.b32.xlu0 %v6452, 112
      %v6507 = vpop.permute.xlu0 %6506
      %v6509 = vsel %vm498, %v6357, %v6455
      %v6510 = vsel %vm500, %v6509, %v6459
      %v6511 = vsel %vm502, %v6510, %v6463
      %v6512 = vsel %vm504, %v6511, %v6467
      %v6513 = vsel %vm506, %v6512, %v6471
      %v6514 = vsel %vm508, %v6513, %v6475
      %v6515 = vsel %vm510, %v6514, %v6479
      %v6516 = vsel %vm498, %v6425, %v6483
      %v6517 = vsel %vm500, %v6516, %v6487
      %v6518 = vsel %vm502, %v6517, %v6491
      %v6519 = vsel %vm504, %v6518, %v6495
      %v6520 = vsel %vm506, %v6519, %v6499
      %v6521 = vsel %vm508, %v6520, %v6503
      %v6522 = vsel %vm510, %v6521, %v6507
      %v6523 = vpack.c.bf16 %v6515, %v6515
      %v6524 = vpack.c.bf16 %v6522, %v6522
      %v6527 = vunpack.c.l.b16 %v6523
      %v6528 = vunpack.c.l.b16 %v6524
      %v6529 = vpack.c.b16 %v6528, %v6527
      %6531 = vst [vmem:[#allocation3 + $0x60] sm:$0x33] %v6529
      %v6532 = vld [vmem:[#allocation3] sm:$0xff]
      %v6533 = vld [vmem:[#allocation3 + $0x8] sm:$0xff]
      %v6534 = vld [vmem:[#allocation3 + $0x10] sm:$0xff]
      %v6535 = vld [vmem:[#allocation3 + $0x18] sm:$0xff]
      %v6536 = vld [vmem:[#allocation3 + $0x20] sm:$0xff]
      %v6537 = vld [vmem:[#allocation3 + $0x28] sm:$0xff]
      %v6538 = vld [vmem:[#allocation3 + $0x30] sm:$0xff]
      %v6539 = vld [vmem:[#allocation3 + $0x38] sm:$0xff]
      %v6540 = vld [vmem:[#allocation3 + $0x40] sm:$0xff]
      %v6541 = vld [vmem:[#allocation3 + $0x48] sm:$0xff]
      %v6542 = vld [vmem:[#allocation3 + $0x50] sm:$0xff]
      %v6543 = vld [vmem:[#allocation3 + $0x58] sm:$0xff]
      %v6544 = vld [vmem:[#allocation3 + $0x60] sm:$0x33]
      %6546 = vset.pattern.permute.xlu0 0
      %6547 = vperm.xlu0 %6546, %v297
      %v6548 = vpop.permute.xlu0 %6547
      %v6563 = vunpack.c.l.b16 %v6532
      %v6564 = vunpack.c.h.b16 %v6532
      %v6565 = vunpack.c.l.b16 %v6533
      %v6566 = vunpack.c.h.b16 %v6533
      %v6567 = vunpack.c.l.b16 %v6534
      %v6568 = vunpack.c.h.b16 %v6534
      %v6569 = vunpack.c.l.b16 %v6535
      %v6570 = vunpack.c.h.b16 %v6535
      %v6571 = vunpack.c.l.b16 %v6536
      %v6572 = vunpack.c.h.b16 %v6536
      %v6573 = vunpack.c.l.b16 %v6537
      %v6574 = vunpack.c.h.b16 %v6537
      %v6575 = vunpack.c.l.b16 %v6538
      %v6576 = vunpack.c.h.b16 %v6538
      %v6577 = vunpack.c.l.b16 %v6539
      %v6578 = vunpack.c.h.b16 %v6539
      %v6579 = vunpack.c.l.b16 %v6540
      %v6580 = vunpack.c.h.b16 %v6540
      %v6581 = vunpack.c.l.b16 %v6541
      %v6582 = vunpack.c.h.b16 %v6541
      %v6583 = vunpack.c.l.b16 %v6542
      %v6584 = vunpack.c.h.b16 %v6542
      %v6585 = vunpack.c.l.b16 %v6543
      %v6586 = vunpack.c.h.b16 %v6543
      %v6587 = vunpack.c.l.b16 %v6544
      %v6588 = vunpack.c.h.b16 %v6544
      %v6589 = vpack.c.b16 %v6565, %v6563
      %v6590 = vpack.c.b16 %v6566, %v6564
      %v6591 = vpack.c.b16 %v6569, %v6567
      %v6592 = vpack.c.b16 %v6570, %v6568
      %v6593 = vpack.c.b16 %v6573, %v6571
      %v6594 = vpack.c.b16 %v6574, %v6572
      %v6595 = vpack.c.b16 %v6577, %v6575
      %v6596 = vpack.c.b16 %v6578, %v6576
      %v6597 = vpack.c.b16 %v6581, %v6579
      %v6598 = vpack.c.b16 %v6582, %v6580
      %v6599 = vpack.c.b16 %v6585, %v6583
      %v6600 = vpack.c.b16 %v6586, %v6584
      %v6601 = vpack.c.b16 %v6587, %v6587
      %v6602 = vpack.c.b16 %v6588, %v6588
      %vm6615 = vcmask 818176
      %v6617 = vsel %vm6615, %v296, 0
      %vm6619 = vcmask 1041408
      %v6621 = vsel %vm6619, %v6601, 0
      %v6624 = vsel %vm6619, %v6602, 0
      %6626 = vmatprep.subr.bf16.mxu0 0
      %6627 = vmatpush1.bf16.msra.mxu0 0
      %6628 = vmatprep.subr.bf16.mxu0 %v6624
      %6629 = vmatpush1.bf16.msra.mxu0 %v6621
      %6630 = vmatprep.subr.bf16.mxu0 %v6600
      %6631 = vmatpush1.bf16.msra.mxu0 %v6599
      %6632 = vmatprep.subr.bf16.mxu0 %v6598
      %6633 = vmatpush1.bf16.msra.mxu0 %v6597
      %6634 = vmatprep.subr.bf16.mxu0 %v6596
      %6635 = vmatpush1.bf16.msra.mxu0 %v6595
      %6636 = vmatprep.subr.bf16.mxu0 %v6594
      %6637 = vmatpush1.bf16.msra.mxu0 %v6593
      %6638 = vmatprep.subr.bf16.mxu0 %v6592
      %6639 = vmatpush1.bf16.msra.mxu0 %v6591
      %6640 = vmatprep.subr.bf16.mxu0 %v6590
      %6641 = vmatpush1.bf16.msra.mxu0 %v6589
      %6642 = vmatprep.subr.bf16.mxu0 0
      %6643 = vmatpush2.bf16.msra.mxu0 0
      %6644 = vmatprep.subr.bf16.mxu0 0
      %6645 = vmatpush2.bf16.msra.mxu0 0
      %6646 = vmatprep.subr.bf16.mxu0 0
      %6647 = vmatpush2.bf16.msra.mxu0 0
      %6648 = vmatprep.subr.bf16.mxu0 0
      %6649 = vmatpush2.bf16.msra.mxu0 0
      %6650 = vmatprep.subr.bf16.mxu0 0
      %6651 = vmatpush2.bf16.msra.mxu0 0
      %6652 = vmatprep.subr.bf16.mxu0 0
      %6653 = vmatpush2.bf16.msra.mxu0 0
      %6654 = vmatprep.subr.bf16.mxu0 0
      %6655 = vmatpush2.bf16.msra.mxu0 0
      %6656 = vmatprep.subr.bf16.mxu0 0
      %6657 = vmatpush2.bf16.msra.mxu0 0
      %6658 = vmatprep.mubr.bf16.mxu0 0
      %6659 = vmatmul.mubr.bf16.gmra.mxu0 %v6617
      %v6660 = vpop.f32.mrf.mxu0
      %v6661 = vadd.f32 %v6548, %v6660
      %v6662 = vpop.f32.mrf.mxu0
      %v6663 = vadd.f32 %v6548, %v6662
      %v6664 = vpop.f32.mrf.mxu0
      %v6665 = vpop.f32.mrf.mxu0
      %6666 = vdwg.mxu0
      %v6667 = vpack.c.bf16 %v6661, %v6661
      %v6668 = vpack.c.bf16 %v6663, %v6663
      %v6671 = vunpack.c.l.b16 %v6667
      %v6672 = vunpack.c.l.b16 %v6668
      %v6673 = vpack.c.b16 %v6672, %v6671
      %6675 = vst [vmem:[%s204] sm:$0xff] %v6673
      %v6676 = vadd.f32 %v6661, %v6663
      %6677 = vadd.xlane.f32.xlu0 %v6676
      %v6678 = vpop.xlane.xlu0 %6677
      %v6679 = vadd.f32 %v6678, 0.0
      %v6680 = vmul.f32 %v6661, %v6661
      %v6681 = vmul.f32 %v6663, %v6663
      %v6682 = vadd.f32 %v6680, %v6681
      %6683 = vadd.xlane.f32.xlu0 %v6682
      %v6684 = vpop.xlane.xlu0 %6683
      %v6685 = vadd.f32 %v6684, 0.0
      %vm6686 = vcmask 7168
      %6687 = vst.msk [vmem:[%s208] sm:$0xff] %vm6686, %v6679
      %vm6688 = vcmask 15368
      %6689 = vst.msk [vmem:[%s208] sm:$0xff] %vm6688, %v6685
      %p6690 = scmp.lt.s32.totalorder %s16, 1
      %s6691 = scalar_select %p6690, %s16, 1
      %s6692 = smul.addr %s6691, 2
      %s6693 = smul.addr %s6692, 4
      %s6694 = scalar_lea.vmem %s3, %s6693
      %p6695 = scmp.lt.s32.totalorder %s16, 1
      %s6696 = scalar_select %p6695, %s16, 1
      %s6697 = smul.addr %s6696, 8
      %s6698 = scalar_lea.vmem %s4, %s6697
      // Predicated region
      $region33: #{multiconv_forward.2} parent=31 // pred_check
        %p6699 = pneg %p102
      $region34: #{multiconv_forward.2} parent=31 // pred_check_branch
        %6701 = sbr.rel (%p6699) target = $region36
      $region35: #{multiconv_forward.2} parent=31 // pred_region
        _
      $region36: #{multiconv_forward.2} parent=31 // pred_fallthru
        _
      // Predicated region
      $region37: #{multiconv_forward.2} parent=31 // pred_check
        %p6702 = pneg %p128
      $region38: #{multiconv_forward.2} parent=31 // pred_check_branch
        %6704 = sbr.rel (%p6702) target = $region40
      $region39: #{multiconv_forward.2} parent=31 // pred_region
        _
      $region40: #{multiconv_forward.2} parent=31 // pred_fallthru
        _
    $region32: #{multiconv_forward.2} parent=5 // pred_fallthru
      _
    %p6705 = scmp.le.s32.totalorder 2, %s11
    // Predicated region
    $region41: #{multiconv_forward.2} parent=5 // pred_check
      %p6706 = pneg %p6705
    $region42: #{multiconv_forward.2} parent=5 // pred_check_branch
      %6708 = sbr.rel (%p6706) target = $region44
    $region43: #{multiconv_forward.2} parent=5 // pred_region
      %s6709 = ssub.s32 %s11, 2
      // Predicated region
      $region45: #{multiconv_forward.2} parent=43 // pred_check
        %p6710 = pneg %p108
      $region46: #{multiconv_forward.2} parent=43 // pred_check_branch
        %6712 = sbr.rel (%p6710) target = $region48
      $region47: #{multiconv_forward.2} parent=43 // pred_region
        %p6713 = scmp.lt.s32.totalorder %s17, 1
        %s6714 = scalar_select %p6713, %s17, 1
        %s6715 = smul.addr %s6714, 2
        %s6716 = smul.addr %s6715, 4
        %s6717 = scalar_lea.vmem %s3, %s6716
      $region48: #{multiconv_forward.2} parent=43 // pred_fallthru
        _
      // Predicated region
      $region49: #{multiconv_forward.2} parent=43 // pred_check
        %p6718 = pneg %p134
      $region50: #{multiconv_forward.2} parent=43 // pred_check_branch
        %6720 = sbr.rel (%p6718) target = $region52
      $region51: #{multiconv_forward.2} parent=43 // pred_region
        %p6721 = scmp.lt.s32.totalorder %s17, 1
        %s6722 = scalar_select %p6721, %s17, 1
        %s6723 = smul.addr %s6722, 8
        %s6724 = scalar_lea.vmem %s4, %s6723
      $region52: #{multiconv_forward.2} parent=43 // pred_fallthru
        _
    $region44: #{multiconv_forward.2} parent=5 // pred_fallthru
      _
  $region6: #{multiconv_forward.2} parent=0 // loop_footer
    %s15 = sadd.s32 1, %s11
  $region7: #{multiconv_forward.2} parent=0 // loop_footer_branch
    %10 = sbr.rel target = $region3
  $region8: #{multiconv_forward.2} parent=0 // loop_exit
    _

</llo_original>
